<compile_context>
chip_gen: v7x
topology: tpu7x:2x2x1
jax: 0.10.0
libtpu: 0.0.40
codegen_flags: <defaults>
</compile_context>

<pallas_src>
import jax
import jax.numpy as jnp
import numpy as np
from jax.experimental import pallas as pl
from jax.experimental.pallas import tpu as pltpu


def haar_kernel(x_ref, sel_ref, w1_ref, b1_ref, w2_ref, b2_ref,
                low_ref, high_ref):
    # x_ref : (Rc, H*W)  one row per (batch-in-block, channel); lanes hold the
    #                    full spatial map as Hh row-pairs of 2W lanes.
    # sel_ref: (H*W, 2Q) with Q = Hh*Wh.  Cols [0:Q] -> a (= fused, the
    #                    even/even phase); cols [Q:2Q] -> low (2x2 block mean).
    hi = jax.lax.Precision.HIGHEST
    x = x_ref[...]
    q = low_ref.shape[-1]

    al = jnp.dot(x, sel_ref[...], preferred_element_type=jnp.float32,
                 precision=hi)                                 # (Rc, 2Q)
    a = al[:, :q]                                              # fused = low+high
    low = al[:, q:]
    high = a - low                                             # Haar identity

    # branch1: AdaptiveAvgPool2d(1) -> Linear -> ReLU -> Linear (per channel).
    # One row == one (b, c) pair, so the pool is a plain lane mean (no segment
    # matrices needed).
    pooled = jnp.sum(a, axis=-1, keepdims=True) * (1.0 / q)    # (Rc, 1)
    h1 = jnp.maximum(
        jnp.dot(w1_ref[...], pooled, preferred_element_type=jnp.float32,
                precision=hi) + b1_ref[...], 0.0)              # (Bt*Cr, 1)
    y = jnp.dot(w2_ref[...], h1, preferred_element_type=jnp.float32,
                precision=hi) + b2_ref[...]                    # (Rc, 1)

    att = jax.nn.sigmoid(y + a)                                # (Rc, Q)
    low_ref[...] = low
    high_ref[...] = high * att


def _make_selector(H, W):
    """(H*W, 2Q) f32 selector.  Cols [0:Q] pick the even/even phase (== fused),
    cols [Q:2Q] average each 2x2 block (== low).  Entries are {0, 0.25, 1}."""
    Hh, Wh = H // 2, W // 2
    HW, Q = H * W, Hh * Wh
    rr = np.repeat(np.arange(H), W)           # input row of each flat index
    cc = np.tile(np.arange(W), H)             # input col of each flat index
    q_idx = (rr // 2) * Wh + (cc // 2)        # owning 2x2 block, flattened
    sel = np.zeros((HW, 2 * Q), np.float32)
    sel[np.arange(HW), Q + q_idx] = 0.25                       # low
    ee = (rr % 2 == 0) & (cc % 2 == 0)
    sel[np.where(ee)[0], q_idx[ee]] = 1.0                      # a / fused
    return sel


def _pick_bt(B, C, HW):
    """Batch elements folded per grid step: amortise per-step overhead, but
    keep >= 2 grid steps when B allows (v7x megacore / pipeline overlap)."""
    per_b_bytes = C * HW * 4 + 2 * C * (HW // 4) * 4
    bt = max(1, min(B, (2 << 20) // max(per_b_bytes, 1)))
    if B >= 2:
        bt = min(bt, B // 2)
    bt = max(bt, 1)
    while B % bt:
        bt -= 1
    return bt


def _vmem_limit_bytes(in_block, out_block, const_bytes):
    """Shape-derived VMEM request with headroom, capped vs. chip capacity."""
    need = 2 * in_block + 2 * 2 * out_block + const_bytes + (4 << 20)
    try:
        cap = int(getattr(pltpu.get_tpu_info(), "vmem_capacity_bytes", 64 << 20))
    except Exception:
        cap = 64 << 20
    return int(max(8 << 20, min(need, int(0.75 * cap))))


def _build_and_call(x3, sel, w1b, b1b, w2b, b2b, Q, vmem_limit, cost,
                    use_buffered):
    Gb, Rc, HW = x3.shape

    def const_spec(shape):
        zeros = (0,) * len(shape)
        if use_buffered:
            # Constant block index -> a second pipeline buffer is pure waste.
            return pl.BlockSpec(shape, lambda i: zeros,
                                pipeline_mode=pl.Buffered(1))
        return pl.BlockSpec(shape, lambda i: zeros)

    return pl.pallas_call(
        haar_kernel,
        out_shape=(jax.ShapeDtypeStruct((Gb, Rc, Q), jnp.float32),
                   jax.ShapeDtypeStruct((Gb, Rc, Q), jnp.float32)),
        grid=(Gb,),
        in_specs=[pl.BlockSpec((None, Rc, HW), lambda i: (i, 0, 0)),
                  const_spec(sel.shape),
                  const_spec(w1b.shape),
                  const_spec(b1b.shape),
                  const_spec(w2b.shape),
                  const_spec(b2b.shape)],
        out_specs=(pl.BlockSpec((None, Rc, Q), lambda i: (i, 0, 0)),
                   pl.BlockSpec((None, Rc, Q), lambda i: (i, 0, 0))),
        compiler_params=pltpu.CompilerParams(
            dimension_semantics=("parallel",),
            vmem_limit_bytes=vmem_limit),
        cost_estimate=cost,
    )(x3, sel, w1b, b1b, w2b, b2b)


def haar_wavelet(x, w1, b1, w2, b2):
    """Fused HaarWavelet forward.

    x: (B, C, H, W) f32;  w1: (Cr, C)  b1: (Cr,)  w2: (C, Cr)  b2: (C,).
    Returns (low, high * attention), both (B, C, H/2, W/2).
    """
    B, C, H, W = x.shape
    assert H % 2 == 0 and W % 2 == 0, "H and W must be even"
    Hh, Wh = H // 2, W // 2
    HW, Q = H * W, Hh * Wh
    Cr = w1.shape[0]

    sel_np = _make_selector(H, W)
    # TODO(synk): beyond this size switch to the two-pass R-tiled structure
    # described at the top of the file (selector grows as 2*(H*W)^2 bytes).
    assert sel_np.nbytes <= (8 << 20), (
        "channel-packed selector too large for VMEM; use the two-pass tiled "
        "variant (see TODO at top of file)")

    Bt = _pick_bt(B, C, HW)
    Gb, Rc = B // Bt, Bt * C

    # Metadata-only view: one kernel row per (batch-in-block, channel) pair.
    x3 = x.astype(jnp.float32).reshape(Gb, Rc, HW)

    # Block-diagonal SE-MLP weights so Bt batch elements fold into one dot.
    eye_bt = jnp.eye(Bt, dtype=jnp.float32)
    w1b = jnp.kron(eye_bt, w1.astype(jnp.float32))             # (Bt*Cr, Bt*C)
    w2b = jnp.kron(eye_bt, w2.astype(jnp.float32))             # (Bt*C, Bt*Cr)
    b1b = jnp.tile(b1.astype(jnp.float32), Bt).reshape(Bt * Cr, 1)
    b2b = jnp.tile(b2.astype(jnp.float32), Bt).reshape(Rc, 1)
    sel = jnp.asarray(sel_np)

    const_bytes = (sel.size + w1b.size + w2b.size + b1b.size + b2b.size) * 4
    vmem_limit = _vmem_limit_bytes(Rc * HW * 4, Rc * Q * 4, const_bytes)

    cost = pl.CostEstimate(
        flops=int(2 * B * C * HW * 2 * Q          # selector matmul
                  + 4 * B * C * Cr                # SE MLP
                  + 8 * B * C * Q),               # VPU epilogue
        transcendentals=int(B * C * Q),           # sigmoid
        bytes_accessed=int(4 * (B * C * HW + 2 * B * C * Q) + sel.size * 4))

    try:
        low3, high3 = _build_and_call(x3, sel, w1b, b1b, w2b, b2b, Q,
                                      vmem_limit, cost, use_buffered=True)
    except Exception:
        # pipeline_mode / Buffered not available in this JAX build: fall back
        # to default double buffering (identical math, slightly more VMEM).
        low3, high3 = _build_and_call(x3, sel, w1b, b1b, w2b, b2b, Q,
                                      vmem_limit, cost, use_buffered=False)

    # Metadata-only reshapes back to NCHW halves.
    return (low3.reshape(B, C, Hh, Wh), high3.reshape(B, C, Hh, Wh))


def reference(x, w1, b1, w2, b2):
    """Pure-JAX mirror of the PyTorch forward (for verification)."""
    lp = (x[:, :, ::2, :] + x[:, :, 1::2, :]) / 2
    hp = (x[:, :, ::2, :] - x[:, :, 1::2, :]) / 2
    ll = (lp[:, :, :, ::2] + lp[:, :, :, 1::2]) / 2
    lh = (lp[:, :, :, ::2] - lp[:, :, :, 1::2]) / 2
    hl = (hp[:, :, :, ::2] + hp[:, :, :, 1::2]) / 2
    hh = (hp[:, :, :, ::2] - hp[:, :, :, 1::2]) / 2
    low = ll
    high = lh + hl + hh
    fused = low + high
    pooled = fused.mean(axis=(2, 3))                            # (B, C)
    h1 = jax.nn.relu(pooled @ w1.T + b1)
    y = h1 @ w2.T + b2                                          # (B, C)
    att = jax.nn.sigmoid(y[:, :, None, None] + fused)
    return low, high * att


if __name__ == "__main__":
    B, C, H, W = 2, 4, 16, 16
    reduction_ratio = 2
    Cr = C // reduction_ratio

    key = jax.random.PRNGKey(0)
    kx, k1, k2, k3, k4 = jax.random.split(key, 5)
    x = jax.random.normal(kx, (B, C, H, W), dtype=jnp.float32)
    # Deterministic synthetic parameters for branch1 (Linear, ReLU, Linear).
    w1 = jax.random.normal(k1, (Cr, C), dtype=jnp.float32) * 0.5
    b1 = jax.random.normal(k2, (Cr,), dtype=jnp.float32) * 0.1
    w2 = jax.random.normal(k3, (C, Cr), dtype=jnp.float32) * 0.5
    b2 = jax.random.normal(k4, (C,), dtype=jnp.float32) * 0.1

    low, high = haar_wavelet(x, w1, b1, w2, b2)
    jax.block_until_ready((low, high))

    low_r, high_r = reference(x, w1, b1, w2, b2)
    np.testing.assert_allclose(np.asarray(low), np.asarray(low_r),
                               rtol=1e-4, atol=1e-4)
    np.testing.assert_allclose(np.asarray(high), np.asarray(high_r),
                               rtol=1e-4, atol=1e-4)
    print("KERNEL_OK")
</pallas_src>

<mosaic_0001>
module attributes {stable_mosaic.version = 11 : i64} {
  func.func @haar_kernel(%arg0: i32, %arg1: memref<1x4x256xf32, #tpu.memory_space<vmem>>, %arg2: memref<256x128xf32, #tpu.memory_space<vmem>>, %arg3: memref<2x4xf32, #tpu.memory_space<vmem>>, %arg4: memref<2x1xf32, #tpu.memory_space<vmem>>, %arg5: memref<4x2xf32, #tpu.memory_space<vmem>>, %arg6: memref<4x1xf32, #tpu.memory_space<vmem>>, %arg7: memref<1x4x64xf32, #tpu.memory_space<vmem>>, %arg8: memref<1x4x64xf32, #tpu.memory_space<vmem>>) attributes {dimension_semantics = [#tpu.dimension_semantics<parallel>], iteration_bounds = array<i64: 2>, scalar_prefetch = 0 : i64, scratch_operands = 0 : i64, tpu.core_type = #tpu.core_type<tc>, window_params = [{transform_indices = @transform_0, window_bounds = array<i64: 1, 4, 256>}, {pipeline_mode = #tpu.pipeline_mode<synchronous>, transform_indices = @transform_1, window_bounds = array<i64: 256, 128>}, {pipeline_mode = #tpu.pipeline_mode<synchronous>, transform_indices = @transform_2, window_bounds = array<i64: 2, 4>}, {pipeline_mode = #tpu.pipeline_mode<synchronous>, transform_indices = @transform_3, window_bounds = array<i64: 2, 1>}, {pipeline_mode = #tpu.pipeline_mode<synchronous>, transform_indices = @transform_4, window_bounds = array<i64: 4, 2>}, {pipeline_mode = #tpu.pipeline_mode<synchronous>, transform_indices = @transform_5, window_bounds = array<i64: 4, 1>}, {transform_indices = @transform_6, window_bounds = array<i64: 1, 4, 64>}, {transform_indices = @transform_7, window_bounds = array<i64: 1, 4, 64>}]} {
    %c0 = arith.constant 0 : index
    %c0_0 = arith.constant 0 : index
    %c0_1 = arith.constant 0 : index
    %0 = vector.load %arg1[%c0, %c0_0, %c0_1] : memref<1x4x256xf32, #tpu.memory_space<vmem>>, vector<1x4x256xf32>
    %1 = vector.shape_cast %0 : vector<1x4x256xf32> to vector<4x256xf32>
    %c0_2 = arith.constant 0 : index
    %c0_3 = arith.constant 0 : index
    %2 = vector.load %arg2[%c0_2, %c0_3] : memref<256x128xf32, #tpu.memory_space<vmem>>, vector<256x128xf32>
    %cst = arith.constant dense<0.000000e+00> : vector<4x128xf32>
    %3 = tpu.matmul %1, %2, %cst {dimension_numbers = #tpu.dot_dimension_numbers<[1], [0], [0], [1], [0, 0, 1, 1], [], []>, precision = #tpu.contract_precision<fp32>} : vector<4x256xf32>, vector<256x128xf32>, vector<4x128xf32> -> vector<4x128xf32>
    %4 = vector.extract_strided_slice %3 {offsets = [0, 0], sizes = [4, 64], strides = [1, 1]} : vector<4x128xf32> to vector<4x64xf32>
    %5 = vector.extract_strided_slice %3 {offsets = [0, 64], sizes = [4, 64], strides = [1, 1]} : vector<4x128xf32> to vector<4x64xf32>
    %6 = arith.subf %4, %5 : vector<4x64xf32>
    %cst_4 = arith.constant dense<0.000000e+00> : vector<4xf32>
    %7 = vector.multi_reduction <add>, %4, %cst_4 [1] : vector<4x64xf32> to vector<4xf32>
    %8 = vector.shape_cast %7 : vector<4xf32> to vector<4x1xf32>
    %cst_5 = arith.constant 1.562500e-02 : f32
    %9 = vector.broadcast %cst_5 : f32 to vector<4x1xf32>
    %10 = arith.mulf %8, %9 : vector<4x1xf32>
    %c0_6 = arith.constant 0 : index
    %c0_7 = arith.constant 0 : index
    %11 = vector.load %arg3[%c0_6, %c0_7] : memref<2x4xf32, #tpu.memory_space<vmem>>, vector<2x4xf32>
    %cst_8 = arith.constant dense<0.000000e+00> : vector<2x1xf32>
    %12 = tpu.matmul %11, %10, %cst_8 {dimension_numbers = #tpu.dot_dimension_numbers<[1], [0], [0], [1], [0, 0, 1, 1], [], []>, precision = #tpu.contract_precision<fp32>} : vector<2x4xf32>, vector<4x1xf32>, vector<2x1xf32> -> vector<2x1xf32>
    %c0_9 = arith.constant 0 : index
    %c0_10 = arith.constant 0 : index
    %13 = vector.load %arg4[%c0_9, %c0_10] : memref<2x1xf32, #tpu.memory_space<vmem>>, vector<2x1xf32>
    %14 = arith.addf %12, %13 : vector<2x1xf32>
    %cst_11 = arith.constant 0.000000e+00 : f32
    %15 = vector.broadcast %cst_11 : f32 to vector<2x1xf32>
    %16 = arith.maximumf %14, %15 : vector<2x1xf32>
    %c0_12 = arith.constant 0 : index
    %c0_13 = arith.constant 0 : index
    %17 = vector.load %arg5[%c0_12, %c0_13] : memref<4x2xf32, #tpu.memory_space<vmem>>, vector<4x2xf32>
    %cst_14 = arith.constant dense<0.000000e+00> : vector<4x1xf32>
    %18 = tpu.matmul %17, %16, %cst_14 {dimension_numbers = #tpu.dot_dimension_numbers<[1], [0], [0], [1], [0, 0, 1, 1], [], []>, precision = #tpu.contract_precision<fp32>} : vector<4x2xf32>, vector<2x1xf32>, vector<4x1xf32> -> vector<4x1xf32>
    %c0_15 = arith.constant 0 : index
    %c0_16 = arith.constant 0 : index
    %19 = vector.load %arg6[%c0_15, %c0_16] : memref<4x1xf32, #tpu.memory_space<vmem>>, vector<4x1xf32>
    %20 = arith.addf %18, %19 : vector<4x1xf32>
    %21 = vector.broadcast %20 : vector<4x1xf32> to vector<4x64xf32>
    %22 = arith.addf %21, %4 : vector<4x64xf32>
    %23 = arith.negf %22 : vector<4x64xf32>
    %24 = math.exp %23 : vector<4x64xf32>
    %cst_17 = arith.constant 1.000000e+00 : f32
    %25 = vector.broadcast %cst_17 : f32 to vector<4x64xf32>
    %26 = arith.addf %25, %24 : vector<4x64xf32>
    %27 = arith.divf %25, %26 : vector<4x64xf32>
    %c0_18 = arith.constant 0 : index
    %c0_19 = arith.constant 0 : index
    %c0_20 = arith.constant 0 : index
    %28 = vector.load %arg7[%c0_18, %c0_19, %c0_20] : memref<1x4x64xf32, #tpu.memory_space<vmem>>, vector<1x4x64xf32>
    %29 = vector.shape_cast %28 : vector<1x4x64xf32> to vector<4x64xf32>
    %30 = vector.shape_cast %5 : vector<4x64xf32> to vector<1x4x64xf32>
    tpu.vector_store %arg7[%c0_18, %c0_19, %c0_20], %30 {strides = array<i32>} : memref<1x4x64xf32, #tpu.memory_space<vmem>>, vector<1x4x64xf32>,
    %31 = arith.mulf %6, %27 : vector<4x64xf32>
    %c0_21 = arith.constant 0 : index
    %c0_22 = arith.constant 0 : index
    %c0_23 = arith.constant 0 : index
    %32 = vector.load %arg8[%c0_21, %c0_22, %c0_23] : memref<1x4x64xf32, #tpu.memory_space<vmem>>, vector<1x4x64xf32>
    %33 = vector.shape_cast %32 : vector<1x4x64xf32> to vector<4x64xf32>
    %34 = vector.shape_cast %31 : vector<4x64xf32> to vector<1x4x64xf32>
    tpu.vector_store %arg8[%c0_21, %c0_22, %c0_23], %34 {strides = array<i32>} : memref<1x4x64xf32, #tpu.memory_space<vmem>>, vector<1x4x64xf32>,
    return
  }
  func.func @transform_0(%arg0: i32) -> (i32, i32, i32) {
    %c0_i32 = arith.constant 0 : i32
    %c0_i32_0 = arith.constant 0 : i32
    %c0_i32_1 = arith.constant 0 : i32
    return %arg0, %c0_i32, %c0_i32_0 : i32, i32, i32
  }
  func.func @transform_1(%arg0: i32) -> (i32, i32) {
    %c0_i32 = arith.constant 0 : i32
    %c0_i32_0 = arith.constant 0 : i32
    %c0_i32_1 = arith.constant 0 : i32
    return %c0_i32, %c0_i32_0 : i32, i32
  }
  func.func @transform_2(%arg0: i32) -> (i32, i32) {
    %c0_i32 = arith.constant 0 : i32
    %c0_i32_0 = arith.constant 0 : i32
    %c0_i32_1 = arith.constant 0 : i32
    return %c0_i32, %c0_i32_0 : i32, i32
  }
  func.func @transform_3(%arg0: i32) -> (i32, i32) {
    %c0_i32 = arith.constant 0 : i32
    %c0_i32_0 = arith.constant 0 : i32
    %c0_i32_1 = arith.constant 0 : i32
    return %c0_i32, %c0_i32_0 : i32, i32
  }
  func.func @transform_4(%arg0: i32) -> (i32, i32) {
    %c0_i32 = arith.constant 0 : i32
    %c0_i32_0 = arith.constant 0 : i32
    %c0_i32_1 = arith.constant 0 : i32
    return %c0_i32, %c0_i32_0 : i32, i32
  }
  func.func @transform_5(%arg0: i32) -> (i32, i32) {
    %c0_i32 = arith.constant 0 : i32
    %c0_i32_0 = arith.constant 0 : i32
    %c0_i32_1 = arith.constant 0 : i32
    return %c0_i32, %c0_i32_0 : i32, i32
  }
  func.func @transform_6(%arg0: i32) -> (i32, i32, i32) {
    %c0_i32 = arith.constant 0 : i32
    %c0_i32_0 = arith.constant 0 : i32
    %c0_i32_1 = arith.constant 0 : i32
    return %arg0, %c0_i32, %c0_i32_0 : i32, i32, i32
  }
  func.func @transform_7(%arg0: i32) -> (i32, i32, i32) {
    %c0_i32 = arith.constant 0 : i32
    %c0_i32_0 = arith.constant 0 : i32
    %c0_i32_1 = arith.constant 0 : i32
    return %arg0, %c0_i32, %c0_i32_0 : i32, i32, i32
  }
}

module attributes {stable_mosaic.version = 11 : i64} {
  func.func @haar_kernel(%arg0: i32, %arg1: memref<1x4x256xf32, #tpu.memory_space<vmem>>, %arg2: memref<256x128xf32, #tpu.memory_space<vmem>>, %arg3: memref<2x4xf32, #tpu.memory_space<vmem>>, %arg4: memref<2x1xf32, #tpu.memory_space<vmem>>, %arg5: memref<4x2xf32, #tpu.memory_space<vmem>>, %arg6: memref<4x1xf32, #tpu.memory_space<vmem>>, %arg7: memref<1x4x64xf32, #tpu.memory_space<vmem>>, %arg8: memref<1x4x64xf32, #tpu.memory_space<vmem>>) attributes {dimension_semantics = [#tpu.dimension_semantics<parallel>], iteration_bounds = array<i64: 2>, scalar_prefetch = 0 : i64, scratch_operands = 0 : i64, tpu.core_type = #tpu.core_type<tc>, window_params = [{transform_indices = @transform_0, window_bounds = array<i64: 1, 4, 256>}, {pipeline_mode = #tpu.pipeline_mode<synchronous>, transform_indices = @transform_1, window_bounds = array<i64: 256, 128>}, {pipeline_mode = #tpu.pipeline_mode<synchronous>, transform_indices = @transform_2, window_bounds = array<i64: 2, 4>}, {pipeline_mode = #tpu.pipeline_mode<synchronous>, transform_indices = @transform_3, window_bounds = array<i64: 2, 1>}, {pipeline_mode = #tpu.pipeline_mode<synchronous>, transform_indices = @transform_4, window_bounds = array<i64: 4, 2>}, {pipeline_mode = #tpu.pipeline_mode<synchronous>, transform_indices = @transform_5, window_bounds = array<i64: 4, 1>}, {transform_indices = @transform_6, window_bounds = array<i64: 1, 4, 64>}, {transform_indices = @transform_7, window_bounds = array<i64: 1, 4, 64>}]} {
    %c0 = arith.constant 0 : index
    %c0_0 = arith.constant 0 : index
    %c0_1 = arith.constant 0 : index
    %0 = vector.load %arg1[%c0, %c0_0, %c0_1] : memref<1x4x256xf32, #tpu.memory_space<vmem>>, vector<1x4x256xf32>
    %1 = vector.shape_cast %0 : vector<1x4x256xf32> to vector<4x256xf32>
    %c0_2 = arith.constant 0 : index
    %c0_3 = arith.constant 0 : index
    %2 = vector.load %arg2[%c0_2, %c0_3] : memref<256x128xf32, #tpu.memory_space<vmem>>, vector<256x128xf32>
    %cst = arith.constant dense<0.000000e+00> : vector<4x128xf32>
    %3 = tpu.matmul %1, %2, %cst {dimension_numbers = #tpu.dot_dimension_numbers<[1], [0], [0], [1], [0, 0, 1, 1], [], []>, precision = #tpu.contract_precision<fp32>} : vector<4x256xf32>, vector<256x128xf32>, vector<4x128xf32> -> vector<4x128xf32>
    %4 = vector.extract_strided_slice %3 {offsets = [0, 0], sizes = [4, 64], strides = [1, 1]} : vector<4x128xf32> to vector<4x64xf32>
    %5 = vector.extract_strided_slice %3 {offsets = [0, 64], sizes = [4, 64], strides = [1, 1]} : vector<4x128xf32> to vector<4x64xf32>
    %6 = arith.subf %4, %5 : vector<4x64xf32>
    %cst_4 = arith.constant dense<0.000000e+00> : vector<4xf32>
    %7 = vector.multi_reduction <add>, %4, %cst_4 [1] : vector<4x64xf32> to vector<4xf32>
    %8 = vector.shape_cast %7 : vector<4xf32> to vector<4x1xf32>
    %cst_5 = arith.constant 1.562500e-02 : f32
    %9 = vector.broadcast %cst_5 : f32 to vector<4x1xf32>
    %10 = arith.mulf %8, %9 : vector<4x1xf32>
    %c0_6 = arith.constant 0 : index
    %c0_7 = arith.constant 0 : index
    %11 = vector.load %arg3[%c0_6, %c0_7] : memref<2x4xf32, #tpu.memory_space<vmem>>, vector<2x4xf32>
    %cst_8 = arith.constant dense<0.000000e+00> : vector<2x1xf32>
    %12 = tpu.matmul %11, %10, %cst_8 {dimension_numbers = #tpu.dot_dimension_numbers<[1], [0], [0], [1], [0, 0, 1, 1], [], []>, precision = #tpu.contract_precision<fp32>} : vector<2x4xf32>, vector<4x1xf32>, vector<2x1xf32> -> vector<2x1xf32>
    %c0_9 = arith.constant 0 : index
    %c0_10 = arith.constant 0 : index
    %13 = vector.load %arg4[%c0_9, %c0_10] : memref<2x1xf32, #tpu.memory_space<vmem>>, vector<2x1xf32>
    %14 = arith.addf %12, %13 : vector<2x1xf32>
    %cst_11 = arith.constant 0.000000e+00 : f32
    %15 = vector.broadcast %cst_11 : f32 to vector<2x1xf32>
    %16 = arith.maximumf %14, %15 : vector<2x1xf32>
    %c0_12 = arith.constant 0 : index
    %c0_13 = arith.constant 0 : index
    %17 = vector.load %arg5[%c0_12, %c0_13] : memref<4x2xf32, #tpu.memory_space<vmem>>, vector<4x2xf32>
    %cst_14 = arith.constant dense<0.000000e+00> : vector<4x1xf32>
    %18 = tpu.matmul %17, %16, %cst_14 {dimension_numbers = #tpu.dot_dimension_numbers<[1], [0], [0], [1], [0, 0, 1, 1], [], []>, precision = #tpu.contract_precision<fp32>} : vector<4x2xf32>, vector<2x1xf32>, vector<4x1xf32> -> vector<4x1xf32>
    %c0_15 = arith.constant 0 : index
    %c0_16 = arith.constant 0 : index
    %19 = vector.load %arg6[%c0_15, %c0_16] : memref<4x1xf32, #tpu.memory_space<vmem>>, vector<4x1xf32>
    %20 = arith.addf %18, %19 : vector<4x1xf32>
    %21 = vector.broadcast %20 : vector<4x1xf32> to vector<4x64xf32>
    %22 = arith.addf %21, %4 : vector<4x64xf32>
    %23 = arith.negf %22 : vector<4x64xf32>
    %24 = math.exp %23 : vector<4x64xf32>
    %cst_17 = arith.constant 1.000000e+00 : f32
    %25 = vector.broadcast %cst_17 : f32 to vector<4x64xf32>
    %26 = arith.addf %25, %24 : vector<4x64xf32>
    %27 = arith.divf %25, %26 : vector<4x64xf32>
    %c0_18 = arith.constant 0 : index
    %c0_19 = arith.constant 0 : index
    %c0_20 = arith.constant 0 : index
    %28 = vector.load %arg7[%c0_18, %c0_19, %c0_20] : memref<1x4x64xf32, #tpu.memory_space<vmem>>, vector<1x4x64xf32>
    %29 = vector.shape_cast %28 : vector<1x4x64xf32> to vector<4x64xf32>
    %30 = vector.shape_cast %5 : vector<4x64xf32> to vector<1x4x64xf32>
    tpu.vector_store %arg7[%c0_18, %c0_19, %c0_20], %30 {strides = array<i32>} : memref<1x4x64xf32, #tpu.memory_space<vmem>>, vector<1x4x64xf32>,
    %31 = arith.mulf %6, %27 : vector<4x64xf32>
    %c0_21 = arith.constant 0 : index
    %c0_22 = arith.constant 0 : index
    %c0_23 = arith.constant 0 : index
    %32 = vector.load %arg8[%c0_21, %c0_22, %c0_23] : memref<1x4x64xf32, #tpu.memory_space<vmem>>, vector<1x4x64xf32>
    %33 = vector.shape_cast %32 : vector<1x4x64xf32> to vector<4x64xf32>
    %34 = vector.shape_cast %31 : vector<4x64xf32> to vector<1x4x64xf32>
    tpu.vector_store %arg8[%c0_21, %c0_22, %c0_23], %34 {strides = array<i32>} : memref<1x4x64xf32, #tpu.memory_space<vmem>>, vector<1x4x64xf32>,
    return
  }
  func.func @transform_0(%arg0: i32) -> (i32, i32, i32) {
    %c0_i32 = arith.constant 0 : i32
    %c0_i32_0 = arith.constant 0 : i32
    %c0_i32_1 = arith.constant 0 : i32
    return %arg0, %c0_i32, %c0_i32_0 : i32, i32, i32
  }
  func.func @transform_1(%arg0: i32) -> (i32, i32) {
    %c0_i32 = arith.constant 0 : i32
    %c0_i32_0 = arith.constant 0 : i32
    %c0_i32_1 = arith.constant 0 : i32
    return %c0_i32, %c0_i32_0 : i32, i32
  }
  func.func @transform_2(%arg0: i32) -> (i32, i32) {
    %c0_i32 = arith.constant 0 : i32
    %c0_i32_0 = arith.constant 0 : i32
    %c0_i32_1 = arith.constant 0 : i32
    return %c0_i32, %c0_i32_0 : i32, i32
  }
  func.func @transform_3(%arg0: i32) -> (i32, i32) {
    %c0_i32 = arith.constant 0 : i32
    %c0_i32_0 = arith.constant 0 : i32
    %c0_i32_1 = arith.constant 0 : i32
    return %c0_i32, %c0_i32_0 : i32, i32
  }
  func.func @transform_4(%arg0: i32) -> (i32, i32) {
    %c0_i32 = arith.constant 0 : i32
    %c0_i32_0 = arith.constant 0 : i32
    %c0_i32_1 = arith.constant 0 : i32
    return %c0_i32, %c0_i32_0 : i32, i32
  }
  func.func @transform_5(%arg0: i32) -> (i32, i32) {
    %c0_i32 = arith.constant 0 : i32
    %c0_i32_0 = arith.constant 0 : i32
    %c0_i32_1 = arith.constant 0 : i32
    return %c0_i32, %c0_i32_0 : i32, i32
  }
  func.func @transform_6(%arg0: i32) -> (i32, i32, i32) {
    %c0_i32 = arith.constant 0 : i32
    %c0_i32_0 = arith.constant 0 : i32
    %c0_i32_1 = arith.constant 0 : i32
    return %arg0, %c0_i32, %c0_i32_0 : i32, i32, i32
  }
  func.func @transform_7(%arg0: i32) -> (i32, i32, i32) {
    %c0_i32 = arith.constant 0 : i32
    %c0_i32_0 = arith.constant 0 : i32
    %c0_i32_1 = arith.constant 0 : i32
    return %arg0, %c0_i32, %c0_i32_0 : i32, i32, i32
  }
}

</mosaic_0001>

<llo_original>
// kernel: tpu_custom_call.1
$region0: #{tpu_custom_call.1}
  #allocation0 [shape = 'u32[]', space=smem, size = 0x4, offset = 0x4, fixed_abs, tag = 'smem constant byte address 0x4 - core index']
  #allocation1 [shape = 'u32[144,128]{1,0:T(1,128)}', space=vmem, size = 0x12000, scoped, tag = 'internal scratch']
  %s0 = inlined_call_operand.hbm [shape: f32[2,4,256], index: 0, kind: input, shape index: {}]
  %s1 = inlined_call_operand.hbm [shape: f32[256,128], index: 1, kind: input, shape index: {}]
  %s2 = inlined_call_operand.vmem [shape: f32[2,4], index: 2, kind: input, shape index: {}]
  %s3 = inlined_call_operand.vmem [shape: f32[2,1], index: 3, kind: input, shape index: {}]
  %s4 = inlined_call_operand.vmem [shape: f32[4,2], index: 4, kind: input, shape index: {}]
  %s5 = inlined_call_operand.vmem [shape: f32[4,1], index: 5, kind: input, shape index: {}]
  %s6 = inlined_call_operand.hbm [shape: f32[2,4,64], index: 6, kind: output, shape index: {0}]
  %s7 = inlined_call_operand.hbm [shape: f32[2,4,64], index: 7, kind: output, shape index: {1}]
  %8 = xla_tuple %s6, %s7
  %s9 = sld [smem:[#allocation0]]
  $region73: #{tpu_custom_call.1} parent=0
    _
  %s11 = ssub.s32 1, %s9
  %s12 = scalar_select 0, %s11, %s9
  $region1: #{tpu_custom_call.1} parent=0
    #allocation2 [shape = 'u8[8192]{0}', space=vmem, size = 0x2000, scoped, tag = 'input window, operand 0']
    #allocation3 [shape = 's32[2]{0}', space=sflag, size = 0x8, scoped, tag = 'scoped memory for tpu_custom_call.1']
    #allocation4 [shape = 's32[2]{0}', space=sflag, size = 0x8, scoped, tag = 'scoped memory for tpu_custom_call.1']
    #allocation5 [shape = 'u8[131072]{0}', space=vmem, size = 0x20000, scoped, tag = 'input window, operand 1, single buffered']
    #allocation6 [shape = 's32[1]{0}', space=sflag, size = 0x4, scoped, tag = 'scoped memory for tpu_custom_call.1']
    #allocation7 [shape = 'u8[4096]{0}', space=vmem, size = 0x1000, scoped, tag = 'output window, operand 0']
    #allocation8 [shape = 'u8[4096]{0}', space=vmem, size = 0x1000, scoped, tag = 'output window, operand 1']
    #allocation9 [shape = 's32[2]{0}', space=sflag, size = 0x8, scoped, tag = 'scoped memory for tpu_custom_call.1']
    %13 = vsyncpa [#allocation3], 0
    %s14 = scalar_lea.sflag [#allocation3], 1
    %15 = vsyncpa %s14, 0
    %16 = vsyncpa [#allocation6], 0
    %17 = vsyncpa [#allocation4], 0
    %s18 = scalar_lea.sflag [#allocation4], 1
    %19 = vsyncpa %s18, 0
    %20 = vsyncpa [#allocation9], 0
    %s21 = scalar_lea.sflag [#allocation9], 1
    %22 = vsyncpa %s21, 0
    loop: start=0, step=1, limit=4
    $region2: #{tpu_custom_call.1} parent=1 // loop_pre_header
      _
    $region3: #{tpu_custom_call.1} parent=1 // loop_header
      %s24 = sphi 0, %s28
      %p25 = scmp.ge.s32.totalorder %s24, 4
      %s34 = sphi 0, %s36
      %s37 = sphi 0, %s34
      %s38 = sphi 0, %s37
      %s54 = sphi 0, %s38
      %s58 = sphi 0, %s58
      %s60 = sphi 0, %s58
      %s61 = sphi 0, %s60
      %s75 = sphi 0, %s61
      %s79 = sphi 0, %s79
      %s81 = sphi 0, %s79
      %s82 = sphi 0, %s81
      %s96 = sphi 0, %s82
      %s100 = sphi 0, %s100
      %s102 = sphi 0, %s100
      %s103 = sphi 0, %s102
      %s117 = sphi 0, %s103
      %s121 = sphi 0, %s121
      %s123 = sphi 0, %s121
      %s124 = sphi 0, %s123
      %s138 = sphi 0, %s124
      %s142 = sphi 0, %s142
      %s144 = sphi 0, %s142
      %s145 = sphi 0, %s144
      %s159 = sphi 0, %s145
      %s165 = sphi 0, %s167
      %s168 = sphi 0, %s165
      %s169 = sphi 0, %s168
      %s185 = sphi 0, %s169
      %s191 = sphi 0, %s193
      %s194 = sphi 0, %s191
      %s195 = sphi 0, %s194
      %s211 = sphi 0, %s195
    $region4: #{tpu_custom_call.1} parent=1 // loop_header_branch
      %27 = sbr.rel (%p25) target = $region8
    $region5: #{tpu_custom_call.1} parent=1 // loop_body
      %s29 = ssub.s32 %s24, 1
      %s30 = ssub.s32 %s24, 2
      %s31 = sadd.s32 %s24, 1
      %s32 = ssub.s32 %s24, %s31
      %p33 = scmp.eq.s32.totalorder %s32, 0
      %s35 = sadd.s32 %s34, 1
      %s36 = scalar_select %p33, %s34, %s35
      %p39 = pneg %p33
      %p40 = scmp.eq.s32.totalorder %s24, 1
      %p41 = por %p39, %p40
      %p42 = scmp.ne.s32.totalorder %s34, %s37
      %p43 = scmp.eq.s32.totalorder %s24, 0
      %p44 = por %p42, %p43
      %p45 = scmp.ne.s32.totalorder %s34, %s37
      %p46 = scmp.eq.s32.totalorder %s29, 1
      %p47 = por %p45, %p46
      %p48 = scmp.ne.s32.totalorder %s37, %s38
      %p49 = scmp.eq.s32.totalorder %s29, 0
      %p50 = por %p48, %p49
      %p51 = scmp.ne.s32.totalorder %s37, %s38
      %p52 = scmp.eq.s32.totalorder %s30, 1
      %p53 = por %p51, %p52
      %p55 = scmp.ne.s32.totalorder %s38, %s54
      %p56 = scmp.eq.s32.totalorder %s30, 0
      %p57 = por %p55, %p56
      %s59 = sadd.s32 %s58, 1
      %p62 = scmp.eq.s32.totalorder %s24, 1
      %p63 = scmp.ne.s32.totalorder %s58, %s60
      %p64 = scmp.eq.s32.totalorder %s24, 0
      %p65 = por %p63, %p64
      %p66 = scmp.ne.s32.totalorder %s58, %s60
      %p67 = scmp.eq.s32.totalorder %s29, 1
      %p68 = por %p66, %p67
      %p69 = scmp.ne.s32.totalorder %s60, %s61
      %p70 = scmp.eq.s32.totalorder %s29, 0
      %p71 = por %p69, %p70
      %p72 = scmp.ne.s32.totalorder %s60, %s61
      %p73 = scmp.eq.s32.totalorder %s30, 1
      %p74 = por %p72, %p73
      %p76 = scmp.ne.s32.totalorder %s61, %s75
      %p77 = scmp.eq.s32.totalorder %s30, 0
      %p78 = por %p76, %p77
      %s80 = sadd.s32 %s79, 1
      %p83 = scmp.eq.s32.totalorder %s24, 1
      %p84 = scmp.ne.s32.totalorder %s79, %s81
      %p85 = scmp.eq.s32.totalorder %s24, 0
      %p86 = por %p84, %p85
      %p87 = scmp.ne.s32.totalorder %s79, %s81
      %p88 = scmp.eq.s32.totalorder %s29, 1
      %p89 = por %p87, %p88
      %p90 = scmp.ne.s32.totalorder %s81, %s82
      %p91 = scmp.eq.s32.totalorder %s29, 0
      %p92 = por %p90, %p91
      %p93 = scmp.ne.s32.totalorder %s81, %s82
      %p94 = scmp.eq.s32.totalorder %s30, 1
      %p95 = por %p93, %p94
      %p97 = scmp.ne.s32.totalorder %s82, %s96
      %p98 = scmp.eq.s32.totalorder %s30, 0
      %p99 = por %p97, %p98
      %s101 = sadd.s32 %s100, 1
      %p104 = scmp.eq.s32.totalorder %s24, 1
      %p105 = scmp.ne.s32.totalorder %s100, %s102
      %p106 = scmp.eq.s32.totalorder %s24, 0
      %p107 = por %p105, %p106
      %p108 = scmp.ne.s32.totalorder %s100, %s102
      %p109 = scmp.eq.s32.totalorder %s29, 1
      %p110 = por %p108, %p109
      %p111 = scmp.ne.s32.totalorder %s102, %s103
      %p112 = scmp.eq.s32.totalorder %s29, 0
      %p113 = por %p111, %p112
      %p114 = scmp.ne.s32.totalorder %s102, %s103
      %p115 = scmp.eq.s32.totalorder %s30, 1
      %p116 = por %p114, %p115
      %p118 = scmp.ne.s32.totalorder %s103, %s117
      %p119 = scmp.eq.s32.totalorder %s30, 0
      %p120 = por %p118, %p119
      %s122 = sadd.s32 %s121, 1
      %p125 = scmp.eq.s32.totalorder %s24, 1
      %p126 = scmp.ne.s32.totalorder %s121, %s123
      %p127 = scmp.eq.s32.totalorder %s24, 0
      %p128 = por %p126, %p127
      %p129 = scmp.ne.s32.totalorder %s121, %s123
      %p130 = scmp.eq.s32.totalorder %s29, 1
      %p131 = por %p129, %p130
      %p132 = scmp.ne.s32.totalorder %s123, %s124
      %p133 = scmp.eq.s32.totalorder %s29, 0
      %p134 = por %p132, %p133
      %p135 = scmp.ne.s32.totalorder %s123, %s124
      %p136 = scmp.eq.s32.totalorder %s30, 1
      %p137 = por %p135, %p136
      %p139 = scmp.ne.s32.totalorder %s124, %s138
      %p140 = scmp.eq.s32.totalorder %s30, 0
      %p141 = por %p139, %p140
      %s143 = sadd.s32 %s142, 1
      %p146 = scmp.eq.s32.totalorder %s24, 1
      %p147 = scmp.ne.s32.totalorder %s142, %s144
      %p148 = scmp.eq.s32.totalorder %s24, 0
      %p149 = por %p147, %p148
      %p150 = scmp.ne.s32.totalorder %s142, %s144
      %p151 = scmp.eq.s32.totalorder %s29, 1
      %p152 = por %p150, %p151
      %p153 = scmp.ne.s32.totalorder %s144, %s145
      %p154 = scmp.eq.s32.totalorder %s29, 0
      %p155 = por %p153, %p154
      %p156 = scmp.ne.s32.totalorder %s144, %s145
      %p157 = scmp.eq.s32.totalorder %s30, 1
      %p158 = por %p156, %p157
      %p160 = scmp.ne.s32.totalorder %s145, %s159
      %p161 = scmp.eq.s32.totalorder %s30, 0
      %p162 = por %p160, %p161
      %s163 = ssub.s32 %s24, %s31
      %p164 = scmp.eq.s32.totalorder %s163, 0
      %s166 = sadd.s32 %s165, 1
      %s167 = scalar_select %p164, %s165, %s166
      %p170 = pneg %p164
      %p171 = scmp.eq.s32.totalorder %s24, 1
      %p172 = por %p170, %p171
      %p173 = scmp.ne.s32.totalorder %s165, %s168
      %p174 = scmp.eq.s32.totalorder %s24, 0
      %p175 = por %p173, %p174
      %p176 = scmp.ne.s32.totalorder %s165, %s168
      %p177 = scmp.eq.s32.totalorder %s29, 1
      %p178 = por %p176, %p177
      %p179 = scmp.ne.s32.totalorder %s168, %s169
      %p180 = scmp.eq.s32.totalorder %s29, 0
      %p181 = por %p179, %p180
      %p182 = scmp.ne.s32.totalorder %s168, %s169
      %p183 = scmp.eq.s32.totalorder %s30, 1
      %p184 = por %p182, %p183
      %p186 = scmp.ne.s32.totalorder %s169, %s185
      %p187 = scmp.eq.s32.totalorder %s30, 0
      %p188 = por %p186, %p187
      %s189 = ssub.s32 %s24, %s31
      %p190 = scmp.eq.s32.totalorder %s189, 0
      %s192 = sadd.s32 %s191, 1
      %s193 = scalar_select %p190, %s191, %s192
      %p196 = pneg %p190
      %p197 = scmp.eq.s32.totalorder %s24, 1
      %p198 = por %p196, %p197
      %p199 = scmp.ne.s32.totalorder %s191, %s194
      %p200 = scmp.eq.s32.totalorder %s24, 0
      %p201 = por %p199, %p200
      %p202 = scmp.ne.s32.totalorder %s191, %s194
      %p203 = scmp.eq.s32.totalorder %s29, 1
      %p204 = por %p202, %p203
      %p205 = scmp.ne.s32.totalorder %s194, %s195
      %p206 = scmp.eq.s32.totalorder %s29, 0
      %p207 = por %p205, %p206
      %p208 = scmp.ne.s32.totalorder %s194, %s195
      %p209 = scmp.eq.s32.totalorder %s30, 1
      %p210 = por %p208, %p209
      %p212 = scmp.ne.s32.totalorder %s195, %s211
      %p213 = scmp.eq.s32.totalorder %s30, 0
      %p214 = por %p212, %p213
      %p215 = scmp.le.s32.totalorder 1, %s24
      %p216 = scmp.lt.s32.totalorder %s24, 3
      %p217 = pnand %p215, %p216
      %p218 = pneg %p217
      // Predicated region
      $region9: #{tpu_custom_call.1} parent=5 // pred_check
        _
      $region10: #{tpu_custom_call.1} parent=5 // pred_check_branch
        %220 = sbr.rel (%p217) target = $region12
      $region11: #{tpu_custom_call.1} parent=5 // pred_region
        %s221 = ssub.s32 %s24, 1
        // Predicated region
        $region13: #{tpu_custom_call.1} parent=11 // pred_check
          %p222 = pneg %p71
        $region14: #{tpu_custom_call.1} parent=11 // pred_check_branch
          %224 = sbr.rel (%p222) target = $region16
        $region15: #{tpu_custom_call.1} parent=11 // pred_region
          %s226 = ssub.s32 4096, 4096
          %227 = vsyncadd [#allocation6], %s226
          %s228 = sshll.u32 [#allocation5], 4
          %s229 = int_to_ptr.vmem [resolvable:$true] %s228
          %234 = dma.hbm_to_vmem [thread:$0]  %s1, 4096, %s229, [#allocation6], 128, 128, 8
        $region16: #{tpu_custom_call.1} parent=11 // pred_fallthru
          _
        // Predicated region
        $region17: #{tpu_custom_call.1} parent=11 // pred_check
          %p235 = pneg %p92
        $region18: #{tpu_custom_call.1} parent=11 // pred_check_branch
          %237 = sbr.rel (%p235) target = $region20
        $region19: #{tpu_custom_call.1} parent=11 // pred_region
          _
        $region20: #{tpu_custom_call.1} parent=11 // pred_fallthru
          _
        // Predicated region
        $region21: #{tpu_custom_call.1} parent=11 // pred_check
          %p238 = pneg %p113
        $region22: #{tpu_custom_call.1} parent=11 // pred_check_branch
          %240 = sbr.rel (%p238) target = $region24
        $region23: #{tpu_custom_call.1} parent=11 // pred_region
          _
        $region24: #{tpu_custom_call.1} parent=11 // pred_fallthru
          _
        // Predicated region
        $region25: #{tpu_custom_call.1} parent=11 // pred_check
          %p241 = pneg %p134
        $region26: #{tpu_custom_call.1} parent=11 // pred_check_branch
          %243 = sbr.rel (%p241) target = $region28
        $region27: #{tpu_custom_call.1} parent=11 // pred_region
          _
        $region28: #{tpu_custom_call.1} parent=11 // pred_fallthru
          _
        // Predicated region
        $region29: #{tpu_custom_call.1} parent=11 // pred_check
          %p244 = pneg %p155
        $region30: #{tpu_custom_call.1} parent=11 // pred_check_branch
          %246 = sbr.rel (%p244) target = $region32
        $region31: #{tpu_custom_call.1} parent=11 // pred_region
          _
        $region32: #{tpu_custom_call.1} parent=11 // pred_fallthru
          _
      $region12: #{tpu_custom_call.1} parent=5 // pred_fallthru
        _
      %p247 = scmp.lt.s32.totalorder %s24, 2
      // Predicated region
      $region33: #{tpu_custom_call.1} parent=5 // pred_check
        %p248 = pneg %p247
      $region34: #{tpu_custom_call.1} parent=5 // pred_check_branch
        %250 = sbr.rel (%p248) target = $region36
      $region35: #{tpu_custom_call.1} parent=5 // pred_region
        // Predicated region
        $region37: #{tpu_custom_call.1} parent=35 // pred_check
          %p251 = pneg %p44
        $region38: #{tpu_custom_call.1} parent=35 // pred_check_branch
          %253 = sbr.rel (%p251) target = $region40
        $region39: #{tpu_custom_call.1} parent=35 // pred_region
          %s254 = sand.u32 %s34, 1
          %s255 = scalar_lea.sflag [#allocation3], %s254
          %s256 = sand.u32 %s34, 1
          %s257 = smul.addr %s256, 8
          %s258 = scalar_lea.vmem [#allocation2], %s257
          %s260 = ssub.s32 128, 128
          %261 = vsyncadd %s255, %s260
          %s262 = smul.addr %s24, 2
          %s263 = smul.addr %s262, 64
          %s264 = scalar_lea.hbm %s0, %s263
          %s266 = sshll.u32 %s258, 4
          %s267 = int_to_ptr.vmem [resolvable:$true] %s266
          %269 = dma.hbm_to_vmem [thread:$0]  %s264, 128, %s267, %s255
        $region40: #{tpu_custom_call.1} parent=35 // pred_fallthru
          _
      $region36: #{tpu_custom_call.1} parent=5 // pred_fallthru
        _
      %p270 = scmp.le.s32.totalorder 1, %s24
      %p271 = scmp.lt.s32.totalorder %s24, 3
      %p272 = pnand %p270, %p271
      %p273 = pneg %p272
      // Predicated region
      $region41: #{tpu_custom_call.1} parent=5 // pred_check
        _
      $region42: #{tpu_custom_call.1} parent=5 // pred_check_branch
        %275 = sbr.rel (%p272) target = $region44
      $region43: #{tpu_custom_call.1} parent=5 // pred_region
        %s276 = ssub.s32 %s24, 1
        %s277 = sand.u32 %s37, 1
        %s278 = scalar_lea.sflag [#allocation3], %s277
        %s279 = sand.u32 %s37, 1
        %s280 = smul.addr %s279, 8
        %s281 = scalar_lea.vmem [#allocation2], %s280
        // Predicated region
        $region45: #{tpu_custom_call.1} parent=43 // pred_check
          %p282 = pneg %p50
        $region46: #{tpu_custom_call.1} parent=43 // pred_check_branch
          %284 = sbr.rel (%p282) target = $region48
        $region47: #{tpu_custom_call.1} parent=43 // pred_region
          %285 = dma.done %s278, 128
        $region48: #{tpu_custom_call.1} parent=43 // pred_fallthru
          _
        // Predicated region
        $region49: #{tpu_custom_call.1} parent=43 // pred_check
          %p286 = pneg %p71
        $region50: #{tpu_custom_call.1} parent=43 // pred_check_branch
          %288 = sbr.rel (%p286) target = $region52
        $region51: #{tpu_custom_call.1} parent=43 // pred_region
          %289 = dma.done [#allocation6], 4096
        $region52: #{tpu_custom_call.1} parent=43 // pred_fallthru
          _
        %s290 = sand.u32 %s37, 1
        %s291 = scalar_lea.sflag [#allocation3], %s290
        %s292 = sand.u32 %s37, 1
        %s293 = smul.addr %s292, 8
        %s294 = scalar_lea.vmem [#allocation2], %s293
        %p295 = pneg %p50
        %p296 = pneg %p47
        %p297 = pneg %p71
        %p298 = pneg %p68
        %p299 = pneg %p92
        %p300 = pneg %p89
        %p301 = pneg %p113
        %p302 = pneg %p110
        %p303 = pneg %p134
        %p304 = pneg %p131
        %p305 = pneg %p155
        %p306 = pneg %p152
        %p307 = pneg %p181
        %p308 = pneg %p178
        %s309 = sand.u32 %s168, 1
        %s310 = scalar_lea.sflag [#allocation4], %s309
        %s311 = sand.u32 %s168, 1
        %s312 = smul.addr %s311, 4
        %s313 = scalar_lea.vmem [#allocation7], %s312
        %p314 = pneg %p207
        %p315 = pneg %p204
        %s316 = sand.u32 %s194, 1
        %s317 = scalar_lea.sflag [#allocation9], %s316
        %s318 = sand.u32 %s194, 1
        %s319 = smul.addr %s318, 4
        %s320 = scalar_lea.vmem [#allocation8], %s319
        %v321 = vld [vmem:[%s281] sm:$0xff]
        %v322 = vld [vmem:[#allocation5] sm:$0xff]
        %v323 = vld [vmem:[#allocation5 + $0x8] sm:$0xff]
        %v324 = vld [vmem:[#allocation5 + $0x10] sm:$0xff]
        %v325 = vld [vmem:[#allocation5 + $0x18] sm:$0xff]
        %v326 = vld [vmem:[#allocation5 + $0x20] sm:$0xff]
        %v327 = vld [vmem:[#allocation5 + $0x28] sm:$0xff]
        %v328 = vld [vmem:[#allocation5 + $0x30] sm:$0xff]
        %v329 = vld [vmem:[#allocation5 + $0x38] sm:$0xff]
        %v330 = vld [vmem:[#allocation5 + $0x40] sm:$0xff]
        %v331 = vld [vmem:[#allocation5 + $0x48] sm:$0xff]
        %v332 = vld [vmem:[#allocation5 + $0x50] sm:$0xff]
        %v333 = vld [vmem:[#allocation5 + $0x58] sm:$0xff]
        %v334 = vld [vmem:[#allocation5 + $0x60] sm:$0xff]
        %v335 = vld [vmem:[#allocation5 + $0x68] sm:$0xff]
        %v336 = vld [vmem:[#allocation5 + $0x70] sm:$0xff]
        %v337 = vld [vmem:[#allocation5 + $0x78] sm:$0xff]
        %v338 = vld [vmem:[#allocation5 + $0x80] sm:$0xff]
        %v339 = vld [vmem:[#allocation5 + $0x88] sm:$0xff]
        %v340 = vld [vmem:[#allocation5 + $0x90] sm:$0xff]
        %v341 = vld [vmem:[#allocation5 + $0x98] sm:$0xff]
        %v342 = vld [vmem:[#allocation5 + $0xa0] sm:$0xff]
        %v343 = vld [vmem:[#allocation5 + $0xa8] sm:$0xff]
        %v344 = vld [vmem:[#allocation5 + $0xb0] sm:$0xff]
        %v345 = vld [vmem:[#allocation5 + $0xb8] sm:$0xff]
        %v346 = vld [vmem:[#allocation5 + $0xc0] sm:$0xff]
        %v347 = vld [vmem:[#allocation5 + $0xc8] sm:$0xff]
        %v348 = vld [vmem:[#allocation5 + $0xd0] sm:$0xff]
        %v349 = vld [vmem:[#allocation5 + $0xd8] sm:$0xff]
        %v350 = vld [vmem:[#allocation5 + $0xe0] sm:$0xff]
        %v351 = vld [vmem:[#allocation5 + $0xe8] sm:$0xff]
        %v352 = vld [vmem:[#allocation5 + $0xf0] sm:$0xff]
        %v353 = vld [vmem:[#allocation5 + $0xf8] sm:$0xff]
        %v355 = vcombine.high %v321, %v321
        %357 = vmatprep.subr.mxu0 0.0
        %v358 = vand.u32 %v322, 4294901760
        %359 = vmatpush1.msra.mxu0 %v358
        %360 = vmatprep.subr.mxu0 0.0
        %v361 = vand.u32 %v323, 4294901760
        %362 = vmatpush1.msra.mxu0 %v361
        %363 = vmatprep.subr.mxu0 0.0
        %v364 = vand.u32 %v324, 4294901760
        %365 = vmatpush1.msra.mxu0 %v364
        %366 = vmatprep.subr.mxu0 0.0
        %v367 = vand.u32 %v325, 4294901760
        %368 = vmatpush1.msra.mxu0 %v367
        %369 = vmatprep.subr.mxu0 0.0
        %v370 = vand.u32 %v326, 4294901760
        %371 = vmatpush1.msra.mxu0 %v370
        %372 = vmatprep.subr.mxu0 0.0
        %v373 = vand.u32 %v327, 4294901760
        %374 = vmatpush1.msra.mxu0 %v373
        %375 = vmatprep.subr.mxu0 0.0
        %v376 = vand.u32 %v328, 4294901760
        %377 = vmatpush1.msra.mxu0 %v376
        %378 = vmatprep.subr.mxu0 0.0
        %v379 = vand.u32 %v329, 4294901760
        %380 = vmatpush1.msra.mxu0 %v379
        %381 = vmatprep.subr.mxu0 0.0
        %v382 = vand.u32 %v330, 4294901760
        %383 = vmatpush1.msra.mxu0 %v382
        %384 = vmatprep.subr.mxu0 0.0
        %v385 = vand.u32 %v331, 4294901760
        %386 = vmatpush1.msra.mxu0 %v385
        %387 = vmatprep.subr.mxu0 0.0
        %v388 = vand.u32 %v332, 4294901760
        %389 = vmatpush1.msra.mxu0 %v388
        %390 = vmatprep.subr.mxu0 0.0
        %v391 = vand.u32 %v333, 4294901760
        %392 = vmatpush1.msra.mxu0 %v391
        %393 = vmatprep.subr.mxu0 0.0
        %v394 = vand.u32 %v334, 4294901760
        %395 = vmatpush1.msra.mxu0 %v394
        %396 = vmatprep.subr.mxu0 0.0
        %v397 = vand.u32 %v335, 4294901760
        %398 = vmatpush1.msra.mxu0 %v397
        %399 = vmatprep.subr.mxu0 0.0
        %v400 = vand.u32 %v336, 4294901760
        %401 = vmatpush1.msra.mxu0 %v400
        %402 = vmatprep.subr.mxu0 0.0
        %v403 = vand.u32 %v337, 4294901760
        %404 = vmatpush1.msra.mxu0 %v403
        %405 = vmatprep.subr.mxu0 0.0
        %v406 = vand.u32 %v338, 4294901760
        %407 = vmatpush1.msra.mxu0 %v406
        %408 = vmatprep.subr.mxu0 0.0
        %v409 = vand.u32 %v339, 4294901760
        %410 = vmatpush1.msra.mxu0 %v409
        %411 = vmatprep.subr.mxu0 0.0
        %v412 = vand.u32 %v340, 4294901760
        %413 = vmatpush1.msra.mxu0 %v412
        %414 = vmatprep.subr.mxu0 0.0
        %v415 = vand.u32 %v341, 4294901760
        %416 = vmatpush1.msra.mxu0 %v415
        %417 = vmatprep.subr.mxu0 0.0
        %v418 = vand.u32 %v342, 4294901760
        %419 = vmatpush1.msra.mxu0 %v418
        %420 = vmatprep.subr.mxu0 0.0
        %v421 = vand.u32 %v343, 4294901760
        %422 = vmatpush1.msra.mxu0 %v421
        %423 = vmatprep.subr.mxu0 0.0
        %v424 = vand.u32 %v344, 4294901760
        %425 = vmatpush1.msra.mxu0 %v424
        %426 = vmatprep.subr.mxu0 0.0
        %v427 = vand.u32 %v345, 4294901760
        %428 = vmatpush1.msra.mxu0 %v427
        %429 = vmatprep.subr.mxu0 0.0
        %v430 = vand.u32 %v346, 4294901760
        %431 = vmatpush1.msra.mxu0 %v430
        %432 = vmatprep.subr.mxu0 0.0
        %v433 = vand.u32 %v347, 4294901760
        %434 = vmatpush1.msra.mxu0 %v433
        %435 = vmatprep.subr.mxu0 0.0
        %v436 = vand.u32 %v348, 4294901760
        %437 = vmatpush1.msra.mxu0 %v436
        %438 = vmatprep.subr.mxu0 0.0
        %v439 = vand.u32 %v349, 4294901760
        %440 = vmatpush1.msra.mxu0 %v439
        %441 = vmatprep.subr.mxu0 0.0
        %v442 = vand.u32 %v350, 4294901760
        %443 = vmatpush1.msra.mxu0 %v442
        %444 = vmatprep.subr.mxu0 0.0
        %v445 = vand.u32 %v351, 4294901760
        %446 = vmatpush1.msra.mxu0 %v445
        %447 = vmatprep.subr.mxu0 0.0
        %v448 = vand.u32 %v352, 4294901760
        %449 = vmatpush1.msra.mxu0 %v448
        %450 = vmatprep.subr.mxu0 0.0
        %v451 = vand.u32 %v353, 4294901760
        %452 = vmatpush1.msra.mxu0 %v451
        %v453 = vand.u32 %v355, 4294901760
        %v454 = vsub.f32 %v355, %v453
        %v455 = vand.u32 %v454, 4294901760
        %v456 = vsub.f32 %v454, %v455
        %v457 = vand.u32 %v456, 4294901760
        %458 = vmatprep.mubr.f32.mxu0 %v457
        %v459 = vand.u32 %v321, 4294901760
        %v460 = vsub.f32 %v321, %v459
        %v461 = vand.u32 %v460, 4294901760
        %v462 = vsub.f32 %v460, %v461
        %v463 = vand.u32 %v462, 4294901760
        %464 = vmatmul.mubr.f32.gmra.mrb[0].mxu0 %v463
        %v465 = vpop.f32.mrb[0].mxu0
        %v466 = vadd.f32 0.0, %v465
        %v467 = vpop.f32.mrb[0].mxu0
        %468 = vdwg.mxu0
        %469 = vmatprep.subr.mxu0 0.0
        %v470 = vand.u32 %v322, 4294901760
        %v471 = vsub.f32 %v322, %v470
        %v472 = vand.u32 %v471, 4294901760
        %v473 = vsub.f32 %v471, %v472
        %v474 = vand.u32 %v473, 4294901760
        %475 = vmatpush1.msra.mxu0 %v474
        %476 = vmatprep.subr.mxu0 0.0
        %v477 = vand.u32 %v323, 4294901760
        %v478 = vsub.f32 %v323, %v477
        %v479 = vand.u32 %v478, 4294901760
        %v480 = vsub.f32 %v478, %v479
        %v481 = vand.u32 %v480, 4294901760
        %482 = vmatpush1.msra.mxu0 %v481
        %483 = vmatprep.subr.mxu0 0.0
        %v484 = vand.u32 %v324, 4294901760
        %v485 = vsub.f32 %v324, %v484
        %v486 = vand.u32 %v485, 4294901760
        %v487 = vsub.f32 %v485, %v486
        %v488 = vand.u32 %v487, 4294901760
        %489 = vmatpush1.msra.mxu0 %v488
        %490 = vmatprep.subr.mxu0 0.0
        %v491 = vand.u32 %v325, 4294901760
        %v492 = vsub.f32 %v325, %v491
        %v493 = vand.u32 %v492, 4294901760
        %v494 = vsub.f32 %v492, %v493
        %v495 = vand.u32 %v494, 4294901760
        %496 = vmatpush1.msra.mxu0 %v495
        %497 = vmatprep.subr.mxu0 0.0
        %v498 = vand.u32 %v326, 4294901760
        %v499 = vsub.f32 %v326, %v498
        %v500 = vand.u32 %v499, 4294901760
        %v501 = vsub.f32 %v499, %v500
        %v502 = vand.u32 %v501, 4294901760
        %503 = vmatpush1.msra.mxu0 %v502
        %504 = vmatprep.subr.mxu0 0.0
        %v505 = vand.u32 %v327, 4294901760
        %v506 = vsub.f32 %v327, %v505
        %v507 = vand.u32 %v506, 4294901760
        %v508 = vsub.f32 %v506, %v507
        %v509 = vand.u32 %v508, 4294901760
        %510 = vmatpush1.msra.mxu0 %v509
        %511 = vmatprep.subr.mxu0 0.0
        %v512 = vand.u32 %v328, 4294901760
        %v513 = vsub.f32 %v328, %v512
        %v514 = vand.u32 %v513, 4294901760
        %v515 = vsub.f32 %v513, %v514
        %v516 = vand.u32 %v515, 4294901760
        %517 = vmatpush1.msra.mxu0 %v516
        %518 = vmatprep.subr.mxu0 0.0
        %v519 = vand.u32 %v329, 4294901760
        %v520 = vsub.f32 %v329, %v519
        %v521 = vand.u32 %v520, 4294901760
        %v522 = vsub.f32 %v520, %v521
        %v523 = vand.u32 %v522, 4294901760
        %524 = vmatpush1.msra.mxu0 %v523
        %525 = vmatprep.subr.mxu0 0.0
        %v526 = vand.u32 %v330, 4294901760
        %v527 = vsub.f32 %v330, %v526
        %v528 = vand.u32 %v527, 4294901760
        %v529 = vsub.f32 %v527, %v528
        %v530 = vand.u32 %v529, 4294901760
        %531 = vmatpush1.msra.mxu0 %v530
        %532 = vmatprep.subr.mxu0 0.0
        %v533 = vand.u32 %v331, 4294901760
        %v534 = vsub.f32 %v331, %v533
        %v535 = vand.u32 %v534, 4294901760
        %v536 = vsub.f32 %v534, %v535
        %v537 = vand.u32 %v536, 4294901760
        %538 = vmatpush1.msra.mxu0 %v537
        %539 = vmatprep.subr.mxu0 0.0
        %v540 = vand.u32 %v332, 4294901760
        %v541 = vsub.f32 %v332, %v540
        %v542 = vand.u32 %v541, 4294901760
        %v543 = vsub.f32 %v541, %v542
        %v544 = vand.u32 %v543, 4294901760
        %545 = vmatpush1.msra.mxu0 %v544
        %546 = vmatprep.subr.mxu0 0.0
        %v547 = vand.u32 %v333, 4294901760
        %v548 = vsub.f32 %v333, %v547
        %v549 = vand.u32 %v548, 4294901760
        %v550 = vsub.f32 %v548, %v549
        %v551 = vand.u32 %v550, 4294901760
        %552 = vmatpush1.msra.mxu0 %v551
        %553 = vmatprep.subr.mxu0 0.0
        %v554 = vand.u32 %v334, 4294901760
        %v555 = vsub.f32 %v334, %v554
        %v556 = vand.u32 %v555, 4294901760
        %v557 = vsub.f32 %v555, %v556
        %v558 = vand.u32 %v557, 4294901760
        %559 = vmatpush1.msra.mxu0 %v558
        %560 = vmatprep.subr.mxu0 0.0
        %v561 = vand.u32 %v335, 4294901760
        %v562 = vsub.f32 %v335, %v561
        %v563 = vand.u32 %v562, 4294901760
        %v564 = vsub.f32 %v562, %v563
        %v565 = vand.u32 %v564, 4294901760
        %566 = vmatpush1.msra.mxu0 %v565
        %567 = vmatprep.subr.mxu0 0.0
        %v568 = vand.u32 %v336, 4294901760
        %v569 = vsub.f32 %v336, %v568
        %v570 = vand.u32 %v569, 4294901760
        %v571 = vsub.f32 %v569, %v570
        %v572 = vand.u32 %v571, 4294901760
        %573 = vmatpush1.msra.mxu0 %v572
        %574 = vmatprep.subr.mxu0 0.0
        %v575 = vand.u32 %v337, 4294901760
        %v576 = vsub.f32 %v337, %v575
        %v577 = vand.u32 %v576, 4294901760
        %v578 = vsub.f32 %v576, %v577
        %v579 = vand.u32 %v578, 4294901760
        %580 = vmatpush1.msra.mxu0 %v579
        %581 = vmatprep.subr.mxu0 0.0
        %v582 = vand.u32 %v338, 4294901760
        %v583 = vsub.f32 %v338, %v582
        %v584 = vand.u32 %v583, 4294901760
        %v585 = vsub.f32 %v583, %v584
        %v586 = vand.u32 %v585, 4294901760
        %587 = vmatpush1.msra.mxu0 %v586
        %588 = vmatprep.subr.mxu0 0.0
        %v589 = vand.u32 %v339, 4294901760
        %v590 = vsub.f32 %v339, %v589
        %v591 = vand.u32 %v590, 4294901760
        %v592 = vsub.f32 %v590, %v591
        %v593 = vand.u32 %v592, 4294901760
        %594 = vmatpush1.msra.mxu0 %v593
        %595 = vmatprep.subr.mxu0 0.0
        %v596 = vand.u32 %v340, 4294901760
        %v597 = vsub.f32 %v340, %v596
        %v598 = vand.u32 %v597, 4294901760
        %v599 = vsub.f32 %v597, %v598
        %v600 = vand.u32 %v599, 4294901760
        %601 = vmatpush1.msra.mxu0 %v600
        %602 = vmatprep.subr.mxu0 0.0
        %v603 = vand.u32 %v341, 4294901760
        %v604 = vsub.f32 %v341, %v603
        %v605 = vand.u32 %v604, 4294901760
        %v606 = vsub.f32 %v604, %v605
        %v607 = vand.u32 %v606, 4294901760
        %608 = vmatpush1.msra.mxu0 %v607
        %609 = vmatprep.subr.mxu0 0.0
        %v610 = vand.u32 %v342, 4294901760
        %v611 = vsub.f32 %v342, %v610
        %v612 = vand.u32 %v611, 4294901760
        %v613 = vsub.f32 %v611, %v612
        %v614 = vand.u32 %v613, 4294901760
        %615 = vmatpush1.msra.mxu0 %v614
        %616 = vmatprep.subr.mxu0 0.0
        %v617 = vand.u32 %v343, 4294901760
        %v618 = vsub.f32 %v343, %v617
        %v619 = vand.u32 %v618, 4294901760
        %v620 = vsub.f32 %v618, %v619
        %v621 = vand.u32 %v620, 4294901760
        %622 = vmatpush1.msra.mxu0 %v621
        %623 = vmatprep.subr.mxu0 0.0
        %v624 = vand.u32 %v344, 4294901760
        %v625 = vsub.f32 %v344, %v624
        %v626 = vand.u32 %v625, 4294901760
        %v627 = vsub.f32 %v625, %v626
        %v628 = vand.u32 %v627, 4294901760
        %629 = vmatpush1.msra.mxu0 %v628
        %630 = vmatprep.subr.mxu0 0.0
        %v631 = vand.u32 %v345, 4294901760
        %v632 = vsub.f32 %v345, %v631
        %v633 = vand.u32 %v632, 4294901760
        %v634 = vsub.f32 %v632, %v633
        %v635 = vand.u32 %v634, 4294901760
        %636 = vmatpush1.msra.mxu0 %v635
        %637 = vmatprep.subr.mxu0 0.0
        %v638 = vand.u32 %v346, 4294901760
        %v639 = vsub.f32 %v346, %v638
        %v640 = vand.u32 %v639, 4294901760
        %v641 = vsub.f32 %v639, %v640
        %v642 = vand.u32 %v641, 4294901760
        %643 = vmatpush1.msra.mxu0 %v642
        %644 = vmatprep.subr.mxu0 0.0
        %v645 = vand.u32 %v347, 4294901760
        %v646 = vsub.f32 %v347, %v645
        %v647 = vand.u32 %v646, 4294901760
        %v648 = vsub.f32 %v646, %v647
        %v649 = vand.u32 %v648, 4294901760
        %650 = vmatpush1.msra.mxu0 %v649
        %651 = vmatprep.subr.mxu0 0.0
        %v652 = vand.u32 %v348, 4294901760
        %v653 = vsub.f32 %v348, %v652
        %v654 = vand.u32 %v653, 4294901760
        %v655 = vsub.f32 %v653, %v654
        %v656 = vand.u32 %v655, 4294901760
        %657 = vmatpush1.msra.mxu0 %v656
        %658 = vmatprep.subr.mxu0 0.0
        %v659 = vand.u32 %v349, 4294901760
        %v660 = vsub.f32 %v349, %v659
        %v661 = vand.u32 %v660, 4294901760
        %v662 = vsub.f32 %v660, %v661
        %v663 = vand.u32 %v662, 4294901760
        %664 = vmatpush1.msra.mxu0 %v663
        %665 = vmatprep.subr.mxu0 0.0
        %v666 = vand.u32 %v350, 4294901760
        %v667 = vsub.f32 %v350, %v666
        %v668 = vand.u32 %v667, 4294901760
        %v669 = vsub.f32 %v667, %v668
        %v670 = vand.u32 %v669, 4294901760
        %671 = vmatpush1.msra.mxu0 %v670
        %672 = vmatprep.subr.mxu0 0.0
        %v673 = vand.u32 %v351, 4294901760
        %v674 = vsub.f32 %v351, %v673
        %v675 = vand.u32 %v674, 4294901760
        %v676 = vsub.f32 %v674, %v675
        %v677 = vand.u32 %v676, 4294901760
        %678 = vmatpush1.msra.mxu0 %v677
        %679 = vmatprep.subr.mxu0 0.0
        %v680 = vand.u32 %v352, 4294901760
        %v681 = vsub.f32 %v352, %v680
        %v682 = vand.u32 %v681, 4294901760
        %v683 = vsub.f32 %v681, %v682
        %v684 = vand.u32 %v683, 4294901760
        %685 = vmatpush1.msra.mxu0 %v684
        %686 = vmatprep.subr.mxu0 0.0
        %v687 = vand.u32 %v353, 4294901760
        %v688 = vsub.f32 %v353, %v687
        %v689 = vand.u32 %v688, 4294901760
        %v690 = vsub.f32 %v688, %v689
        %v691 = vand.u32 %v690, 4294901760
        %692 = vmatpush1.msra.mxu0 %v691
        %v693 = vand.u32 %v355, 4294901760
        %694 = vmatprep.mubr.f32.mxu0 %v693
        %v695 = vand.u32 %v321, 4294901760
        %696 = vmatmul.mubr.f32.gmra.mrb[0].mxu0 %v695
        %v697 = vpop.f32.mrb[0].mxu0
        %v698 = vadd.f32 %v466, %v697
        %v699 = vpop.f32.mrb[0].mxu0
        %700 = vdwg.mxu0
        %701 = vmatprep.subr.mxu0 0.0
        %v702 = vand.u32 %v322, 4294901760
        %v703 = vsub.f32 %v322, %v702
        %704 = vmatpush1.msra.mxu0 %v703
        %705 = vmatprep.subr.mxu0 0.0
        %v706 = vand.u32 %v323, 4294901760
        %v707 = vsub.f32 %v323, %v706
        %708 = vmatpush1.msra.mxu0 %v707
        %709 = vmatprep.subr.mxu0 0.0
        %v710 = vand.u32 %v324, 4294901760
        %v711 = vsub.f32 %v324, %v710
        %712 = vmatpush1.msra.mxu0 %v711
        %713 = vmatprep.subr.mxu0 0.0
        %v714 = vand.u32 %v325, 4294901760
        %v715 = vsub.f32 %v325, %v714
        %716 = vmatpush1.msra.mxu0 %v715
        %717 = vmatprep.subr.mxu0 0.0
        %v718 = vand.u32 %v326, 4294901760
        %v719 = vsub.f32 %v326, %v718
        %720 = vmatpush1.msra.mxu0 %v719
        %721 = vmatprep.subr.mxu0 0.0
        %v722 = vand.u32 %v327, 4294901760
        %v723 = vsub.f32 %v327, %v722
        %724 = vmatpush1.msra.mxu0 %v723
        %725 = vmatprep.subr.mxu0 0.0
        %v726 = vand.u32 %v328, 4294901760
        %v727 = vsub.f32 %v328, %v726
        %728 = vmatpush1.msra.mxu0 %v727
        %729 = vmatprep.subr.mxu0 0.0
        %v730 = vand.u32 %v329, 4294901760
        %v731 = vsub.f32 %v329, %v730
        %732 = vmatpush1.msra.mxu0 %v731
        %733 = vmatprep.subr.mxu0 0.0
        %v734 = vand.u32 %v330, 4294901760
        %v735 = vsub.f32 %v330, %v734
        %736 = vmatpush1.msra.mxu0 %v735
        %737 = vmatprep.subr.mxu0 0.0
        %v738 = vand.u32 %v331, 4294901760
        %v739 = vsub.f32 %v331, %v738
        %740 = vmatpush1.msra.mxu0 %v739
        %741 = vmatprep.subr.mxu0 0.0
        %v742 = vand.u32 %v332, 4294901760
        %v743 = vsub.f32 %v332, %v742
        %744 = vmatpush1.msra.mxu0 %v743
        %745 = vmatprep.subr.mxu0 0.0
        %v746 = vand.u32 %v333, 4294901760
        %v747 = vsub.f32 %v333, %v746
        %748 = vmatpush1.msra.mxu0 %v747
        %749 = vmatprep.subr.mxu0 0.0
        %v750 = vand.u32 %v334, 4294901760
        %v751 = vsub.f32 %v334, %v750
        %752 = vmatpush1.msra.mxu0 %v751
        %753 = vmatprep.subr.mxu0 0.0
        %v754 = vand.u32 %v335, 4294901760
        %v755 = vsub.f32 %v335, %v754
        %756 = vmatpush1.msra.mxu0 %v755
        %757 = vmatprep.subr.mxu0 0.0
        %v758 = vand.u32 %v336, 4294901760
        %v759 = vsub.f32 %v336, %v758
        %760 = vmatpush1.msra.mxu0 %v759
        %761 = vmatprep.subr.mxu0 0.0
        %v762 = vand.u32 %v337, 4294901760
        %v763 = vsub.f32 %v337, %v762
        %764 = vmatpush1.msra.mxu0 %v763
        %765 = vmatprep.subr.mxu0 0.0
        %v766 = vand.u32 %v338, 4294901760
        %v767 = vsub.f32 %v338, %v766
        %768 = vmatpush1.msra.mxu0 %v767
        %769 = vmatprep.subr.mxu0 0.0
        %v770 = vand.u32 %v339, 4294901760
        %v771 = vsub.f32 %v339, %v770
        %772 = vmatpush1.msra.mxu0 %v771
        %773 = vmatprep.subr.mxu0 0.0
        %v774 = vand.u32 %v340, 4294901760
        %v775 = vsub.f32 %v340, %v774
        %776 = vmatpush1.msra.mxu0 %v775
        %777 = vmatprep.subr.mxu0 0.0
        %v778 = vand.u32 %v341, 4294901760
        %v779 = vsub.f32 %v341, %v778
        %780 = vmatpush1.msra.mxu0 %v779
        %781 = vmatprep.subr.mxu0 0.0
        %v782 = vand.u32 %v342, 4294901760
        %v783 = vsub.f32 %v342, %v782
        %784 = vmatpush1.msra.mxu0 %v783
        %785 = vmatprep.subr.mxu0 0.0
        %v786 = vand.u32 %v343, 4294901760
        %v787 = vsub.f32 %v343, %v786
        %788 = vmatpush1.msra.mxu0 %v787
        %789 = vmatprep.subr.mxu0 0.0
        %v790 = vand.u32 %v344, 4294901760
        %v791 = vsub.f32 %v344, %v790
        %792 = vmatpush1.msra.mxu0 %v791
        %793 = vmatprep.subr.mxu0 0.0
        %v794 = vand.u32 %v345, 4294901760
        %v795 = vsub.f32 %v345, %v794
        %796 = vmatpush1.msra.mxu0 %v795
        %797 = vmatprep.subr.mxu0 0.0
        %v798 = vand.u32 %v346, 4294901760
        %v799 = vsub.f32 %v346, %v798
        %800 = vmatpush1.msra.mxu0 %v799
        %801 = vmatprep.subr.mxu0 0.0
        %v802 = vand.u32 %v347, 4294901760
        %v803 = vsub.f32 %v347, %v802
        %804 = vmatpush1.msra.mxu0 %v803
        %805 = vmatprep.subr.mxu0 0.0
        %v806 = vand.u32 %v348, 4294901760
        %v807 = vsub.f32 %v348, %v806
        %808 = vmatpush1.msra.mxu0 %v807
        %809 = vmatprep.subr.mxu0 0.0
        %v810 = vand.u32 %v349, 4294901760
        %v811 = vsub.f32 %v349, %v810
        %812 = vmatpush1.msra.mxu0 %v811
        %813 = vmatprep.subr.mxu0 0.0
        %v814 = vand.u32 %v350, 4294901760
        %v815 = vsub.f32 %v350, %v814
        %816 = vmatpush1.msra.mxu0 %v815
        %817 = vmatprep.subr.mxu0 0.0
        %v818 = vand.u32 %v351, 4294901760
        %v819 = vsub.f32 %v351, %v818
        %820 = vmatpush1.msra.mxu0 %v819
        %821 = vmatprep.subr.mxu0 0.0
        %v822 = vand.u32 %v352, 4294901760
        %v823 = vsub.f32 %v352, %v822
        %824 = vmatpush1.msra.mxu0 %v823
        %825 = vmatprep.subr.mxu0 0.0
        %v826 = vand.u32 %v353, 4294901760
        %v827 = vsub.f32 %v353, %v826
        %828 = vmatpush1.msra.mxu0 %v827
        %v829 = vand.u32 %v355, 4294901760
        %v830 = vsub.f32 %v355, %v829
        %831 = vmatprep.mubr.f32.mxu0 %v830
        %v832 = vand.u32 %v321, 4294901760
        %v833 = vsub.f32 %v321, %v832
        %834 = vmatmul.mubr.f32.gmra.mrb[0].mxu0 %v833
        %v835 = vpop.f32.mrb[0].mxu0
        %v836 = vadd.f32 %v698, %v835
        %v837 = vpop.f32.mrb[0].mxu0
        %838 = vdwg.mxu0
        %839 = vmatprep.subr.mxu0 0.0
        %v840 = vand.u32 %v322, 4294901760
        %841 = vmatpush1.msra.mxu0 %v840
        %842 = vmatprep.subr.mxu0 0.0
        %v843 = vand.u32 %v323, 4294901760
        %844 = vmatpush1.msra.mxu0 %v843
        %845 = vmatprep.subr.mxu0 0.0
        %v846 = vand.u32 %v324, 4294901760
        %847 = vmatpush1.msra.mxu0 %v846
        %848 = vmatprep.subr.mxu0 0.0
        %v849 = vand.u32 %v325, 4294901760
        %850 = vmatpush1.msra.mxu0 %v849
        %851 = vmatprep.subr.mxu0 0.0
        %v852 = vand.u32 %v326, 4294901760
        %853 = vmatpush1.msra.mxu0 %v852
        %854 = vmatprep.subr.mxu0 0.0
        %v855 = vand.u32 %v327, 4294901760
        %856 = vmatpush1.msra.mxu0 %v855
        %857 = vmatprep.subr.mxu0 0.0
        %v858 = vand.u32 %v328, 4294901760
        %859 = vmatpush1.msra.mxu0 %v858
        %860 = vmatprep.subr.mxu0 0.0
        %v861 = vand.u32 %v329, 4294901760
        %862 = vmatpush1.msra.mxu0 %v861
        %863 = vmatprep.subr.mxu0 0.0
        %v864 = vand.u32 %v330, 4294901760
        %865 = vmatpush1.msra.mxu0 %v864
        %866 = vmatprep.subr.mxu0 0.0
        %v867 = vand.u32 %v331, 4294901760
        %868 = vmatpush1.msra.mxu0 %v867
        %869 = vmatprep.subr.mxu0 0.0
        %v870 = vand.u32 %v332, 4294901760
        %871 = vmatpush1.msra.mxu0 %v870
        %872 = vmatprep.subr.mxu0 0.0
        %v873 = vand.u32 %v333, 4294901760
        %874 = vmatpush1.msra.mxu0 %v873
        %875 = vmatprep.subr.mxu0 0.0
        %v876 = vand.u32 %v334, 4294901760
        %877 = vmatpush1.msra.mxu0 %v876
        %878 = vmatprep.subr.mxu0 0.0
        %v879 = vand.u32 %v335, 4294901760
        %880 = vmatpush1.msra.mxu0 %v879
        %881 = vmatprep.subr.mxu0 0.0
        %v882 = vand.u32 %v336, 4294901760
        %883 = vmatpush1.msra.mxu0 %v882
        %884 = vmatprep.subr.mxu0 0.0
        %v885 = vand.u32 %v337, 4294901760
        %886 = vmatpush1.msra.mxu0 %v885
        %887 = vmatprep.subr.mxu0 0.0
        %v888 = vand.u32 %v338, 4294901760
        %889 = vmatpush1.msra.mxu0 %v888
        %890 = vmatprep.subr.mxu0 0.0
        %v891 = vand.u32 %v339, 4294901760
        %892 = vmatpush1.msra.mxu0 %v891
        %893 = vmatprep.subr.mxu0 0.0
        %v894 = vand.u32 %v340, 4294901760
        %895 = vmatpush1.msra.mxu0 %v894
        %896 = vmatprep.subr.mxu0 0.0
        %v897 = vand.u32 %v341, 4294901760
        %898 = vmatpush1.msra.mxu0 %v897
        %899 = vmatprep.subr.mxu0 0.0
        %v900 = vand.u32 %v342, 4294901760
        %901 = vmatpush1.msra.mxu0 %v900
        %902 = vmatprep.subr.mxu0 0.0
        %v903 = vand.u32 %v343, 4294901760
        %904 = vmatpush1.msra.mxu0 %v903
        %905 = vmatprep.subr.mxu0 0.0
        %v906 = vand.u32 %v344, 4294901760
        %907 = vmatpush1.msra.mxu0 %v906
        %908 = vmatprep.subr.mxu0 0.0
        %v909 = vand.u32 %v345, 4294901760
        %910 = vmatpush1.msra.mxu0 %v909
        %911 = vmatprep.subr.mxu0 0.0
        %v912 = vand.u32 %v346, 4294901760
        %913 = vmatpush1.msra.mxu0 %v912
        %914 = vmatprep.subr.mxu0 0.0
        %v915 = vand.u32 %v347, 4294901760
        %916 = vmatpush1.msra.mxu0 %v915
        %917 = vmatprep.subr.mxu0 0.0
        %v918 = vand.u32 %v348, 4294901760
        %919 = vmatpush1.msra.mxu0 %v918
        %920 = vmatprep.subr.mxu0 0.0
        %v921 = vand.u32 %v349, 4294901760
        %922 = vmatpush1.msra.mxu0 %v921
        %923 = vmatprep.subr.mxu0 0.0
        %v924 = vand.u32 %v350, 4294901760
        %925 = vmatpush1.msra.mxu0 %v924
        %926 = vmatprep.subr.mxu0 0.0
        %v927 = vand.u32 %v351, 4294901760
        %928 = vmatpush1.msra.mxu0 %v927
        %929 = vmatprep.subr.mxu0 0.0
        %v930 = vand.u32 %v352, 4294901760
        %931 = vmatpush1.msra.mxu0 %v930
        %932 = vmatprep.subr.mxu0 0.0
        %v933 = vand.u32 %v353, 4294901760
        %934 = vmatpush1.msra.mxu0 %v933
        %v935 = vand.u32 %v355, 4294901760
        %v936 = vsub.f32 %v355, %v935
        %v937 = vand.u32 %v936, 4294901760
        %938 = vmatprep.mubr.f32.mxu0 %v937
        %v939 = vand.u32 %v321, 4294901760
        %v940 = vsub.f32 %v321, %v939
        %v941 = vand.u32 %v940, 4294901760
        %942 = vmatmul.mubr.f32.gmra.mrb[0].mxu0 %v941
        %v943 = vpop.f32.mrb[0].mxu0
        %v944 = vadd.f32 %v836, %v943
        %v945 = vpop.f32.mrb[0].mxu0
        %946 = vdwg.mxu0
        %947 = vmatprep.subr.mxu0 0.0
        %v948 = vand.u32 %v322, 4294901760
        %v949 = vsub.f32 %v322, %v948
        %v950 = vand.u32 %v949, 4294901760
        %951 = vmatpush1.msra.mxu0 %v950
        %952 = vmatprep.subr.mxu0 0.0
        %v953 = vand.u32 %v323, 4294901760
        %v954 = vsub.f32 %v323, %v953
        %v955 = vand.u32 %v954, 4294901760
        %956 = vmatpush1.msra.mxu0 %v955
        %957 = vmatprep.subr.mxu0 0.0
        %v958 = vand.u32 %v324, 4294901760
        %v959 = vsub.f32 %v324, %v958
        %v960 = vand.u32 %v959, 4294901760
        %961 = vmatpush1.msra.mxu0 %v960
        %962 = vmatprep.subr.mxu0 0.0
        %v963 = vand.u32 %v325, 4294901760
        %v964 = vsub.f32 %v325, %v963
        %v965 = vand.u32 %v964, 4294901760
        %966 = vmatpush1.msra.mxu0 %v965
        %967 = vmatprep.subr.mxu0 0.0
        %v968 = vand.u32 %v326, 4294901760
        %v969 = vsub.f32 %v326, %v968
        %v970 = vand.u32 %v969, 4294901760
        %971 = vmatpush1.msra.mxu0 %v970
        %972 = vmatprep.subr.mxu0 0.0
        %v973 = vand.u32 %v327, 4294901760
        %v974 = vsub.f32 %v327, %v973
        %v975 = vand.u32 %v974, 4294901760
        %976 = vmatpush1.msra.mxu0 %v975
        %977 = vmatprep.subr.mxu0 0.0
        %v978 = vand.u32 %v328, 4294901760
        %v979 = vsub.f32 %v328, %v978
        %v980 = vand.u32 %v979, 4294901760
        %981 = vmatpush1.msra.mxu0 %v980
        %982 = vmatprep.subr.mxu0 0.0
        %v983 = vand.u32 %v329, 4294901760
        %v984 = vsub.f32 %v329, %v983
        %v985 = vand.u32 %v984, 4294901760
        %986 = vmatpush1.msra.mxu0 %v985
        %987 = vmatprep.subr.mxu0 0.0
        %v988 = vand.u32 %v330, 4294901760
        %v989 = vsub.f32 %v330, %v988
        %v990 = vand.u32 %v989, 4294901760
        %991 = vmatpush1.msra.mxu0 %v990
        %992 = vmatprep.subr.mxu0 0.0
        %v993 = vand.u32 %v331, 4294901760
        %v994 = vsub.f32 %v331, %v993
        %v995 = vand.u32 %v994, 4294901760
        %996 = vmatpush1.msra.mxu0 %v995
        %997 = vmatprep.subr.mxu0 0.0
        %v998 = vand.u32 %v332, 4294901760
        %v999 = vsub.f32 %v332, %v998
        %v1000 = vand.u32 %v999, 4294901760
        %1001 = vmatpush1.msra.mxu0 %v1000
        %1002 = vmatprep.subr.mxu0 0.0
        %v1003 = vand.u32 %v333, 4294901760
        %v1004 = vsub.f32 %v333, %v1003
        %v1005 = vand.u32 %v1004, 4294901760
        %1006 = vmatpush1.msra.mxu0 %v1005
        %1007 = vmatprep.subr.mxu0 0.0
        %v1008 = vand.u32 %v334, 4294901760
        %v1009 = vsub.f32 %v334, %v1008
        %v1010 = vand.u32 %v1009, 4294901760
        %1011 = vmatpush1.msra.mxu0 %v1010
        %1012 = vmatprep.subr.mxu0 0.0
        %v1013 = vand.u32 %v335, 4294901760
        %v1014 = vsub.f32 %v335, %v1013
        %v1015 = vand.u32 %v1014, 4294901760
        %1016 = vmatpush1.msra.mxu0 %v1015
        %1017 = vmatprep.subr.mxu0 0.0
        %v1018 = vand.u32 %v336, 4294901760
        %v1019 = vsub.f32 %v336, %v1018
        %v1020 = vand.u32 %v1019, 4294901760
        %1021 = vmatpush1.msra.mxu0 %v1020
        %1022 = vmatprep.subr.mxu0 0.0
        %v1023 = vand.u32 %v337, 4294901760
        %v1024 = vsub.f32 %v337, %v1023
        %v1025 = vand.u32 %v1024, 4294901760
        %1026 = vmatpush1.msra.mxu0 %v1025
        %1027 = vmatprep.subr.mxu0 0.0
        %v1028 = vand.u32 %v338, 4294901760
        %v1029 = vsub.f32 %v338, %v1028
        %v1030 = vand.u32 %v1029, 4294901760
        %1031 = vmatpush1.msra.mxu0 %v1030
        %1032 = vmatprep.subr.mxu0 0.0
        %v1033 = vand.u32 %v339, 4294901760
        %v1034 = vsub.f32 %v339, %v1033
        %v1035 = vand.u32 %v1034, 4294901760
        %1036 = vmatpush1.msra.mxu0 %v1035
        %1037 = vmatprep.subr.mxu0 0.0
        %v1038 = vand.u32 %v340, 4294901760
        %v1039 = vsub.f32 %v340, %v1038
        %v1040 = vand.u32 %v1039, 4294901760
        %1041 = vmatpush1.msra.mxu0 %v1040
        %1042 = vmatprep.subr.mxu0 0.0
        %v1043 = vand.u32 %v341, 4294901760
        %v1044 = vsub.f32 %v341, %v1043
        %v1045 = vand.u32 %v1044, 4294901760
        %1046 = vmatpush1.msra.mxu0 %v1045
        %1047 = vmatprep.subr.mxu0 0.0
        %v1048 = vand.u32 %v342, 4294901760
        %v1049 = vsub.f32 %v342, %v1048
        %v1050 = vand.u32 %v1049, 4294901760
        %1051 = vmatpush1.msra.mxu0 %v1050
        %1052 = vmatprep.subr.mxu0 0.0
        %v1053 = vand.u32 %v343, 4294901760
        %v1054 = vsub.f32 %v343, %v1053
        %v1055 = vand.u32 %v1054, 4294901760
        %1056 = vmatpush1.msra.mxu0 %v1055
        %1057 = vmatprep.subr.mxu0 0.0
        %v1058 = vand.u32 %v344, 4294901760
        %v1059 = vsub.f32 %v344, %v1058
        %v1060 = vand.u32 %v1059, 4294901760
        %1061 = vmatpush1.msra.mxu0 %v1060
        %1062 = vmatprep.subr.mxu0 0.0
        %v1063 = vand.u32 %v345, 4294901760
        %v1064 = vsub.f32 %v345, %v1063
        %v1065 = vand.u32 %v1064, 4294901760
        %1066 = vmatpush1.msra.mxu0 %v1065
        %1067 = vmatprep.subr.mxu0 0.0
        %v1068 = vand.u32 %v346, 4294901760
        %v1069 = vsub.f32 %v346, %v1068
        %v1070 = vand.u32 %v1069, 4294901760
        %1071 = vmatpush1.msra.mxu0 %v1070
        %1072 = vmatprep.subr.mxu0 0.0
        %v1073 = vand.u32 %v347, 4294901760
        %v1074 = vsub.f32 %v347, %v1073
        %v1075 = vand.u32 %v1074, 4294901760
        %1076 = vmatpush1.msra.mxu0 %v1075
        %1077 = vmatprep.subr.mxu0 0.0
        %v1078 = vand.u32 %v348, 4294901760
        %v1079 = vsub.f32 %v348, %v1078
        %v1080 = vand.u32 %v1079, 4294901760
        %1081 = vmatpush1.msra.mxu0 %v1080
        %1082 = vmatprep.subr.mxu0 0.0
        %v1083 = vand.u32 %v349, 4294901760
        %v1084 = vsub.f32 %v349, %v1083
        %v1085 = vand.u32 %v1084, 4294901760
        %1086 = vmatpush1.msra.mxu0 %v1085
        %1087 = vmatprep.subr.mxu0 0.0
        %v1088 = vand.u32 %v350, 4294901760
        %v1089 = vsub.f32 %v350, %v1088
        %v1090 = vand.u32 %v1089, 4294901760
        %1091 = vmatpush1.msra.mxu0 %v1090
        %1092 = vmatprep.subr.mxu0 0.0
        %v1093 = vand.u32 %v351, 4294901760
        %v1094 = vsub.f32 %v351, %v1093
        %v1095 = vand.u32 %v1094, 4294901760
        %1096 = vmatpush1.msra.mxu0 %v1095
        %1097 = vmatprep.subr.mxu0 0.0
        %v1098 = vand.u32 %v352, 4294901760
        %v1099 = vsub.f32 %v352, %v1098
        %v1100 = vand.u32 %v1099, 4294901760
        %1101 = vmatpush1.msra.mxu0 %v1100
        %1102 = vmatprep.subr.mxu0 0.0
        %v1103 = vand.u32 %v353, 4294901760
        %v1104 = vsub.f32 %v353, %v1103
        %v1105 = vand.u32 %v1104, 4294901760
        %1106 = vmatpush1.msra.mxu0 %v1105
        %v1107 = vand.u32 %v355, 4294901760
        %1108 = vmatprep.mubr.f32.mxu0 %v1107
        %v1109 = vand.u32 %v321, 4294901760
        %1110 = vmatmul.mubr.f32.gmra.mrb[0].mxu0 %v1109
        %v1111 = vpop.f32.mrb[0].mxu0
        %v1112 = vadd.f32 %v944, %v1111
        %v1113 = vpop.f32.mrb[0].mxu0
        %1114 = vdwg.mxu0
        %1115 = vmatprep.subr.mxu0 0.0
        %v1116 = vand.u32 %v322, 4294901760
        %1117 = vmatpush1.msra.mxu0 %v1116
        %1118 = vmatprep.subr.mxu0 0.0
        %v1119 = vand.u32 %v323, 4294901760
        %1120 = vmatpush1.msra.mxu0 %v1119
        %1121 = vmatprep.subr.mxu0 0.0
        %v1122 = vand.u32 %v324, 4294901760
        %1123 = vmatpush1.msra.mxu0 %v1122
        %1124 = vmatprep.subr.mxu0 0.0
        %v1125 = vand.u32 %v325, 4294901760
        %1126 = vmatpush1.msra.mxu0 %v1125
        %1127 = vmatprep.subr.mxu0 0.0
        %v1128 = vand.u32 %v326, 4294901760
        %1129 = vmatpush1.msra.mxu0 %v1128
        %1130 = vmatprep.subr.mxu0 0.0
        %v1131 = vand.u32 %v327, 4294901760
        %1132 = vmatpush1.msra.mxu0 %v1131
        %1133 = vmatprep.subr.mxu0 0.0
        %v1134 = vand.u32 %v328, 4294901760
        %1135 = vmatpush1.msra.mxu0 %v1134
        %1136 = vmatprep.subr.mxu0 0.0
        %v1137 = vand.u32 %v329, 4294901760
        %1138 = vmatpush1.msra.mxu0 %v1137
        %1139 = vmatprep.subr.mxu0 0.0
        %v1140 = vand.u32 %v330, 4294901760
        %1141 = vmatpush1.msra.mxu0 %v1140
        %1142 = vmatprep.subr.mxu0 0.0
        %v1143 = vand.u32 %v331, 4294901760
        %1144 = vmatpush1.msra.mxu0 %v1143
        %1145 = vmatprep.subr.mxu0 0.0
        %v1146 = vand.u32 %v332, 4294901760
        %1147 = vmatpush1.msra.mxu0 %v1146
        %1148 = vmatprep.subr.mxu0 0.0
        %v1149 = vand.u32 %v333, 4294901760
        %1150 = vmatpush1.msra.mxu0 %v1149
        %1151 = vmatprep.subr.mxu0 0.0
        %v1152 = vand.u32 %v334, 4294901760
        %1153 = vmatpush1.msra.mxu0 %v1152
        %1154 = vmatprep.subr.mxu0 0.0
        %v1155 = vand.u32 %v335, 4294901760
        %1156 = vmatpush1.msra.mxu0 %v1155
        %1157 = vmatprep.subr.mxu0 0.0
        %v1158 = vand.u32 %v336, 4294901760
        %1159 = vmatpush1.msra.mxu0 %v1158
        %1160 = vmatprep.subr.mxu0 0.0
        %v1161 = vand.u32 %v337, 4294901760
        %1162 = vmatpush1.msra.mxu0 %v1161
        %1163 = vmatprep.subr.mxu0 0.0
        %v1164 = vand.u32 %v338, 4294901760
        %1165 = vmatpush1.msra.mxu0 %v1164
        %1166 = vmatprep.subr.mxu0 0.0
        %v1167 = vand.u32 %v339, 4294901760
        %1168 = vmatpush1.msra.mxu0 %v1167
        %1169 = vmatprep.subr.mxu0 0.0
        %v1170 = vand.u32 %v340, 4294901760
        %1171 = vmatpush1.msra.mxu0 %v1170
        %1172 = vmatprep.subr.mxu0 0.0
        %v1173 = vand.u32 %v341, 4294901760
        %1174 = vmatpush1.msra.mxu0 %v1173
        %1175 = vmatprep.subr.mxu0 0.0
        %v1176 = vand.u32 %v342, 4294901760
        %1177 = vmatpush1.msra.mxu0 %v1176
        %1178 = vmatprep.subr.mxu0 0.0
        %v1179 = vand.u32 %v343, 4294901760
        %1180 = vmatpush1.msra.mxu0 %v1179
        %1181 = vmatprep.subr.mxu0 0.0
        %v1182 = vand.u32 %v344, 4294901760
        %1183 = vmatpush1.msra.mxu0 %v1182
        %1184 = vmatprep.subr.mxu0 0.0
        %v1185 = vand.u32 %v345, 4294901760
        %1186 = vmatpush1.msra.mxu0 %v1185
        %1187 = vmatprep.subr.mxu0 0.0
        %v1188 = vand.u32 %v346, 4294901760
        %1189 = vmatpush1.msra.mxu0 %v1188
        %1190 = vmatprep.subr.mxu0 0.0
        %v1191 = vand.u32 %v347, 4294901760
        %1192 = vmatpush1.msra.mxu0 %v1191
        %1193 = vmatprep.subr.mxu0 0.0
        %v1194 = vand.u32 %v348, 4294901760
        %1195 = vmatpush1.msra.mxu0 %v1194
        %1196 = vmatprep.subr.mxu0 0.0
        %v1197 = vand.u32 %v349, 4294901760
        %1198 = vmatpush1.msra.mxu0 %v1197
        %1199 = vmatprep.subr.mxu0 0.0
        %v1200 = vand.u32 %v350, 4294901760
        %1201 = vmatpush1.msra.mxu0 %v1200
        %1202 = vmatprep.subr.mxu0 0.0
        %v1203 = vand.u32 %v351, 4294901760
        %1204 = vmatpush1.msra.mxu0 %v1203
        %1205 = vmatprep.subr.mxu0 0.0
        %v1206 = vand.u32 %v352, 4294901760
        %1207 = vmatpush1.msra.mxu0 %v1206
        %1208 = vmatprep.subr.mxu0 0.0
        %v1209 = vand.u32 %v353, 4294901760
        %1210 = vmatpush1.msra.mxu0 %v1209
        %v1211 = vand.u32 %v355, 4294901760
        %1212 = vmatprep.mubr.f32.mxu0 %v1211
        %v1213 = vand.u32 %v321, 4294901760
        %1214 = vmatmul.mubr.f32.gmra.mrb[0].mxu0 %v1213
        %v1215 = vpop.f32.mrb[0].mxu0
        %v1216 = vadd.f32 %v1112, %v1215
        %v1217 = vpop.f32.mrb[0].mxu0
        %1218 = vdwg.mxu0
        %1220 = vrot.lane.b32.xlu0 %v1216, 64
        %v1221 = vpop.permute.xlu0 %1220
        %v1223 = vsub.f32 %v1216, %v1221
        %vm1224 = vcmask 519168
        %v1225 = vsel %vm1224, %v1216, 0.0
        %1226 = vadd.xlane.f32.xlu0 %v1225
        %v1227 = vpop.xlane.xlu0 %1226
        %v1228 = vmul.f32 %v1227, 0.015625
        %v1229 = vld [vmem:[%s2] sm:$0x3]
        %v1230 = vld [vmem:[%s3] sm:$0x3]
        %vm1231 = vcmask 31744
        %v1233 = vsel %vm1231, %v1229, 0
        %vm1235 = vcmask 1043456
        %v1237 = vsel %vm1235, %v1228, 0
        %1239 = vmatprep.subr.mxu0 0.0
        %v1240 = vand.u32 %v1237, 4294901760
        %1241 = vmatpush1.msra.mxu0 %v1240
        %1242 = vmatprep.subr.mxu0 0.0
        %1243 = vmatpush1.msra.mxu0 0.0
        %1244 = vmatprep.subr.mxu0 0.0
        %1245 = vmatpush1.msra.mxu0 0.0
        %1246 = vmatprep.subr.mxu0 0.0
        %1247 = vmatpush1.msra.mxu0 0.0
        %1248 = vmatprep.subr.mxu0 0.0
        %1249 = vmatpush1.msra.mxu0 0.0
        %1250 = vmatprep.subr.mxu0 0.0
        %1251 = vmatpush1.msra.mxu0 0.0
        %1252 = vmatprep.subr.mxu0 0.0
        %1253 = vmatpush1.msra.mxu0 0.0
        %1254 = vmatprep.subr.mxu0 0.0
        %1255 = vmatpush1.msra.mxu0 0.0
        %1256 = vmatprep.subr.mxu0 0.0
        %1257 = vmatpush1.msra.mxu0 0.0
        %1258 = vmatprep.subr.mxu0 0.0
        %1259 = vmatpush1.msra.mxu0 0.0
        %1260 = vmatprep.subr.mxu0 0.0
        %1261 = vmatpush1.msra.mxu0 0.0
        %1262 = vmatprep.subr.mxu0 0.0
        %1263 = vmatpush1.msra.mxu0 0.0
        %1264 = vmatprep.subr.mxu0 0.0
        %1265 = vmatpush1.msra.mxu0 0.0
        %1266 = vmatprep.subr.mxu0 0.0
        %1267 = vmatpush1.msra.mxu0 0.0
        %1268 = vmatprep.subr.mxu0 0.0
        %1269 = vmatpush1.msra.mxu0 0.0
        %1270 = vmatprep.subr.mxu0 0.0
        %1271 = vmatpush1.msra.mxu0 0.0
        %1272 = vmatprep.subr.mxu0 0.0
        %1273 = vmatpush1.msra.mxu0 0.0
        %1274 = vmatprep.subr.mxu0 0.0
        %1275 = vmatpush1.msra.mxu0 0.0
        %1276 = vmatprep.subr.mxu0 0.0
        %1277 = vmatpush1.msra.mxu0 0.0
        %1278 = vmatprep.subr.mxu0 0.0
        %1279 = vmatpush1.msra.mxu0 0.0
        %1280 = vmatprep.subr.mxu0 0.0
        %1281 = vmatpush1.msra.mxu0 0.0
        %1282 = vmatprep.subr.mxu0 0.0
        %1283 = vmatpush1.msra.mxu0 0.0
        %1284 = vmatprep.subr.mxu0 0.0
        %1285 = vmatpush1.msra.mxu0 0.0
        %1286 = vmatprep.subr.mxu0 0.0
        %1287 = vmatpush1.msra.mxu0 0.0
        %1288 = vmatprep.subr.mxu0 0.0
        %1289 = vmatpush1.msra.mxu0 0.0
        %1290 = vmatprep.subr.mxu0 0.0
        %1291 = vmatpush1.msra.mxu0 0.0
        %1292 = vmatprep.subr.mxu0 0.0
        %1293 = vmatpush1.msra.mxu0 0.0
        %1294 = vmatprep.subr.mxu0 0.0
        %1295 = vmatpush1.msra.mxu0 0.0
        %1296 = vmatprep.subr.mxu0 0.0
        %1297 = vmatpush1.msra.mxu0 0.0
        %1298 = vmatprep.subr.mxu0 0.0
        %1299 = vmatpush1.msra.mxu0 0.0
        %1300 = vmatprep.subr.mxu0 0.0
        %1301 = vmatpush1.msra.mxu0 0.0
        %1302 = vmatprep.subr.mxu0 0.0
        %1303 = vmatpush1.msra.mxu0 0.0
        %1304 = vmatprep.mubr.f32.mxu0 0.0
        %v1305 = vand.u32 %v1233, 4294901760
        %v1306 = vsub.f32 %v1233, %v1305
        %v1307 = vand.u32 %v1306, 4294901760
        %v1308 = vsub.f32 %v1306, %v1307
        %v1309 = vand.u32 %v1308, 4294901760
        %1310 = vmatmul.mubr.f32.gmra.mrb[0].mxu0 %v1309
        %v1311 = vpop.f32.mrb[0].mxu0
        %v1312 = vadd.f32 %v1230, %v1311
        %v1313 = vpop.f32.mrb[0].mxu0
        %1314 = vdwg.mxu0
        %1315 = vmatprep.subr.mxu0 0.0
        %v1316 = vand.u32 %v1237, 4294901760
        %v1317 = vsub.f32 %v1237, %v1316
        %v1318 = vand.u32 %v1317, 4294901760
        %v1319 = vsub.f32 %v1317, %v1318
        %v1320 = vand.u32 %v1319, 4294901760
        %1321 = vmatpush1.msra.mxu0 %v1320
        %1322 = vmatprep.subr.mxu0 0.0
        %1323 = vmatpush1.msra.mxu0 0.0
        %1324 = vmatprep.subr.mxu0 0.0
        %1325 = vmatpush1.msra.mxu0 0.0
        %1326 = vmatprep.subr.mxu0 0.0
        %1327 = vmatpush1.msra.mxu0 0.0
        %1328 = vmatprep.subr.mxu0 0.0
        %1329 = vmatpush1.msra.mxu0 0.0
        %1330 = vmatprep.subr.mxu0 0.0
        %1331 = vmatpush1.msra.mxu0 0.0
        %1332 = vmatprep.subr.mxu0 0.0
        %1333 = vmatpush1.msra.mxu0 0.0
        %1334 = vmatprep.subr.mxu0 0.0
        %1335 = vmatpush1.msra.mxu0 0.0
        %1336 = vmatprep.subr.mxu0 0.0
        %1337 = vmatpush1.msra.mxu0 0.0
        %1338 = vmatprep.subr.mxu0 0.0
        %1339 = vmatpush1.msra.mxu0 0.0
        %1340 = vmatprep.subr.mxu0 0.0
        %1341 = vmatpush1.msra.mxu0 0.0
        %1342 = vmatprep.subr.mxu0 0.0
        %1343 = vmatpush1.msra.mxu0 0.0
        %1344 = vmatprep.subr.mxu0 0.0
        %1345 = vmatpush1.msra.mxu0 0.0
        %1346 = vmatprep.subr.mxu0 0.0
        %1347 = vmatpush1.msra.mxu0 0.0
        %1348 = vmatprep.subr.mxu0 0.0
        %1349 = vmatpush1.msra.mxu0 0.0
        %1350 = vmatprep.subr.mxu0 0.0
        %1351 = vmatpush1.msra.mxu0 0.0
        %1352 = vmatprep.subr.mxu0 0.0
        %1353 = vmatpush1.msra.mxu0 0.0
        %1354 = vmatprep.subr.mxu0 0.0
        %1355 = vmatpush1.msra.mxu0 0.0
        %1356 = vmatprep.subr.mxu0 0.0
        %1357 = vmatpush1.msra.mxu0 0.0
        %1358 = vmatprep.subr.mxu0 0.0
        %1359 = vmatpush1.msra.mxu0 0.0
        %1360 = vmatprep.subr.mxu0 0.0
        %1361 = vmatpush1.msra.mxu0 0.0
        %1362 = vmatprep.subr.mxu0 0.0
        %1363 = vmatpush1.msra.mxu0 0.0
        %1364 = vmatprep.subr.mxu0 0.0
        %1365 = vmatpush1.msra.mxu0 0.0
        %1366 = vmatprep.subr.mxu0 0.0
        %1367 = vmatpush1.msra.mxu0 0.0
        %1368 = vmatprep.subr.mxu0 0.0
        %1369 = vmatpush1.msra.mxu0 0.0
        %1370 = vmatprep.subr.mxu0 0.0
        %1371 = vmatpush1.msra.mxu0 0.0
        %1372 = vmatprep.subr.mxu0 0.0
        %1373 = vmatpush1.msra.mxu0 0.0
        %1374 = vmatprep.subr.mxu0 0.0
        %1375 = vmatpush1.msra.mxu0 0.0
        %1376 = vmatprep.subr.mxu0 0.0
        %1377 = vmatpush1.msra.mxu0 0.0
        %1378 = vmatprep.subr.mxu0 0.0
        %1379 = vmatpush1.msra.mxu0 0.0
        %1380 = vmatprep.subr.mxu0 0.0
        %1381 = vmatpush1.msra.mxu0 0.0
        %1382 = vmatprep.subr.mxu0 0.0
        %1383 = vmatpush1.msra.mxu0 0.0
        %1384 = vmatprep.mubr.f32.mxu0 0.0
        %v1385 = vand.u32 %v1233, 4294901760
        %1386 = vmatmul.mubr.f32.gmra.mrb[0].mxu0 %v1385
        %v1387 = vpop.f32.mrb[0].mxu0
        %v1388 = vadd.f32 %v1312, %v1387
        %v1389 = vpop.f32.mrb[0].mxu0
        %1390 = vdwg.mxu0
        %1391 = vmatprep.subr.mxu0 0.0
        %v1392 = vand.u32 %v1237, 4294901760
        %v1393 = vsub.f32 %v1237, %v1392
        %1394 = vmatpush1.msra.mxu0 %v1393
        %1395 = vmatprep.subr.mxu0 0.0
        %1396 = vmatpush1.msra.mxu0 0.0
        %1397 = vmatprep.subr.mxu0 0.0
        %1398 = vmatpush1.msra.mxu0 0.0
        %1399 = vmatprep.subr.mxu0 0.0
        %1400 = vmatpush1.msra.mxu0 0.0
        %1401 = vmatprep.subr.mxu0 0.0
        %1402 = vmatpush1.msra.mxu0 0.0
        %1403 = vmatprep.subr.mxu0 0.0
        %1404 = vmatpush1.msra.mxu0 0.0
        %1405 = vmatprep.subr.mxu0 0.0
        %1406 = vmatpush1.msra.mxu0 0.0
        %1407 = vmatprep.subr.mxu0 0.0
        %1408 = vmatpush1.msra.mxu0 0.0
        %1409 = vmatprep.subr.mxu0 0.0
        %1410 = vmatpush1.msra.mxu0 0.0
        %1411 = vmatprep.subr.mxu0 0.0
        %1412 = vmatpush1.msra.mxu0 0.0
        %1413 = vmatprep.subr.mxu0 0.0
        %1414 = vmatpush1.msra.mxu0 0.0
        %1415 = vmatprep.subr.mxu0 0.0
        %1416 = vmatpush1.msra.mxu0 0.0
        %1417 = vmatprep.subr.mxu0 0.0
        %1418 = vmatpush1.msra.mxu0 0.0
        %1419 = vmatprep.subr.mxu0 0.0
        %1420 = vmatpush1.msra.mxu0 0.0
        %1421 = vmatprep.subr.mxu0 0.0
        %1422 = vmatpush1.msra.mxu0 0.0
        %1423 = vmatprep.subr.mxu0 0.0
        %1424 = vmatpush1.msra.mxu0 0.0
        %1425 = vmatprep.subr.mxu0 0.0
        %1426 = vmatpush1.msra.mxu0 0.0
        %1427 = vmatprep.subr.mxu0 0.0
        %1428 = vmatpush1.msra.mxu0 0.0
        %1429 = vmatprep.subr.mxu0 0.0
        %1430 = vmatpush1.msra.mxu0 0.0
        %1431 = vmatprep.subr.mxu0 0.0
        %1432 = vmatpush1.msra.mxu0 0.0
        %1433 = vmatprep.subr.mxu0 0.0
        %1434 = vmatpush1.msra.mxu0 0.0
        %1435 = vmatprep.subr.mxu0 0.0
        %1436 = vmatpush1.msra.mxu0 0.0
        %1437 = vmatprep.subr.mxu0 0.0
        %1438 = vmatpush1.msra.mxu0 0.0
        %1439 = vmatprep.subr.mxu0 0.0
        %1440 = vmatpush1.msra.mxu0 0.0
        %1441 = vmatprep.subr.mxu0 0.0
        %1442 = vmatpush1.msra.mxu0 0.0
        %1443 = vmatprep.subr.mxu0 0.0
        %1444 = vmatpush1.msra.mxu0 0.0
        %1445 = vmatprep.subr.mxu0 0.0
        %1446 = vmatpush1.msra.mxu0 0.0
        %1447 = vmatprep.subr.mxu0 0.0
        %1448 = vmatpush1.msra.mxu0 0.0
        %1449 = vmatprep.subr.mxu0 0.0
        %1450 = vmatpush1.msra.mxu0 0.0
        %1451 = vmatprep.subr.mxu0 0.0
        %1452 = vmatpush1.msra.mxu0 0.0
        %1453 = vmatprep.subr.mxu0 0.0
        %1454 = vmatpush1.msra.mxu0 0.0
        %1455 = vmatprep.subr.mxu0 0.0
        %1456 = vmatpush1.msra.mxu0 0.0
        %1457 = vmatprep.mubr.f32.mxu0 0.0
        %v1458 = vand.u32 %v1233, 4294901760
        %v1459 = vsub.f32 %v1233, %v1458
        %1460 = vmatmul.mubr.f32.gmra.mrb[0].mxu0 %v1459
        %v1461 = vpop.f32.mrb[0].mxu0
        %v1462 = vadd.f32 %v1388, %v1461
        %v1463 = vpop.f32.mrb[0].mxu0
        %1464 = vdwg.mxu0
        %1465 = vmatprep.subr.mxu0 0.0
        %v1466 = vand.u32 %v1237, 4294901760
        %1467 = vmatpush1.msra.mxu0 %v1466
        %1468 = vmatprep.subr.mxu0 0.0
        %1469 = vmatpush1.msra.mxu0 0.0
        %1470 = vmatprep.subr.mxu0 0.0
        %1471 = vmatpush1.msra.mxu0 0.0
        %1472 = vmatprep.subr.mxu0 0.0
        %1473 = vmatpush1.msra.mxu0 0.0
        %1474 = vmatprep.subr.mxu0 0.0
        %1475 = vmatpush1.msra.mxu0 0.0
        %1476 = vmatprep.subr.mxu0 0.0
        %1477 = vmatpush1.msra.mxu0 0.0
        %1478 = vmatprep.subr.mxu0 0.0
        %1479 = vmatpush1.msra.mxu0 0.0
        %1480 = vmatprep.subr.mxu0 0.0
        %1481 = vmatpush1.msra.mxu0 0.0
        %1482 = vmatprep.subr.mxu0 0.0
        %1483 = vmatpush1.msra.mxu0 0.0
        %1484 = vmatprep.subr.mxu0 0.0
        %1485 = vmatpush1.msra.mxu0 0.0
        %1486 = vmatprep.subr.mxu0 0.0
        %1487 = vmatpush1.msra.mxu0 0.0
        %1488 = vmatprep.subr.mxu0 0.0
        %1489 = vmatpush1.msra.mxu0 0.0
        %1490 = vmatprep.subr.mxu0 0.0
        %1491 = vmatpush1.msra.mxu0 0.0
        %1492 = vmatprep.subr.mxu0 0.0
        %1493 = vmatpush1.msra.mxu0 0.0
        %1494 = vmatprep.subr.mxu0 0.0
        %1495 = vmatpush1.msra.mxu0 0.0
        %1496 = vmatprep.subr.mxu0 0.0
        %1497 = vmatpush1.msra.mxu0 0.0
        %1498 = vmatprep.subr.mxu0 0.0
        %1499 = vmatpush1.msra.mxu0 0.0
        %1500 = vmatprep.subr.mxu0 0.0
        %1501 = vmatpush1.msra.mxu0 0.0
        %1502 = vmatprep.subr.mxu0 0.0
        %1503 = vmatpush1.msra.mxu0 0.0
        %1504 = vmatprep.subr.mxu0 0.0
        %1505 = vmatpush1.msra.mxu0 0.0
        %1506 = vmatprep.subr.mxu0 0.0
        %1507 = vmatpush1.msra.mxu0 0.0
        %1508 = vmatprep.subr.mxu0 0.0
        %1509 = vmatpush1.msra.mxu0 0.0
        %1510 = vmatprep.subr.mxu0 0.0
        %1511 = vmatpush1.msra.mxu0 0.0
        %1512 = vmatprep.subr.mxu0 0.0
        %1513 = vmatpush1.msra.mxu0 0.0
        %1514 = vmatprep.subr.mxu0 0.0
        %1515 = vmatpush1.msra.mxu0 0.0
        %1516 = vmatprep.subr.mxu0 0.0
        %1517 = vmatpush1.msra.mxu0 0.0
        %1518 = vmatprep.subr.mxu0 0.0
        %1519 = vmatpush1.msra.mxu0 0.0
        %1520 = vmatprep.subr.mxu0 0.0
        %1521 = vmatpush1.msra.mxu0 0.0
        %1522 = vmatprep.subr.mxu0 0.0
        %1523 = vmatpush1.msra.mxu0 0.0
        %1524 = vmatprep.subr.mxu0 0.0
        %1525 = vmatpush1.msra.mxu0 0.0
        %1526 = vmatprep.subr.mxu0 0.0
        %1527 = vmatpush1.msra.mxu0 0.0
        %1528 = vmatprep.subr.mxu0 0.0
        %1529 = vmatpush1.msra.mxu0 0.0
        %1530 = vmatprep.mubr.f32.mxu0 0.0
        %v1531 = vand.u32 %v1233, 4294901760
        %v1532 = vsub.f32 %v1233, %v1531
        %v1533 = vand.u32 %v1532, 4294901760
        %1534 = vmatmul.mubr.f32.gmra.mrb[0].mxu0 %v1533
        %v1535 = vpop.f32.mrb[0].mxu0
        %v1536 = vadd.f32 %v1462, %v1535
        %v1537 = vpop.f32.mrb[0].mxu0
        %1538 = vdwg.mxu0
        %1539 = vmatprep.subr.mxu0 0.0
        %v1540 = vand.u32 %v1237, 4294901760
        %v1541 = vsub.f32 %v1237, %v1540
        %v1542 = vand.u32 %v1541, 4294901760
        %1543 = vmatpush1.msra.mxu0 %v1542
        %1544 = vmatprep.subr.mxu0 0.0
        %1545 = vmatpush1.msra.mxu0 0.0
        %1546 = vmatprep.subr.mxu0 0.0
        %1547 = vmatpush1.msra.mxu0 0.0
        %1548 = vmatprep.subr.mxu0 0.0
        %1549 = vmatpush1.msra.mxu0 0.0
        %1550 = vmatprep.subr.mxu0 0.0
        %1551 = vmatpush1.msra.mxu0 0.0
        %1552 = vmatprep.subr.mxu0 0.0
        %1553 = vmatpush1.msra.mxu0 0.0
        %1554 = vmatprep.subr.mxu0 0.0
        %1555 = vmatpush1.msra.mxu0 0.0
        %1556 = vmatprep.subr.mxu0 0.0
        %1557 = vmatpush1.msra.mxu0 0.0
        %1558 = vmatprep.subr.mxu0 0.0
        %1559 = vmatpush1.msra.mxu0 0.0
        %1560 = vmatprep.subr.mxu0 0.0
        %1561 = vmatpush1.msra.mxu0 0.0
        %1562 = vmatprep.subr.mxu0 0.0
        %1563 = vmatpush1.msra.mxu0 0.0
        %1564 = vmatprep.subr.mxu0 0.0
        %1565 = vmatpush1.msra.mxu0 0.0
        %1566 = vmatprep.subr.mxu0 0.0
        %1567 = vmatpush1.msra.mxu0 0.0
        %1568 = vmatprep.subr.mxu0 0.0
        %1569 = vmatpush1.msra.mxu0 0.0
        %1570 = vmatprep.subr.mxu0 0.0
        %1571 = vmatpush1.msra.mxu0 0.0
        %1572 = vmatprep.subr.mxu0 0.0
        %1573 = vmatpush1.msra.mxu0 0.0
        %1574 = vmatprep.subr.mxu0 0.0
        %1575 = vmatpush1.msra.mxu0 0.0
        %1576 = vmatprep.subr.mxu0 0.0
        %1577 = vmatpush1.msra.mxu0 0.0
        %1578 = vmatprep.subr.mxu0 0.0
        %1579 = vmatpush1.msra.mxu0 0.0
        %1580 = vmatprep.subr.mxu0 0.0
        %1581 = vmatpush1.msra.mxu0 0.0
        %1582 = vmatprep.subr.mxu0 0.0
        %1583 = vmatpush1.msra.mxu0 0.0
        %1584 = vmatprep.subr.mxu0 0.0
        %1585 = vmatpush1.msra.mxu0 0.0
        %1586 = vmatprep.subr.mxu0 0.0
        %1587 = vmatpush1.msra.mxu0 0.0
        %1588 = vmatprep.subr.mxu0 0.0
        %1589 = vmatpush1.msra.mxu0 0.0
        %1590 = vmatprep.subr.mxu0 0.0
        %1591 = vmatpush1.msra.mxu0 0.0
        %1592 = vmatprep.subr.mxu0 0.0
        %1593 = vmatpush1.msra.mxu0 0.0
        %1594 = vmatprep.subr.mxu0 0.0
        %1595 = vmatpush1.msra.mxu0 0.0
        %1596 = vmatprep.subr.mxu0 0.0
        %1597 = vmatpush1.msra.mxu0 0.0
        %1598 = vmatprep.subr.mxu0 0.0
        %1599 = vmatpush1.msra.mxu0 0.0
        %1600 = vmatprep.subr.mxu0 0.0
        %1601 = vmatpush1.msra.mxu0 0.0
        %1602 = vmatprep.subr.mxu0 0.0
        %1603 = vmatpush1.msra.mxu0 0.0
        %1604 = vmatprep.subr.mxu0 0.0
        %1605 = vmatpush1.msra.mxu0 0.0
        %1606 = vmatprep.mubr.f32.mxu0 0.0
        %v1607 = vand.u32 %v1233, 4294901760
        %1608 = vmatmul.mubr.f32.gmra.mrb[0].mxu0 %v1607
        %v1609 = vpop.f32.mrb[0].mxu0
        %v1610 = vadd.f32 %v1536, %v1609
        %v1611 = vpop.f32.mrb[0].mxu0
        %1612 = vdwg.mxu0
        %1613 = vmatprep.subr.mxu0 0.0
        %v1614 = vand.u32 %v1237, 4294901760
        %1615 = vmatpush1.msra.mxu0 %v1614
        %1616 = vmatprep.subr.mxu0 0.0
        %1617 = vmatpush1.msra.mxu0 0.0
        %1618 = vmatprep.subr.mxu0 0.0
        %1619 = vmatpush1.msra.mxu0 0.0
        %1620 = vmatprep.subr.mxu0 0.0
        %1621 = vmatpush1.msra.mxu0 0.0
        %1622 = vmatprep.subr.mxu0 0.0
        %1623 = vmatpush1.msra.mxu0 0.0
        %1624 = vmatprep.subr.mxu0 0.0
        %1625 = vmatpush1.msra.mxu0 0.0
        %1626 = vmatprep.subr.mxu0 0.0
        %1627 = vmatpush1.msra.mxu0 0.0
        %1628 = vmatprep.subr.mxu0 0.0
        %1629 = vmatpush1.msra.mxu0 0.0
        %1630 = vmatprep.subr.mxu0 0.0
        %1631 = vmatpush1.msra.mxu0 0.0
        %1632 = vmatprep.subr.mxu0 0.0
        %1633 = vmatpush1.msra.mxu0 0.0
        %1634 = vmatprep.subr.mxu0 0.0
        %1635 = vmatpush1.msra.mxu0 0.0
        %1636 = vmatprep.subr.mxu0 0.0
        %1637 = vmatpush1.msra.mxu0 0.0
        %1638 = vmatprep.subr.mxu0 0.0
        %1639 = vmatpush1.msra.mxu0 0.0
        %1640 = vmatprep.subr.mxu0 0.0
        %1641 = vmatpush1.msra.mxu0 0.0
        %1642 = vmatprep.subr.mxu0 0.0
        %1643 = vmatpush1.msra.mxu0 0.0
        %1644 = vmatprep.subr.mxu0 0.0
        %1645 = vmatpush1.msra.mxu0 0.0
        %1646 = vmatprep.subr.mxu0 0.0
        %1647 = vmatpush1.msra.mxu0 0.0
        %1648 = vmatprep.subr.mxu0 0.0
        %1649 = vmatpush1.msra.mxu0 0.0
        %1650 = vmatprep.subr.mxu0 0.0
        %1651 = vmatpush1.msra.mxu0 0.0
        %1652 = vmatprep.subr.mxu0 0.0
        %1653 = vmatpush1.msra.mxu0 0.0
        %1654 = vmatprep.subr.mxu0 0.0
        %1655 = vmatpush1.msra.mxu0 0.0
        %1656 = vmatprep.subr.mxu0 0.0
        %1657 = vmatpush1.msra.mxu0 0.0
        %1658 = vmatprep.subr.mxu0 0.0
        %1659 = vmatpush1.msra.mxu0 0.0
        %1660 = vmatprep.subr.mxu0 0.0
        %1661 = vmatpush1.msra.mxu0 0.0
        %1662 = vmatprep.subr.mxu0 0.0
        %1663 = vmatpush1.msra.mxu0 0.0
        %1664 = vmatprep.subr.mxu0 0.0
        %1665 = vmatpush1.msra.mxu0 0.0
        %1666 = vmatprep.subr.mxu0 0.0
        %1667 = vmatpush1.msra.mxu0 0.0
        %1668 = vmatprep.subr.mxu0 0.0
        %1669 = vmatpush1.msra.mxu0 0.0
        %1670 = vmatprep.subr.mxu0 0.0
        %1671 = vmatpush1.msra.mxu0 0.0
        %1672 = vmatprep.subr.mxu0 0.0
        %1673 = vmatpush1.msra.mxu0 0.0
        %1674 = vmatprep.subr.mxu0 0.0
        %1675 = vmatpush1.msra.mxu0 0.0
        %1676 = vmatprep.subr.mxu0 0.0
        %1677 = vmatpush1.msra.mxu0 0.0
        %1678 = vmatprep.mubr.f32.mxu0 0.0
        %v1679 = vand.u32 %v1233, 4294901760
        %1680 = vmatmul.mubr.f32.gmra.mrb[0].mxu0 %v1679
        %v1681 = vpop.f32.mrb[0].mxu0
        %v1682 = vadd.f32 %v1610, %v1681
        %v1683 = vpop.f32.mrb[0].mxu0
        %1684 = vdwg.mxu0
        %v1685 = vmax.f32 %v1682, 0.0
        %v1686 = vld [vmem:[%s4] sm:$0xf]
        %v1687 = vld [vmem:[%s5] sm:$0xf]
        %vm1688 = vcmask 15360
        %v1690 = vsel %vm1688, %v1686, 0
        %vm1692 = vcmask 1041408
        %v1694 = vsel %vm1692, %v1685, 0
        %1696 = vmatprep.subr.mxu0 0.0
        %v1697 = vand.u32 %v1694, 4294901760
        %1698 = vmatpush1.msra.mxu0 %v1697
        %1699 = vmatprep.subr.mxu0 0.0
        %1700 = vmatpush1.msra.mxu0 0.0
        %1701 = vmatprep.subr.mxu0 0.0
        %1702 = vmatpush1.msra.mxu0 0.0
        %1703 = vmatprep.subr.mxu0 0.0
        %1704 = vmatpush1.msra.mxu0 0.0
        %1705 = vmatprep.subr.mxu0 0.0
        %1706 = vmatpush1.msra.mxu0 0.0
        %1707 = vmatprep.subr.mxu0 0.0
        %1708 = vmatpush1.msra.mxu0 0.0
        %1709 = vmatprep.subr.mxu0 0.0
        %1710 = vmatpush1.msra.mxu0 0.0
        %1711 = vmatprep.subr.mxu0 0.0
        %1712 = vmatpush1.msra.mxu0 0.0
        %1713 = vmatprep.subr.mxu0 0.0
        %1714 = vmatpush1.msra.mxu0 0.0
        %1715 = vmatprep.subr.mxu0 0.0
        %1716 = vmatpush1.msra.mxu0 0.0
        %1717 = vmatprep.subr.mxu0 0.0
        %1718 = vmatpush1.msra.mxu0 0.0
        %1719 = vmatprep.subr.mxu0 0.0
        %1720 = vmatpush1.msra.mxu0 0.0
        %1721 = vmatprep.subr.mxu0 0.0
        %1722 = vmatpush1.msra.mxu0 0.0
        %1723 = vmatprep.subr.mxu0 0.0
        %1724 = vmatpush1.msra.mxu0 0.0
        %1725 = vmatprep.subr.mxu0 0.0
        %1726 = vmatpush1.msra.mxu0 0.0
        %1727 = vmatprep.subr.mxu0 0.0
        %1728 = vmatpush1.msra.mxu0 0.0
        %1729 = vmatprep.subr.mxu0 0.0
        %1730 = vmatpush1.msra.mxu0 0.0
        %1731 = vmatprep.subr.mxu0 0.0
        %1732 = vmatpush1.msra.mxu0 0.0
        %1733 = vmatprep.subr.mxu0 0.0
        %1734 = vmatpush1.msra.mxu0 0.0
        %1735 = vmatprep.subr.mxu0 0.0
        %1736 = vmatpush1.msra.mxu0 0.0
        %1737 = vmatprep.subr.mxu0 0.0
        %1738 = vmatpush1.msra.mxu0 0.0
        %1739 = vmatprep.subr.mxu0 0.0
        %1740 = vmatpush1.msra.mxu0 0.0
        %1741 = vmatprep.subr.mxu0 0.0
        %1742 = vmatpush1.msra.mxu0 0.0
        %1743 = vmatprep.subr.mxu0 0.0
        %1744 = vmatpush1.msra.mxu0 0.0
        %1745 = vmatprep.subr.mxu0 0.0
        %1746 = vmatpush1.msra.mxu0 0.0
        %1747 = vmatprep.subr.mxu0 0.0
        %1748 = vmatpush1.msra.mxu0 0.0
        %1749 = vmatprep.subr.mxu0 0.0
        %1750 = vmatpush1.msra.mxu0 0.0
        %1751 = vmatprep.subr.mxu0 0.0
        %1752 = vmatpush1.msra.mxu0 0.0
        %1753 = vmatprep.subr.mxu0 0.0
        %1754 = vmatpush1.msra.mxu0 0.0
        %1755 = vmatprep.subr.mxu0 0.0
        %1756 = vmatpush1.msra.mxu0 0.0
        %1757 = vmatprep.subr.mxu0 0.0
        %1758 = vmatpush1.msra.mxu0 0.0
        %1759 = vmatprep.subr.mxu0 0.0
        %1760 = vmatpush1.msra.mxu0 0.0
        %1761 = vmatprep.mubr.f32.mxu0 0.0
        %v1762 = vand.u32 %v1690, 4294901760
        %v1763 = vsub.f32 %v1690, %v1762
        %v1764 = vand.u32 %v1763, 4294901760
        %v1765 = vsub.f32 %v1763, %v1764
        %v1766 = vand.u32 %v1765, 4294901760
        %1767 = vmatmul.mubr.f32.gmra.mrb[0].mxu0 %v1766
        %v1768 = vpop.f32.mrb[0].mxu0
        %v1769 = vadd.f32 %v1687, %v1768
        %v1770 = vpop.f32.mrb[0].mxu0
        %1771 = vdwg.mxu0
        %1772 = vmatprep.subr.mxu0 0.0
        %v1773 = vand.u32 %v1694, 4294901760
        %v1774 = vsub.f32 %v1694, %v1773
        %v1775 = vand.u32 %v1774, 4294901760
        %v1776 = vsub.f32 %v1774, %v1775
        %v1777 = vand.u32 %v1776, 4294901760
        %1778 = vmatpush1.msra.mxu0 %v1777
        %1779 = vmatprep.subr.mxu0 0.0
        %1780 = vmatpush1.msra.mxu0 0.0
        %1781 = vmatprep.subr.mxu0 0.0
        %1782 = vmatpush1.msra.mxu0 0.0
        %1783 = vmatprep.subr.mxu0 0.0
        %1784 = vmatpush1.msra.mxu0 0.0
        %1785 = vmatprep.subr.mxu0 0.0
        %1786 = vmatpush1.msra.mxu0 0.0
        %1787 = vmatprep.subr.mxu0 0.0
        %1788 = vmatpush1.msra.mxu0 0.0
        %1789 = vmatprep.subr.mxu0 0.0
        %1790 = vmatpush1.msra.mxu0 0.0
        %1791 = vmatprep.subr.mxu0 0.0
        %1792 = vmatpush1.msra.mxu0 0.0
        %1793 = vmatprep.subr.mxu0 0.0
        %1794 = vmatpush1.msra.mxu0 0.0
        %1795 = vmatprep.subr.mxu0 0.0
        %1796 = vmatpush1.msra.mxu0 0.0
        %1797 = vmatprep.subr.mxu0 0.0
        %1798 = vmatpush1.msra.mxu0 0.0
        %1799 = vmatprep.subr.mxu0 0.0
        %1800 = vmatpush1.msra.mxu0 0.0
        %1801 = vmatprep.subr.mxu0 0.0
        %1802 = vmatpush1.msra.mxu0 0.0
        %1803 = vmatprep.subr.mxu0 0.0
        %1804 = vmatpush1.msra.mxu0 0.0
        %1805 = vmatprep.subr.mxu0 0.0
        %1806 = vmatpush1.msra.mxu0 0.0
        %1807 = vmatprep.subr.mxu0 0.0
        %1808 = vmatpush1.msra.mxu0 0.0
        %1809 = vmatprep.subr.mxu0 0.0
        %1810 = vmatpush1.msra.mxu0 0.0
        %1811 = vmatprep.subr.mxu0 0.0
        %1812 = vmatpush1.msra.mxu0 0.0
        %1813 = vmatprep.subr.mxu0 0.0
        %1814 = vmatpush1.msra.mxu0 0.0
        %1815 = vmatprep.subr.mxu0 0.0
        %1816 = vmatpush1.msra.mxu0 0.0
        %1817 = vmatprep.subr.mxu0 0.0
        %1818 = vmatpush1.msra.mxu0 0.0
        %1819 = vmatprep.subr.mxu0 0.0
        %1820 = vmatpush1.msra.mxu0 0.0
        %1821 = vmatprep.subr.mxu0 0.0
        %1822 = vmatpush1.msra.mxu0 0.0
        %1823 = vmatprep.subr.mxu0 0.0
        %1824 = vmatpush1.msra.mxu0 0.0
        %1825 = vmatprep.subr.mxu0 0.0
        %1826 = vmatpush1.msra.mxu0 0.0
        %1827 = vmatprep.subr.mxu0 0.0
        %1828 = vmatpush1.msra.mxu0 0.0
        %1829 = vmatprep.subr.mxu0 0.0
        %1830 = vmatpush1.msra.mxu0 0.0
        %1831 = vmatprep.subr.mxu0 0.0
        %1832 = vmatpush1.msra.mxu0 0.0
        %1833 = vmatprep.subr.mxu0 0.0
        %1834 = vmatpush1.msra.mxu0 0.0
        %1835 = vmatprep.subr.mxu0 0.0
        %1836 = vmatpush1.msra.mxu0 0.0
        %1837 = vmatprep.subr.mxu0 0.0
        %1838 = vmatpush1.msra.mxu0 0.0
        %1839 = vmatprep.subr.mxu0 0.0
        %1840 = vmatpush1.msra.mxu0 0.0
        %1841 = vmatprep.mubr.f32.mxu0 0.0
        %v1842 = vand.u32 %v1690, 4294901760
        %1843 = vmatmul.mubr.f32.gmra.mrb[0].mxu0 %v1842
        %v1844 = vpop.f32.mrb[0].mxu0
        %v1845 = vadd.f32 %v1769, %v1844
        %v1846 = vpop.f32.mrb[0].mxu0
        %1847 = vdwg.mxu0
        %1848 = vmatprep.subr.mxu0 0.0
        %v1849 = vand.u32 %v1694, 4294901760
        %v1850 = vsub.f32 %v1694, %v1849
        %1851 = vmatpush1.msra.mxu0 %v1850
        %1852 = vmatprep.subr.mxu0 0.0
        %1853 = vmatpush1.msra.mxu0 0.0
        %1854 = vmatprep.subr.mxu0 0.0
        %1855 = vmatpush1.msra.mxu0 0.0
        %1856 = vmatprep.subr.mxu0 0.0
        %1857 = vmatpush1.msra.mxu0 0.0
        %1858 = vmatprep.subr.mxu0 0.0
        %1859 = vmatpush1.msra.mxu0 0.0
        %1860 = vmatprep.subr.mxu0 0.0
        %1861 = vmatpush1.msra.mxu0 0.0
        %1862 = vmatprep.subr.mxu0 0.0
        %1863 = vmatpush1.msra.mxu0 0.0
        %1864 = vmatprep.subr.mxu0 0.0
        %1865 = vmatpush1.msra.mxu0 0.0
        %1866 = vmatprep.subr.mxu0 0.0
        %1867 = vmatpush1.msra.mxu0 0.0
        %1868 = vmatprep.subr.mxu0 0.0
        %1869 = vmatpush1.msra.mxu0 0.0
        %1870 = vmatprep.subr.mxu0 0.0
        %1871 = vmatpush1.msra.mxu0 0.0
        %1872 = vmatprep.subr.mxu0 0.0
        %1873 = vmatpush1.msra.mxu0 0.0
        %1874 = vmatprep.subr.mxu0 0.0
        %1875 = vmatpush1.msra.mxu0 0.0
        %1876 = vmatprep.subr.mxu0 0.0
        %1877 = vmatpush1.msra.mxu0 0.0
        %1878 = vmatprep.subr.mxu0 0.0
        %1879 = vmatpush1.msra.mxu0 0.0
        %1880 = vmatprep.subr.mxu0 0.0
        %1881 = vmatpush1.msra.mxu0 0.0
        %1882 = vmatprep.subr.mxu0 0.0
        %1883 = vmatpush1.msra.mxu0 0.0
        %1884 = vmatprep.subr.mxu0 0.0
        %1885 = vmatpush1.msra.mxu0 0.0
        %1886 = vmatprep.subr.mxu0 0.0
        %1887 = vmatpush1.msra.mxu0 0.0
        %1888 = vmatprep.subr.mxu0 0.0
        %1889 = vmatpush1.msra.mxu0 0.0
        %1890 = vmatprep.subr.mxu0 0.0
        %1891 = vmatpush1.msra.mxu0 0.0
        %1892 = vmatprep.subr.mxu0 0.0
        %1893 = vmatpush1.msra.mxu0 0.0
        %1894 = vmatprep.subr.mxu0 0.0
        %1895 = vmatpush1.msra.mxu0 0.0
        %1896 = vmatprep.subr.mxu0 0.0
        %1897 = vmatpush1.msra.mxu0 0.0
        %1898 = vmatprep.subr.mxu0 0.0
        %1899 = vmatpush1.msra.mxu0 0.0
        %1900 = vmatprep.subr.mxu0 0.0
        %1901 = vmatpush1.msra.mxu0 0.0
        %1902 = vmatprep.subr.mxu0 0.0
        %1903 = vmatpush1.msra.mxu0 0.0
        %1904 = vmatprep.subr.mxu0 0.0
        %1905 = vmatpush1.msra.mxu0 0.0
        %1906 = vmatprep.subr.mxu0 0.0
        %1907 = vmatpush1.msra.mxu0 0.0
        %1908 = vmatprep.subr.mxu0 0.0
        %1909 = vmatpush1.msra.mxu0 0.0
        %1910 = vmatprep.subr.mxu0 0.0
        %1911 = vmatpush1.msra.mxu0 0.0
        %1912 = vmatprep.subr.mxu0 0.0
        %1913 = vmatpush1.msra.mxu0 0.0
        %1914 = vmatprep.mubr.f32.mxu0 0.0
        %v1915 = vand.u32 %v1690, 4294901760
        %v1916 = vsub.f32 %v1690, %v1915
        %1917 = vmatmul.mubr.f32.gmra.mrb[0].mxu0 %v1916
        %v1918 = vpop.f32.mrb[0].mxu0
        %v1919 = vadd.f32 %v1845, %v1918
        %v1920 = vpop.f32.mrb[0].mxu0
        %1921 = vdwg.mxu0
        %1922 = vmatprep.subr.mxu0 0.0
        %v1923 = vand.u32 %v1694, 4294901760
        %1924 = vmatpush1.msra.mxu0 %v1923
        %1925 = vmatprep.subr.mxu0 0.0
        %1926 = vmatpush1.msra.mxu0 0.0
        %1927 = vmatprep.subr.mxu0 0.0
        %1928 = vmatpush1.msra.mxu0 0.0
        %1929 = vmatprep.subr.mxu0 0.0
        %1930 = vmatpush1.msra.mxu0 0.0
        %1931 = vmatprep.subr.mxu0 0.0
        %1932 = vmatpush1.msra.mxu0 0.0
        %1933 = vmatprep.subr.mxu0 0.0
        %1934 = vmatpush1.msra.mxu0 0.0
        %1935 = vmatprep.subr.mxu0 0.0
        %1936 = vmatpush1.msra.mxu0 0.0
        %1937 = vmatprep.subr.mxu0 0.0
        %1938 = vmatpush1.msra.mxu0 0.0
        %1939 = vmatprep.subr.mxu0 0.0
        %1940 = vmatpush1.msra.mxu0 0.0
        %1941 = vmatprep.subr.mxu0 0.0
        %1942 = vmatpush1.msra.mxu0 0.0
        %1943 = vmatprep.subr.mxu0 0.0
        %1944 = vmatpush1.msra.mxu0 0.0
        %1945 = vmatprep.subr.mxu0 0.0
        %1946 = vmatpush1.msra.mxu0 0.0
        %1947 = vmatprep.subr.mxu0 0.0
        %1948 = vmatpush1.msra.mxu0 0.0
        %1949 = vmatprep.subr.mxu0 0.0
        %1950 = vmatpush1.msra.mxu0 0.0
        %1951 = vmatprep.subr.mxu0 0.0
        %1952 = vmatpush1.msra.mxu0 0.0
        %1953 = vmatprep.subr.mxu0 0.0
        %1954 = vmatpush1.msra.mxu0 0.0
        %1955 = vmatprep.subr.mxu0 0.0
        %1956 = vmatpush1.msra.mxu0 0.0
        %1957 = vmatprep.subr.mxu0 0.0
        %1958 = vmatpush1.msra.mxu0 0.0
        %1959 = vmatprep.subr.mxu0 0.0
        %1960 = vmatpush1.msra.mxu0 0.0
        %1961 = vmatprep.subr.mxu0 0.0
        %1962 = vmatpush1.msra.mxu0 0.0
        %1963 = vmatprep.subr.mxu0 0.0
        %1964 = vmatpush1.msra.mxu0 0.0
        %1965 = vmatprep.subr.mxu0 0.0
        %1966 = vmatpush1.msra.mxu0 0.0
        %1967 = vmatprep.subr.mxu0 0.0
        %1968 = vmatpush1.msra.mxu0 0.0
        %1969 = vmatprep.subr.mxu0 0.0
        %1970 = vmatpush1.msra.mxu0 0.0
        %1971 = vmatprep.subr.mxu0 0.0
        %1972 = vmatpush1.msra.mxu0 0.0
        %1973 = vmatprep.subr.mxu0 0.0
        %1974 = vmatpush1.msra.mxu0 0.0
        %1975 = vmatprep.subr.mxu0 0.0
        %1976 = vmatpush1.msra.mxu0 0.0
        %1977 = vmatprep.subr.mxu0 0.0
        %1978 = vmatpush1.msra.mxu0 0.0
        %1979 = vmatprep.subr.mxu0 0.0
        %1980 = vmatpush1.msra.mxu0 0.0
        %1981 = vmatprep.subr.mxu0 0.0
        %1982 = vmatpush1.msra.mxu0 0.0
        %1983 = vmatprep.subr.mxu0 0.0
        %1984 = vmatpush1.msra.mxu0 0.0
        %1985 = vmatprep.subr.mxu0 0.0
        %1986 = vmatpush1.msra.mxu0 0.0
        %1987 = vmatprep.mubr.f32.mxu0 0.0
        %v1988 = vand.u32 %v1690, 4294901760
        %v1989 = vsub.f32 %v1690, %v1988
        %v1990 = vand.u32 %v1989, 4294901760
        %1991 = vmatmul.mubr.f32.gmra.mrb[0].mxu0 %v1990
        %v1992 = vpop.f32.mrb[0].mxu0
        %v1993 = vadd.f32 %v1919, %v1992
        %v1994 = vpop.f32.mrb[0].mxu0
        %1995 = vdwg.mxu0
        %1996 = vmatprep.subr.mxu0 0.0
        %v1997 = vand.u32 %v1694, 4294901760
        %v1998 = vsub.f32 %v1694, %v1997
        %v1999 = vand.u32 %v1998, 4294901760
        %2000 = vmatpush1.msra.mxu0 %v1999
        %2001 = vmatprep.subr.mxu0 0.0
        %2002 = vmatpush1.msra.mxu0 0.0
        %2003 = vmatprep.subr.mxu0 0.0
        %2004 = vmatpush1.msra.mxu0 0.0
        %2005 = vmatprep.subr.mxu0 0.0
        %2006 = vmatpush1.msra.mxu0 0.0
        %2007 = vmatprep.subr.mxu0 0.0
        %2008 = vmatpush1.msra.mxu0 0.0
        %2009 = vmatprep.subr.mxu0 0.0
        %2010 = vmatpush1.msra.mxu0 0.0
        %2011 = vmatprep.subr.mxu0 0.0
        %2012 = vmatpush1.msra.mxu0 0.0
        %2013 = vmatprep.subr.mxu0 0.0
        %2014 = vmatpush1.msra.mxu0 0.0
        %2015 = vmatprep.subr.mxu0 0.0
        %2016 = vmatpush1.msra.mxu0 0.0
        %2017 = vmatprep.subr.mxu0 0.0
        %2018 = vmatpush1.msra.mxu0 0.0
        %2019 = vmatprep.subr.mxu0 0.0
        %2020 = vmatpush1.msra.mxu0 0.0
        %2021 = vmatprep.subr.mxu0 0.0
        %2022 = vmatpush1.msra.mxu0 0.0
        %2023 = vmatprep.subr.mxu0 0.0
        %2024 = vmatpush1.msra.mxu0 0.0
        %2025 = vmatprep.subr.mxu0 0.0
        %2026 = vmatpush1.msra.mxu0 0.0
        %2027 = vmatprep.subr.mxu0 0.0
        %2028 = vmatpush1.msra.mxu0 0.0
        %2029 = vmatprep.subr.mxu0 0.0
        %2030 = vmatpush1.msra.mxu0 0.0
        %2031 = vmatprep.subr.mxu0 0.0
        %2032 = vmatpush1.msra.mxu0 0.0
        %2033 = vmatprep.subr.mxu0 0.0
        %2034 = vmatpush1.msra.mxu0 0.0
        %2035 = vmatprep.subr.mxu0 0.0
        %2036 = vmatpush1.msra.mxu0 0.0
        %2037 = vmatprep.subr.mxu0 0.0
        %2038 = vmatpush1.msra.mxu0 0.0
        %2039 = vmatprep.subr.mxu0 0.0
        %2040 = vmatpush1.msra.mxu0 0.0
        %2041 = vmatprep.subr.mxu0 0.0
        %2042 = vmatpush1.msra.mxu0 0.0
        %2043 = vmatprep.subr.mxu0 0.0
        %2044 = vmatpush1.msra.mxu0 0.0
        %2045 = vmatprep.subr.mxu0 0.0
        %2046 = vmatpush1.msra.mxu0 0.0
        %2047 = vmatprep.subr.mxu0 0.0
        %2048 = vmatpush1.msra.mxu0 0.0
        %2049 = vmatprep.subr.mxu0 0.0
        %2050 = vmatpush1.msra.mxu0 0.0
        %2051 = vmatprep.subr.mxu0 0.0
        %2052 = vmatpush1.msra.mxu0 0.0
        %2053 = vmatprep.subr.mxu0 0.0
        %2054 = vmatpush1.msra.mxu0 0.0
        %2055 = vmatprep.subr.mxu0 0.0
        %2056 = vmatpush1.msra.mxu0 0.0
        %2057 = vmatprep.subr.mxu0 0.0
        %2058 = vmatpush1.msra.mxu0 0.0
        %2059 = vmatprep.subr.mxu0 0.0
        %2060 = vmatpush1.msra.mxu0 0.0
        %2061 = vmatprep.subr.mxu0 0.0
        %2062 = vmatpush1.msra.mxu0 0.0
        %2063 = vmatprep.mubr.f32.mxu0 0.0
        %v2064 = vand.u32 %v1690, 4294901760
        %2065 = vmatmul.mubr.f32.gmra.mrb[0].mxu0 %v2064
        %v2066 = vpop.f32.mrb[0].mxu0
        %v2067 = vadd.f32 %v1993, %v2066
        %v2068 = vpop.f32.mrb[0].mxu0
        %2069 = vdwg.mxu0
        %2070 = vmatprep.subr.mxu0 0.0
        %v2071 = vand.u32 %v1694, 4294901760
        %2072 = vmatpush1.msra.mxu0 %v2071
        %2073 = vmatprep.subr.mxu0 0.0
        %2074 = vmatpush1.msra.mxu0 0.0
        %2075 = vmatprep.subr.mxu0 0.0
        %2076 = vmatpush1.msra.mxu0 0.0
        %2077 = vmatprep.subr.mxu0 0.0
        %2078 = vmatpush1.msra.mxu0 0.0
        %2079 = vmatprep.subr.mxu0 0.0
        %2080 = vmatpush1.msra.mxu0 0.0
        %2081 = vmatprep.subr.mxu0 0.0
        %2082 = vmatpush1.msra.mxu0 0.0
        %2083 = vmatprep.subr.mxu0 0.0
        %2084 = vmatpush1.msra.mxu0 0.0
        %2085 = vmatprep.subr.mxu0 0.0
        %2086 = vmatpush1.msra.mxu0 0.0
        %2087 = vmatprep.subr.mxu0 0.0
        %2088 = vmatpush1.msra.mxu0 0.0
        %2089 = vmatprep.subr.mxu0 0.0
        %2090 = vmatpush1.msra.mxu0 0.0
        %2091 = vmatprep.subr.mxu0 0.0
        %2092 = vmatpush1.msra.mxu0 0.0
        %2093 = vmatprep.subr.mxu0 0.0
        %2094 = vmatpush1.msra.mxu0 0.0
        %2095 = vmatprep.subr.mxu0 0.0
        %2096 = vmatpush1.msra.mxu0 0.0
        %2097 = vmatprep.subr.mxu0 0.0
        %2098 = vmatpush1.msra.mxu0 0.0
        %2099 = vmatprep.subr.mxu0 0.0
        %2100 = vmatpush1.msra.mxu0 0.0
        %2101 = vmatprep.subr.mxu0 0.0
        %2102 = vmatpush1.msra.mxu0 0.0
        %2103 = vmatprep.subr.mxu0 0.0
        %2104 = vmatpush1.msra.mxu0 0.0
        %2105 = vmatprep.subr.mxu0 0.0
        %2106 = vmatpush1.msra.mxu0 0.0
        %2107 = vmatprep.subr.mxu0 0.0
        %2108 = vmatpush1.msra.mxu0 0.0
        %2109 = vmatprep.subr.mxu0 0.0
        %2110 = vmatpush1.msra.mxu0 0.0
        %2111 = vmatprep.subr.mxu0 0.0
        %2112 = vmatpush1.msra.mxu0 0.0
        %2113 = vmatprep.subr.mxu0 0.0
        %2114 = vmatpush1.msra.mxu0 0.0
        %2115 = vmatprep.subr.mxu0 0.0
        %2116 = vmatpush1.msra.mxu0 0.0
        %2117 = vmatprep.subr.mxu0 0.0
        %2118 = vmatpush1.msra.mxu0 0.0
        %2119 = vmatprep.subr.mxu0 0.0
        %2120 = vmatpush1.msra.mxu0 0.0
        %2121 = vmatprep.subr.mxu0 0.0
        %2122 = vmatpush1.msra.mxu0 0.0
        %2123 = vmatprep.subr.mxu0 0.0
        %2124 = vmatpush1.msra.mxu0 0.0
        %2125 = vmatprep.subr.mxu0 0.0
        %2126 = vmatpush1.msra.mxu0 0.0
        %2127 = vmatprep.subr.mxu0 0.0
        %2128 = vmatpush1.msra.mxu0 0.0
        %2129 = vmatprep.subr.mxu0 0.0
        %2130 = vmatpush1.msra.mxu0 0.0
        %2131 = vmatprep.subr.mxu0 0.0
        %2132 = vmatpush1.msra.mxu0 0.0
        %2133 = vmatprep.subr.mxu0 0.0
        %2134 = vmatpush1.msra.mxu0 0.0
        %2135 = vmatprep.mubr.f32.mxu0 0.0
        %v2136 = vand.u32 %v1690, 4294901760
        %2137 = vmatmul.mubr.f32.gmra.mrb[0].mxu0 %v2136
        %v2138 = vpop.f32.mrb[0].mxu0
        %v2139 = vadd.f32 %v2067, %v2138
        %v2140 = vpop.f32.mrb[0].mxu0
        %2141 = vdwg.mxu0
        %2143 = vset.pattern.permute.xlu0 0
        %2144 = vperm.xlu0 %2143, %v2139
        %v2145 = vpop.permute.xlu0 %2144
        %v2147 = vadd.f32 %v2145, %v1216
        %v2148 = vxor.u32 %v2147, 2147483648
        %v2149 = vmul.f32 %v2148, 1.442695
        %v2150 = vpow.pop %v2149
        %v2151 = vadd.f32 %v2150, 1.0
        %v2152 = vrcp.pop %v2151
        %v2153 = vmul.f32 1.0, %v2152
        %2154 = vst.msk [vmem:[%s313] sm:$0xf] %vm1224, %v1221
        %v2155 = vmul.f32 %v1223, %v2153
        %2156 = vst.msk [vmem:[%s320] sm:$0xf] %vm1224, %v2155
        %s2157 = sand.u32 %s168, 1
        %s2158 = scalar_lea.sflag [#allocation4], %s2157
        %s2159 = sand.u32 %s168, 1
        %s2160 = smul.addr %s2159, 4
        %s2161 = scalar_lea.vmem [#allocation7], %s2160
        %s2162 = sand.u32 %s194, 1
        %s2163 = scalar_lea.sflag [#allocation9], %s2162
        %s2164 = sand.u32 %s194, 1
        %s2165 = smul.addr %s2164, 4
        %s2166 = scalar_lea.vmem [#allocation8], %s2165
        // Predicated region
        $region53: #{tpu_custom_call.1} parent=43 // pred_check
          %p2167 = pneg %p178
        $region54: #{tpu_custom_call.1} parent=43 // pred_check_branch
          %2169 = sbr.rel (%p2167) target = $region56
        $region55: #{tpu_custom_call.1} parent=43 // pred_region
          %s2171 = ssub.s32 64, 64
          %2172 = vsyncadd %s2158, %s2171
          %s2173 = smul.addr %s29, 64
          %s2174 = scalar_lea.hbm %s6, %s2173
          %s2176 = sshll.u32 %s2161, 4
          %s2177 = int_to_ptr.vmem [resolvable:$true] %s2176
          %2179 = dma.vmem_to_hbm [thread:$0]  %s2177, 64, %s2174, %s2158
        $region56: #{tpu_custom_call.1} parent=43 // pred_fallthru
          _
        // Predicated region
        $region57: #{tpu_custom_call.1} parent=43 // pred_check
          %p2180 = pneg %p204
        $region58: #{tpu_custom_call.1} parent=43 // pred_check_branch
          %2182 = sbr.rel (%p2180) target = $region60
        $region59: #{tpu_custom_call.1} parent=43 // pred_region
          %s2184 = ssub.s32 64, 64
          %2185 = vsyncadd %s2163, %s2184
          %s2186 = smul.addr %s29, 64
          %s2187 = scalar_lea.hbm %s7, %s2186
          %s2189 = sshll.u32 %s2166, 4
          %s2190 = int_to_ptr.vmem [resolvable:$true] %s2189
          %2192 = dma.vmem_to_hbm [thread:$0]  %s2190, 64, %s2187, %s2163
        $region60: #{tpu_custom_call.1} parent=43 // pred_fallthru
          _
      $region44: #{tpu_custom_call.1} parent=5 // pred_fallthru
        _
      %p2193 = scmp.le.s32.totalorder 2, %s24
      // Predicated region
      $region61: #{tpu_custom_call.1} parent=5 // pred_check
        %p2194 = pneg %p2193
      $region62: #{tpu_custom_call.1} parent=5 // pred_check_branch
        %2196 = sbr.rel (%p2194) target = $region64
      $region63: #{tpu_custom_call.1} parent=5 // pred_region
        %s2197 = ssub.s32 %s24, 2
        // Predicated region
        $region65: #{tpu_custom_call.1} parent=63 // pred_check
          %p2198 = pneg %p184
        $region66: #{tpu_custom_call.1} parent=63 // pred_check_branch
          %2200 = sbr.rel (%p2198) target = $region68
        $region67: #{tpu_custom_call.1} parent=63 // pred_region
          %s2201 = sand.u32 %s169, 1
          %s2202 = scalar_lea.sflag [#allocation4], %s2201
          %s2203 = sand.u32 %s169, 1
          %s2204 = smul.addr %s2203, 4
          %s2205 = scalar_lea.vmem [#allocation7], %s2204
          %2206 = dma.done %s2202, 64
        $region68: #{tpu_custom_call.1} parent=63 // pred_fallthru
          _
        // Predicated region
        $region69: #{tpu_custom_call.1} parent=63 // pred_check
          %p2207 = pneg %p210
        $region70: #{tpu_custom_call.1} parent=63 // pred_check_branch
          %2209 = sbr.rel (%p2207) target = $region72
        $region71: #{tpu_custom_call.1} parent=63 // pred_region
          %s2210 = sand.u32 %s195, 1
          %s2211 = scalar_lea.sflag [#allocation9], %s2210
          %s2212 = sand.u32 %s195, 1
          %s2213 = smul.addr %s2212, 4
          %s2214 = scalar_lea.vmem [#allocation8], %s2213
          %2215 = dma.done %s2211, 64
        $region72: #{tpu_custom_call.1} parent=63 // pred_fallthru
          _
      $region64: #{tpu_custom_call.1} parent=5 // pred_fallthru
        _
    $region6: #{tpu_custom_call.1} parent=1 // loop_footer
      %s28 = sadd.s32 1, %s24
    $region7: #{tpu_custom_call.1} parent=1 // loop_footer_branch
      %23 = sbr.rel target = $region3
    $region8: #{tpu_custom_call.1} parent=1 // loop_exit
      _
    %2216 = vsyncpa [#allocation3], 1
    %s2217 = scalar_lea.sflag [#allocation3], 1
    %2218 = vsyncpa %s2217, 1
    %2219 = vsyncpa [#allocation6], 1
    %2220 = vsyncpa [#allocation4], 1
    %s2221 = scalar_lea.sflag [#allocation4], 1
    %2222 = vsyncpa %s2221, 1
    %2223 = vsyncpa [#allocation9], 1
    %s2224 = scalar_lea.sflag [#allocation9], 1
    %2225 = vsyncpa %s2224, 1

// kernel: tpu_custom_call.1
$region0: #{tpu_custom_call.1}
  #allocation0 [shape = 'u32[]', space=smem, size = 0x4, offset = 0x4, fixed_abs, tag = 'smem constant byte address 0x4 - core index']
  #allocation1 [shape = 'u32[144,128]{1,0:T(1,128)}', space=vmem, size = 0x12000, scoped, tag = 'internal scratch']
  %s0 = inlined_call_operand.hbm [shape: f32[2,4,256], index: 0, kind: input, shape index: {}]
  %s1 = inlined_call_operand.hbm [shape: f32[256,128], index: 1, kind: input, shape index: {}]
  %s2 = inlined_call_operand.vmem [shape: f32[2,4], index: 2, kind: input, shape index: {}]
  %s3 = inlined_call_operand.vmem [shape: f32[2,1], index: 3, kind: input, shape index: {}]
  %s4 = inlined_call_operand.vmem [shape: f32[4,2], index: 4, kind: input, shape index: {}]
  %s5 = inlined_call_operand.vmem [shape: f32[4,1], index: 5, kind: input, shape index: {}]
  %s6 = inlined_call_operand.hbm [shape: f32[2,4,64], index: 6, kind: output, shape index: {0}]
  %s7 = inlined_call_operand.hbm [shape: f32[2,4,64], index: 7, kind: output, shape index: {1}]
  %8 = xla_tuple %s6, %s7
  %s9 = sld [smem:[#allocation0]]
  $region73: #{tpu_custom_call.1} parent=0
    _
  %s11 = ssub.s32 1, %s9
  %s12 = scalar_select 0, %s11, %s9
  $region1: #{tpu_custom_call.1} parent=0
    #allocation2 [shape = 'u8[8192]{0}', space=vmem, size = 0x2000, scoped, tag = 'input window, operand 0']
    #allocation3 [shape = 's32[2]{0}', space=sflag, size = 0x8, scoped, tag = 'scoped memory for tpu_custom_call.1']
    #allocation4 [shape = 's32[2]{0}', space=sflag, size = 0x8, scoped, tag = 'scoped memory for tpu_custom_call.1']
    #allocation5 [shape = 'u8[131072]{0}', space=vmem, size = 0x20000, scoped, tag = 'input window, operand 1, single buffered']
    #allocation6 [shape = 's32[1]{0}', space=sflag, size = 0x4, scoped, tag = 'scoped memory for tpu_custom_call.1']
    #allocation7 [shape = 'u8[4096]{0}', space=vmem, size = 0x1000, scoped, tag = 'output window, operand 0']
    #allocation8 [shape = 'u8[4096]{0}', space=vmem, size = 0x1000, scoped, tag = 'output window, operand 1']
    #allocation9 [shape = 's32[2]{0}', space=sflag, size = 0x8, scoped, tag = 'scoped memory for tpu_custom_call.1']
    %13 = vsyncpa [#allocation3], 0
    %s14 = scalar_lea.sflag [#allocation3], 1
    %15 = vsyncpa %s14, 0
    %16 = vsyncpa [#allocation6], 0
    %17 = vsyncpa [#allocation4], 0
    %s18 = scalar_lea.sflag [#allocation4], 1
    %19 = vsyncpa %s18, 0
    %20 = vsyncpa [#allocation9], 0
    %s21 = scalar_lea.sflag [#allocation9], 1
    %22 = vsyncpa %s21, 0
    loop: start=0, step=1, limit=4
    $region2: #{tpu_custom_call.1} parent=1 // loop_pre_header
      _
    $region3: #{tpu_custom_call.1} parent=1 // loop_header
      %s24 = sphi 0, %s28
      %p25 = scmp.ge.s32.totalorder %s24, 4
      %s34 = sphi 0, %s36
      %s37 = sphi 0, %s34
      %s38 = sphi 0, %s37
      %s54 = sphi 0, %s38
      %s58 = sphi 0, %s58
      %s60 = sphi 0, %s58
      %s61 = sphi 0, %s60
      %s75 = sphi 0, %s61
      %s79 = sphi 0, %s79
      %s81 = sphi 0, %s79
      %s82 = sphi 0, %s81
      %s96 = sphi 0, %s82
      %s100 = sphi 0, %s100
      %s102 = sphi 0, %s100
      %s103 = sphi 0, %s102
      %s117 = sphi 0, %s103
      %s121 = sphi 0, %s121
      %s123 = sphi 0, %s121
      %s124 = sphi 0, %s123
      %s138 = sphi 0, %s124
      %s142 = sphi 0, %s142
      %s144 = sphi 0, %s142
      %s145 = sphi 0, %s144
      %s159 = sphi 0, %s145
      %s165 = sphi 0, %s167
      %s168 = sphi 0, %s165
      %s169 = sphi 0, %s168
      %s185 = sphi 0, %s169
      %s191 = sphi 0, %s193
      %s194 = sphi 0, %s191
      %s195 = sphi 0, %s194
      %s211 = sphi 0, %s195
    $region4: #{tpu_custom_call.1} parent=1 // loop_header_branch
      %27 = sbr.rel (%p25) target = $region8
    $region5: #{tpu_custom_call.1} parent=1 // loop_body
      %s29 = ssub.s32 %s24, 1
      %s30 = ssub.s32 %s24, 2
      %s31 = sadd.s32 %s24, 1
      %s32 = ssub.s32 %s24, %s31
      %p33 = scmp.eq.s32.totalorder %s32, 0
      %s35 = sadd.s32 %s34, 1
      %s36 = scalar_select %p33, %s34, %s35
      %p39 = pneg %p33
      %p40 = scmp.eq.s32.totalorder %s24, 1
      %p41 = por %p39, %p40
      %p42 = scmp.ne.s32.totalorder %s34, %s37
      %p43 = scmp.eq.s32.totalorder %s24, 0
      %p44 = por %p42, %p43
      %p45 = scmp.ne.s32.totalorder %s34, %s37
      %p46 = scmp.eq.s32.totalorder %s29, 1
      %p47 = por %p45, %p46
      %p48 = scmp.ne.s32.totalorder %s37, %s38
      %p49 = scmp.eq.s32.totalorder %s29, 0
      %p50 = por %p48, %p49
      %p51 = scmp.ne.s32.totalorder %s37, %s38
      %p52 = scmp.eq.s32.totalorder %s30, 1
      %p53 = por %p51, %p52
      %p55 = scmp.ne.s32.totalorder %s38, %s54
      %p56 = scmp.eq.s32.totalorder %s30, 0
      %p57 = por %p55, %p56
      %s59 = sadd.s32 %s58, 1
      %p62 = scmp.eq.s32.totalorder %s24, 1
      %p63 = scmp.ne.s32.totalorder %s58, %s60
      %p64 = scmp.eq.s32.totalorder %s24, 0
      %p65 = por %p63, %p64
      %p66 = scmp.ne.s32.totalorder %s58, %s60
      %p67 = scmp.eq.s32.totalorder %s29, 1
      %p68 = por %p66, %p67
      %p69 = scmp.ne.s32.totalorder %s60, %s61
      %p70 = scmp.eq.s32.totalorder %s29, 0
      %p71 = por %p69, %p70
      %p72 = scmp.ne.s32.totalorder %s60, %s61
      %p73 = scmp.eq.s32.totalorder %s30, 1
      %p74 = por %p72, %p73
      %p76 = scmp.ne.s32.totalorder %s61, %s75
      %p77 = scmp.eq.s32.totalorder %s30, 0
      %p78 = por %p76, %p77
      %s80 = sadd.s32 %s79, 1
      %p83 = scmp.eq.s32.totalorder %s24, 1
      %p84 = scmp.ne.s32.totalorder %s79, %s81
      %p85 = scmp.eq.s32.totalorder %s24, 0
      %p86 = por %p84, %p85
      %p87 = scmp.ne.s32.totalorder %s79, %s81
      %p88 = scmp.eq.s32.totalorder %s29, 1
      %p89 = por %p87, %p88
      %p90 = scmp.ne.s32.totalorder %s81, %s82
      %p91 = scmp.eq.s32.totalorder %s29, 0
      %p92 = por %p90, %p91
      %p93 = scmp.ne.s32.totalorder %s81, %s82
      %p94 = scmp.eq.s32.totalorder %s30, 1
      %p95 = por %p93, %p94
      %p97 = scmp.ne.s32.totalorder %s82, %s96
      %p98 = scmp.eq.s32.totalorder %s30, 0
      %p99 = por %p97, %p98
      %s101 = sadd.s32 %s100, 1
      %p104 = scmp.eq.s32.totalorder %s24, 1
      %p105 = scmp.ne.s32.totalorder %s100, %s102
      %p106 = scmp.eq.s32.totalorder %s24, 0
      %p107 = por %p105, %p106
      %p108 = scmp.ne.s32.totalorder %s100, %s102
      %p109 = scmp.eq.s32.totalorder %s29, 1
      %p110 = por %p108, %p109
      %p111 = scmp.ne.s32.totalorder %s102, %s103
      %p112 = scmp.eq.s32.totalorder %s29, 0
      %p113 = por %p111, %p112
      %p114 = scmp.ne.s32.totalorder %s102, %s103
      %p115 = scmp.eq.s32.totalorder %s30, 1
      %p116 = por %p114, %p115
      %p118 = scmp.ne.s32.totalorder %s103, %s117
      %p119 = scmp.eq.s32.totalorder %s30, 0
      %p120 = por %p118, %p119
      %s122 = sadd.s32 %s121, 1
      %p125 = scmp.eq.s32.totalorder %s24, 1
      %p126 = scmp.ne.s32.totalorder %s121, %s123
      %p127 = scmp.eq.s32.totalorder %s24, 0
      %p128 = por %p126, %p127
      %p129 = scmp.ne.s32.totalorder %s121, %s123
      %p130 = scmp.eq.s32.totalorder %s29, 1
      %p131 = por %p129, %p130
      %p132 = scmp.ne.s32.totalorder %s123, %s124
      %p133 = scmp.eq.s32.totalorder %s29, 0
      %p134 = por %p132, %p133
      %p135 = scmp.ne.s32.totalorder %s123, %s124
      %p136 = scmp.eq.s32.totalorder %s30, 1
      %p137 = por %p135, %p136
      %p139 = scmp.ne.s32.totalorder %s124, %s138
      %p140 = scmp.eq.s32.totalorder %s30, 0
      %p141 = por %p139, %p140
      %s143 = sadd.s32 %s142, 1
      %p146 = scmp.eq.s32.totalorder %s24, 1
      %p147 = scmp.ne.s32.totalorder %s142, %s144
      %p148 = scmp.eq.s32.totalorder %s24, 0
      %p149 = por %p147, %p148
      %p150 = scmp.ne.s32.totalorder %s142, %s144
      %p151 = scmp.eq.s32.totalorder %s29, 1
      %p152 = por %p150, %p151
      %p153 = scmp.ne.s32.totalorder %s144, %s145
      %p154 = scmp.eq.s32.totalorder %s29, 0
      %p155 = por %p153, %p154
      %p156 = scmp.ne.s32.totalorder %s144, %s145
      %p157 = scmp.eq.s32.totalorder %s30, 1
      %p158 = por %p156, %p157
      %p160 = scmp.ne.s32.totalorder %s145, %s159
      %p161 = scmp.eq.s32.totalorder %s30, 0
      %p162 = por %p160, %p161
      %s163 = ssub.s32 %s24, %s31
      %p164 = scmp.eq.s32.totalorder %s163, 0
      %s166 = sadd.s32 %s165, 1
      %s167 = scalar_select %p164, %s165, %s166
      %p170 = pneg %p164
      %p171 = scmp.eq.s32.totalorder %s24, 1
      %p172 = por %p170, %p171
      %p173 = scmp.ne.s32.totalorder %s165, %s168
      %p174 = scmp.eq.s32.totalorder %s24, 0
      %p175 = por %p173, %p174
      %p176 = scmp.ne.s32.totalorder %s165, %s168
      %p177 = scmp.eq.s32.totalorder %s29, 1
      %p178 = por %p176, %p177
      %p179 = scmp.ne.s32.totalorder %s168, %s169
      %p180 = scmp.eq.s32.totalorder %s29, 0
      %p181 = por %p179, %p180
      %p182 = scmp.ne.s32.totalorder %s168, %s169
      %p183 = scmp.eq.s32.totalorder %s30, 1
      %p184 = por %p182, %p183
      %p186 = scmp.ne.s32.totalorder %s169, %s185
      %p187 = scmp.eq.s32.totalorder %s30, 0
      %p188 = por %p186, %p187
      %s189 = ssub.s32 %s24, %s31
      %p190 = scmp.eq.s32.totalorder %s189, 0
      %s192 = sadd.s32 %s191, 1
      %s193 = scalar_select %p190, %s191, %s192
      %p196 = pneg %p190
      %p197 = scmp.eq.s32.totalorder %s24, 1
      %p198 = por %p196, %p197
      %p199 = scmp.ne.s32.totalorder %s191, %s194
      %p200 = scmp.eq.s32.totalorder %s24, 0
      %p201 = por %p199, %p200
      %p202 = scmp.ne.s32.totalorder %s191, %s194
      %p203 = scmp.eq.s32.totalorder %s29, 1
      %p204 = por %p202, %p203
      %p205 = scmp.ne.s32.totalorder %s194, %s195
      %p206 = scmp.eq.s32.totalorder %s29, 0
      %p207 = por %p205, %p206
      %p208 = scmp.ne.s32.totalorder %s194, %s195
      %p209 = scmp.eq.s32.totalorder %s30, 1
      %p210 = por %p208, %p209
      %p212 = scmp.ne.s32.totalorder %s195, %s211
      %p213 = scmp.eq.s32.totalorder %s30, 0
      %p214 = por %p212, %p213
      %p215 = scmp.le.s32.totalorder 1, %s24
      %p216 = scmp.lt.s32.totalorder %s24, 3
      %p217 = pnand %p215, %p216
      %p218 = pneg %p217
      // Predicated region
      $region9: #{tpu_custom_call.1} parent=5 // pred_check
        _
      $region10: #{tpu_custom_call.1} parent=5 // pred_check_branch
        %220 = sbr.rel (%p217) target = $region12
      $region11: #{tpu_custom_call.1} parent=5 // pred_region
        %s221 = ssub.s32 %s24, 1
        // Predicated region
        $region13: #{tpu_custom_call.1} parent=11 // pred_check
          %p222 = pneg %p71
        $region14: #{tpu_custom_call.1} parent=11 // pred_check_branch
          %224 = sbr.rel (%p222) target = $region16
        $region15: #{tpu_custom_call.1} parent=11 // pred_region
          %s226 = ssub.s32 4096, 4096
          %227 = vsyncadd [#allocation6], %s226
          %s228 = sshll.u32 [#allocation5], 4
          %s229 = int_to_ptr.vmem [resolvable:$true] %s228
          %234 = dma.hbm_to_vmem [thread:$0]  %s1, 4096, %s229, [#allocation6], 128, 128, 8
        $region16: #{tpu_custom_call.1} parent=11 // pred_fallthru
          _
        // Predicated region
        $region17: #{tpu_custom_call.1} parent=11 // pred_check
          %p235 = pneg %p92
        $region18: #{tpu_custom_call.1} parent=11 // pred_check_branch
          %237 = sbr.rel (%p235) target = $region20
        $region19: #{tpu_custom_call.1} parent=11 // pred_region
          _
        $region20: #{tpu_custom_call.1} parent=11 // pred_fallthru
          _
        // Predicated region
        $region21: #{tpu_custom_call.1} parent=11 // pred_check
          %p238 = pneg %p113
        $region22: #{tpu_custom_call.1} parent=11 // pred_check_branch
          %240 = sbr.rel (%p238) target = $region24
        $region23: #{tpu_custom_call.1} parent=11 // pred_region
          _
        $region24: #{tpu_custom_call.1} parent=11 // pred_fallthru
          _
        // Predicated region
        $region25: #{tpu_custom_call.1} parent=11 // pred_check
          %p241 = pneg %p134
        $region26: #{tpu_custom_call.1} parent=11 // pred_check_branch
          %243 = sbr.rel (%p241) target = $region28
        $region27: #{tpu_custom_call.1} parent=11 // pred_region
          _
        $region28: #{tpu_custom_call.1} parent=11 // pred_fallthru
          _
        // Predicated region
        $region29: #{tpu_custom_call.1} parent=11 // pred_check
          %p244 = pneg %p155
        $region30: #{tpu_custom_call.1} parent=11 // pred_check_branch
          %246 = sbr.rel (%p244) target = $region32
        $region31: #{tpu_custom_call.1} parent=11 // pred_region
          _
        $region32: #{tpu_custom_call.1} parent=11 // pred_fallthru
          _
      $region12: #{tpu_custom_call.1} parent=5 // pred_fallthru
        _
      %p247 = scmp.lt.s32.totalorder %s24, 2
      // Predicated region
      $region33: #{tpu_custom_call.1} parent=5 // pred_check
        %p248 = pneg %p247
      $region34: #{tpu_custom_call.1} parent=5 // pred_check_branch
        %250 = sbr.rel (%p248) target = $region36
      $region35: #{tpu_custom_call.1} parent=5 // pred_region
        // Predicated region
        $region37: #{tpu_custom_call.1} parent=35 // pred_check
          %p251 = pneg %p44
        $region38: #{tpu_custom_call.1} parent=35 // pred_check_branch
          %253 = sbr.rel (%p251) target = $region40
        $region39: #{tpu_custom_call.1} parent=35 // pred_region
          %s254 = sand.u32 %s34, 1
          %s255 = scalar_lea.sflag [#allocation3], %s254
          %s256 = sand.u32 %s34, 1
          %s257 = smul.addr %s256, 8
          %s258 = scalar_lea.vmem [#allocation2], %s257
          %s260 = ssub.s32 128, 128
          %261 = vsyncadd %s255, %s260
          %s262 = smul.addr %s24, 2
          %s263 = smul.addr %s262, 64
          %s264 = scalar_lea.hbm %s0, %s263
          %s266 = sshll.u32 %s258, 4
          %s267 = int_to_ptr.vmem [resolvable:$true] %s266
          %269 = dma.hbm_to_vmem [thread:$0]  %s264, 128, %s267, %s255
        $region40: #{tpu_custom_call.1} parent=35 // pred_fallthru
          _
      $region36: #{tpu_custom_call.1} parent=5 // pred_fallthru
        _
      %p270 = scmp.le.s32.totalorder 1, %s24
      %p271 = scmp.lt.s32.totalorder %s24, 3
      %p272 = pnand %p270, %p271
      %p273 = pneg %p272
      // Predicated region
      $region41: #{tpu_custom_call.1} parent=5 // pred_check
        _
      $region42: #{tpu_custom_call.1} parent=5 // pred_check_branch
        %275 = sbr.rel (%p272) target = $region44
      $region43: #{tpu_custom_call.1} parent=5 // pred_region
        %s276 = ssub.s32 %s24, 1
        %s277 = sand.u32 %s37, 1
        %s278 = scalar_lea.sflag [#allocation3], %s277
        %s279 = sand.u32 %s37, 1
        %s280 = smul.addr %s279, 8
        %s281 = scalar_lea.vmem [#allocation2], %s280
        // Predicated region
        $region45: #{tpu_custom_call.1} parent=43 // pred_check
          %p282 = pneg %p50
        $region46: #{tpu_custom_call.1} parent=43 // pred_check_branch
          %284 = sbr.rel (%p282) target = $region48
        $region47: #{tpu_custom_call.1} parent=43 // pred_region
          %285 = dma.done %s278, 128
        $region48: #{tpu_custom_call.1} parent=43 // pred_fallthru
          _
        // Predicated region
        $region49: #{tpu_custom_call.1} parent=43 // pred_check
          %p286 = pneg %p71
        $region50: #{tpu_custom_call.1} parent=43 // pred_check_branch
          %288 = sbr.rel (%p286) target = $region52
        $region51: #{tpu_custom_call.1} parent=43 // pred_region
          %289 = dma.done [#allocation6], 4096
        $region52: #{tpu_custom_call.1} parent=43 // pred_fallthru
          _
        %s290 = sand.u32 %s37, 1
        %s291 = scalar_lea.sflag [#allocation3], %s290
        %s292 = sand.u32 %s37, 1
        %s293 = smul.addr %s292, 8
        %s294 = scalar_lea.vmem [#allocation2], %s293
        %p295 = pneg %p50
        %p296 = pneg %p47
        %p297 = pneg %p71
        %p298 = pneg %p68
        %p299 = pneg %p92
        %p300 = pneg %p89
        %p301 = pneg %p113
        %p302 = pneg %p110
        %p303 = pneg %p134
        %p304 = pneg %p131
        %p305 = pneg %p155
        %p306 = pneg %p152
        %p307 = pneg %p181
        %p308 = pneg %p178
        %s309 = sand.u32 %s168, 1
        %s310 = scalar_lea.sflag [#allocation4], %s309
        %s311 = sand.u32 %s168, 1
        %s312 = smul.addr %s311, 4
        %s313 = scalar_lea.vmem [#allocation7], %s312
        %p314 = pneg %p207
        %p315 = pneg %p204
        %s316 = sand.u32 %s194, 1
        %s317 = scalar_lea.sflag [#allocation9], %s316
        %s318 = sand.u32 %s194, 1
        %s319 = smul.addr %s318, 4
        %s320 = scalar_lea.vmem [#allocation8], %s319
        %v321 = vld [vmem:[%s281] sm:$0xff]
        %v322 = vld [vmem:[#allocation5] sm:$0xff]
        %v323 = vld [vmem:[#allocation5 + $0x8] sm:$0xff]
        %v324 = vld [vmem:[#allocation5 + $0x10] sm:$0xff]
        %v325 = vld [vmem:[#allocation5 + $0x18] sm:$0xff]
        %v326 = vld [vmem:[#allocation5 + $0x20] sm:$0xff]
        %v327 = vld [vmem:[#allocation5 + $0x28] sm:$0xff]
        %v328 = vld [vmem:[#allocation5 + $0x30] sm:$0xff]
        %v329 = vld [vmem:[#allocation5 + $0x38] sm:$0xff]
        %v330 = vld [vmem:[#allocation5 + $0x40] sm:$0xff]
        %v331 = vld [vmem:[#allocation5 + $0x48] sm:$0xff]
        %v332 = vld [vmem:[#allocation5 + $0x50] sm:$0xff]
        %v333 = vld [vmem:[#allocation5 + $0x58] sm:$0xff]
        %v334 = vld [vmem:[#allocation5 + $0x60] sm:$0xff]
        %v335 = vld [vmem:[#allocation5 + $0x68] sm:$0xff]
        %v336 = vld [vmem:[#allocation5 + $0x70] sm:$0xff]
        %v337 = vld [vmem:[#allocation5 + $0x78] sm:$0xff]
        %v338 = vld [vmem:[#allocation5 + $0x80] sm:$0xff]
        %v339 = vld [vmem:[#allocation5 + $0x88] sm:$0xff]
        %v340 = vld [vmem:[#allocation5 + $0x90] sm:$0xff]
        %v341 = vld [vmem:[#allocation5 + $0x98] sm:$0xff]
        %v342 = vld [vmem:[#allocation5 + $0xa0] sm:$0xff]
        %v343 = vld [vmem:[#allocation5 + $0xa8] sm:$0xff]
        %v344 = vld [vmem:[#allocation5 + $0xb0] sm:$0xff]
        %v345 = vld [vmem:[#allocation5 + $0xb8] sm:$0xff]
        %v346 = vld [vmem:[#allocation5 + $0xc0] sm:$0xff]
        %v347 = vld [vmem:[#allocation5 + $0xc8] sm:$0xff]
        %v348 = vld [vmem:[#allocation5 + $0xd0] sm:$0xff]
        %v349 = vld [vmem:[#allocation5 + $0xd8] sm:$0xff]
        %v350 = vld [vmem:[#allocation5 + $0xe0] sm:$0xff]
        %v351 = vld [vmem:[#allocation5 + $0xe8] sm:$0xff]
        %v352 = vld [vmem:[#allocation5 + $0xf0] sm:$0xff]
        %v353 = vld [vmem:[#allocation5 + $0xf8] sm:$0xff]
        %v355 = vcombine.high %v321, %v321
        %357 = vmatprep.subr.mxu0 0.0
        %v358 = vand.u32 %v322, 4294901760
        %359 = vmatpush1.msra.mxu0 %v358
        %360 = vmatprep.subr.mxu0 0.0
        %v361 = vand.u32 %v323, 4294901760
        %362 = vmatpush1.msra.mxu0 %v361
        %363 = vmatprep.subr.mxu0 0.0
        %v364 = vand.u32 %v324, 4294901760
        %365 = vmatpush1.msra.mxu0 %v364
        %366 = vmatprep.subr.mxu0 0.0
        %v367 = vand.u32 %v325, 4294901760
        %368 = vmatpush1.msra.mxu0 %v367
        %369 = vmatprep.subr.mxu0 0.0
        %v370 = vand.u32 %v326, 4294901760
        %371 = vmatpush1.msra.mxu0 %v370
        %372 = vmatprep.subr.mxu0 0.0
        %v373 = vand.u32 %v327, 4294901760
        %374 = vmatpush1.msra.mxu0 %v373
        %375 = vmatprep.subr.mxu0 0.0
        %v376 = vand.u32 %v328, 4294901760
        %377 = vmatpush1.msra.mxu0 %v376
        %378 = vmatprep.subr.mxu0 0.0
        %v379 = vand.u32 %v329, 4294901760
        %380 = vmatpush1.msra.mxu0 %v379
        %381 = vmatprep.subr.mxu0 0.0
        %v382 = vand.u32 %v330, 4294901760
        %383 = vmatpush1.msra.mxu0 %v382
        %384 = vmatprep.subr.mxu0 0.0
        %v385 = vand.u32 %v331, 4294901760
        %386 = vmatpush1.msra.mxu0 %v385
        %387 = vmatprep.subr.mxu0 0.0
        %v388 = vand.u32 %v332, 4294901760
        %389 = vmatpush1.msra.mxu0 %v388
        %390 = vmatprep.subr.mxu0 0.0
        %v391 = vand.u32 %v333, 4294901760
        %392 = vmatpush1.msra.mxu0 %v391
        %393 = vmatprep.subr.mxu0 0.0
        %v394 = vand.u32 %v334, 4294901760
        %395 = vmatpush1.msra.mxu0 %v394
        %396 = vmatprep.subr.mxu0 0.0
        %v397 = vand.u32 %v335, 4294901760
        %398 = vmatpush1.msra.mxu0 %v397
        %399 = vmatprep.subr.mxu0 0.0
        %v400 = vand.u32 %v336, 4294901760
        %401 = vmatpush1.msra.mxu0 %v400
        %402 = vmatprep.subr.mxu0 0.0
        %v403 = vand.u32 %v337, 4294901760
        %404 = vmatpush1.msra.mxu0 %v403
        %405 = vmatprep.subr.mxu0 0.0
        %v406 = vand.u32 %v338, 4294901760
        %407 = vmatpush1.msra.mxu0 %v406
        %408 = vmatprep.subr.mxu0 0.0
        %v409 = vand.u32 %v339, 4294901760
        %410 = vmatpush1.msra.mxu0 %v409
        %411 = vmatprep.subr.mxu0 0.0
        %v412 = vand.u32 %v340, 4294901760
        %413 = vmatpush1.msra.mxu0 %v412
        %414 = vmatprep.subr.mxu0 0.0
        %v415 = vand.u32 %v341, 4294901760
        %416 = vmatpush1.msra.mxu0 %v415
        %417 = vmatprep.subr.mxu0 0.0
        %v418 = vand.u32 %v342, 4294901760
        %419 = vmatpush1.msra.mxu0 %v418
        %420 = vmatprep.subr.mxu0 0.0
        %v421 = vand.u32 %v343, 4294901760
        %422 = vmatpush1.msra.mxu0 %v421
        %423 = vmatprep.subr.mxu0 0.0
        %v424 = vand.u32 %v344, 4294901760
        %425 = vmatpush1.msra.mxu0 %v424
        %426 = vmatprep.subr.mxu0 0.0
        %v427 = vand.u32 %v345, 4294901760
        %428 = vmatpush1.msra.mxu0 %v427
        %429 = vmatprep.subr.mxu0 0.0
        %v430 = vand.u32 %v346, 4294901760
        %431 = vmatpush1.msra.mxu0 %v430
        %432 = vmatprep.subr.mxu0 0.0
        %v433 = vand.u32 %v347, 4294901760
        %434 = vmatpush1.msra.mxu0 %v433
        %435 = vmatprep.subr.mxu0 0.0
        %v436 = vand.u32 %v348, 4294901760
        %437 = vmatpush1.msra.mxu0 %v436
        %438 = vmatprep.subr.mxu0 0.0
        %v439 = vand.u32 %v349, 4294901760
        %440 = vmatpush1.msra.mxu0 %v439
        %441 = vmatprep.subr.mxu0 0.0
        %v442 = vand.u32 %v350, 4294901760
        %443 = vmatpush1.msra.mxu0 %v442
        %444 = vmatprep.subr.mxu0 0.0
        %v445 = vand.u32 %v351, 4294901760
        %446 = vmatpush1.msra.mxu0 %v445
        %447 = vmatprep.subr.mxu0 0.0
        %v448 = vand.u32 %v352, 4294901760
        %449 = vmatpush1.msra.mxu0 %v448
        %450 = vmatprep.subr.mxu0 0.0
        %v451 = vand.u32 %v353, 4294901760
        %452 = vmatpush1.msra.mxu0 %v451
        %v453 = vand.u32 %v355, 4294901760
        %v454 = vsub.f32 %v355, %v453
        %v455 = vand.u32 %v454, 4294901760
        %v456 = vsub.f32 %v454, %v455
        %v457 = vand.u32 %v456, 4294901760
        %458 = vmatprep.mubr.f32.mxu0 %v457
        %v459 = vand.u32 %v321, 4294901760
        %v460 = vsub.f32 %v321, %v459
        %v461 = vand.u32 %v460, 4294901760
        %v462 = vsub.f32 %v460, %v461
        %v463 = vand.u32 %v462, 4294901760
        %464 = vmatmul.mubr.f32.gmra.mrb[0].mxu0 %v463
        %v465 = vpop.f32.mrb[0].mxu0
        %v466 = vadd.f32 0.0, %v465
        %v467 = vpop.f32.mrb[0].mxu0
        %468 = vdwg.mxu0
        %469 = vmatprep.subr.mxu0 0.0
        %v470 = vand.u32 %v322, 4294901760
        %v471 = vsub.f32 %v322, %v470
        %v472 = vand.u32 %v471, 4294901760
        %v473 = vsub.f32 %v471, %v472
        %v474 = vand.u32 %v473, 4294901760
        %475 = vmatpush1.msra.mxu0 %v474
        %476 = vmatprep.subr.mxu0 0.0
        %v477 = vand.u32 %v323, 4294901760
        %v478 = vsub.f32 %v323, %v477
        %v479 = vand.u32 %v478, 4294901760
        %v480 = vsub.f32 %v478, %v479
        %v481 = vand.u32 %v480, 4294901760
        %482 = vmatpush1.msra.mxu0 %v481
        %483 = vmatprep.subr.mxu0 0.0
        %v484 = vand.u32 %v324, 4294901760
        %v485 = vsub.f32 %v324, %v484
        %v486 = vand.u32 %v485, 4294901760
        %v487 = vsub.f32 %v485, %v486
        %v488 = vand.u32 %v487, 4294901760
        %489 = vmatpush1.msra.mxu0 %v488
        %490 = vmatprep.subr.mxu0 0.0
        %v491 = vand.u32 %v325, 4294901760
        %v492 = vsub.f32 %v325, %v491
        %v493 = vand.u32 %v492, 4294901760
        %v494 = vsub.f32 %v492, %v493
        %v495 = vand.u32 %v494, 4294901760
        %496 = vmatpush1.msra.mxu0 %v495
        %497 = vmatprep.subr.mxu0 0.0
        %v498 = vand.u32 %v326, 4294901760
        %v499 = vsub.f32 %v326, %v498
        %v500 = vand.u32 %v499, 4294901760
        %v501 = vsub.f32 %v499, %v500
        %v502 = vand.u32 %v501, 4294901760
        %503 = vmatpush1.msra.mxu0 %v502
        %504 = vmatprep.subr.mxu0 0.0
        %v505 = vand.u32 %v327, 4294901760
        %v506 = vsub.f32 %v327, %v505
        %v507 = vand.u32 %v506, 4294901760
        %v508 = vsub.f32 %v506, %v507
        %v509 = vand.u32 %v508, 4294901760
        %510 = vmatpush1.msra.mxu0 %v509
        %511 = vmatprep.subr.mxu0 0.0
        %v512 = vand.u32 %v328, 4294901760
        %v513 = vsub.f32 %v328, %v512
        %v514 = vand.u32 %v513, 4294901760
        %v515 = vsub.f32 %v513, %v514
        %v516 = vand.u32 %v515, 4294901760
        %517 = vmatpush1.msra.mxu0 %v516
        %518 = vmatprep.subr.mxu0 0.0
        %v519 = vand.u32 %v329, 4294901760
        %v520 = vsub.f32 %v329, %v519
        %v521 = vand.u32 %v520, 4294901760
        %v522 = vsub.f32 %v520, %v521
        %v523 = vand.u32 %v522, 4294901760
        %524 = vmatpush1.msra.mxu0 %v523
        %525 = vmatprep.subr.mxu0 0.0
        %v526 = vand.u32 %v330, 4294901760
        %v527 = vsub.f32 %v330, %v526
        %v528 = vand.u32 %v527, 4294901760
        %v529 = vsub.f32 %v527, %v528
        %v530 = vand.u32 %v529, 4294901760
        %531 = vmatpush1.msra.mxu0 %v530
        %532 = vmatprep.subr.mxu0 0.0
        %v533 = vand.u32 %v331, 4294901760
        %v534 = vsub.f32 %v331, %v533
        %v535 = vand.u32 %v534, 4294901760
        %v536 = vsub.f32 %v534, %v535
        %v537 = vand.u32 %v536, 4294901760
        %538 = vmatpush1.msra.mxu0 %v537
        %539 = vmatprep.subr.mxu0 0.0
        %v540 = vand.u32 %v332, 4294901760
        %v541 = vsub.f32 %v332, %v540
        %v542 = vand.u32 %v541, 4294901760
        %v543 = vsub.f32 %v541, %v542
        %v544 = vand.u32 %v543, 4294901760
        %545 = vmatpush1.msra.mxu0 %v544
        %546 = vmatprep.subr.mxu0 0.0
        %v547 = vand.u32 %v333, 4294901760
        %v548 = vsub.f32 %v333, %v547
        %v549 = vand.u32 %v548, 4294901760
        %v550 = vsub.f32 %v548, %v549
        %v551 = vand.u32 %v550, 4294901760
        %552 = vmatpush1.msra.mxu0 %v551
        %553 = vmatprep.subr.mxu0 0.0
        %v554 = vand.u32 %v334, 4294901760
        %v555 = vsub.f32 %v334, %v554
        %v556 = vand.u32 %v555, 4294901760
        %v557 = vsub.f32 %v555, %v556
        %v558 = vand.u32 %v557, 4294901760
        %559 = vmatpush1.msra.mxu0 %v558
        %560 = vmatprep.subr.mxu0 0.0
        %v561 = vand.u32 %v335, 4294901760
        %v562 = vsub.f32 %v335, %v561
        %v563 = vand.u32 %v562, 4294901760
        %v564 = vsub.f32 %v562, %v563
        %v565 = vand.u32 %v564, 4294901760
        %566 = vmatpush1.msra.mxu0 %v565
        %567 = vmatprep.subr.mxu0 0.0
        %v568 = vand.u32 %v336, 4294901760
        %v569 = vsub.f32 %v336, %v568
        %v570 = vand.u32 %v569, 4294901760
        %v571 = vsub.f32 %v569, %v570
        %v572 = vand.u32 %v571, 4294901760
        %573 = vmatpush1.msra.mxu0 %v572
        %574 = vmatprep.subr.mxu0 0.0
        %v575 = vand.u32 %v337, 4294901760
        %v576 = vsub.f32 %v337, %v575
        %v577 = vand.u32 %v576, 4294901760
        %v578 = vsub.f32 %v576, %v577
        %v579 = vand.u32 %v578, 4294901760
        %580 = vmatpush1.msra.mxu0 %v579
        %581 = vmatprep.subr.mxu0 0.0
        %v582 = vand.u32 %v338, 4294901760
        %v583 = vsub.f32 %v338, %v582
        %v584 = vand.u32 %v583, 4294901760
        %v585 = vsub.f32 %v583, %v584
        %v586 = vand.u32 %v585, 4294901760
        %587 = vmatpush1.msra.mxu0 %v586
        %588 = vmatprep.subr.mxu0 0.0
        %v589 = vand.u32 %v339, 4294901760
        %v590 = vsub.f32 %v339, %v589
        %v591 = vand.u32 %v590, 4294901760
        %v592 = vsub.f32 %v590, %v591
        %v593 = vand.u32 %v592, 4294901760
        %594 = vmatpush1.msra.mxu0 %v593
        %595 = vmatprep.subr.mxu0 0.0
        %v596 = vand.u32 %v340, 4294901760
        %v597 = vsub.f32 %v340, %v596
        %v598 = vand.u32 %v597, 4294901760
        %v599 = vsub.f32 %v597, %v598
        %v600 = vand.u32 %v599, 4294901760
        %601 = vmatpush1.msra.mxu0 %v600
        %602 = vmatprep.subr.mxu0 0.0
        %v603 = vand.u32 %v341, 4294901760
        %v604 = vsub.f32 %v341, %v603
        %v605 = vand.u32 %v604, 4294901760
        %v606 = vsub.f32 %v604, %v605
        %v607 = vand.u32 %v606, 4294901760
        %608 = vmatpush1.msra.mxu0 %v607
        %609 = vmatprep.subr.mxu0 0.0
        %v610 = vand.u32 %v342, 4294901760
        %v611 = vsub.f32 %v342, %v610
        %v612 = vand.u32 %v611, 4294901760
        %v613 = vsub.f32 %v611, %v612
        %v614 = vand.u32 %v613, 4294901760
        %615 = vmatpush1.msra.mxu0 %v614
        %616 = vmatprep.subr.mxu0 0.0
        %v617 = vand.u32 %v343, 4294901760
        %v618 = vsub.f32 %v343, %v617
        %v619 = vand.u32 %v618, 4294901760
        %v620 = vsub.f32 %v618, %v619
        %v621 = vand.u32 %v620, 4294901760
        %622 = vmatpush1.msra.mxu0 %v621
        %623 = vmatprep.subr.mxu0 0.0
        %v624 = vand.u32 %v344, 4294901760
        %v625 = vsub.f32 %v344, %v624
        %v626 = vand.u32 %v625, 4294901760
        %v627 = vsub.f32 %v625, %v626
        %v628 = vand.u32 %v627, 4294901760
        %629 = vmatpush1.msra.mxu0 %v628
        %630 = vmatprep.subr.mxu0 0.0
        %v631 = vand.u32 %v345, 4294901760
        %v632 = vsub.f32 %v345, %v631
        %v633 = vand.u32 %v632, 4294901760
        %v634 = vsub.f32 %v632, %v633
        %v635 = vand.u32 %v634, 4294901760
        %636 = vmatpush1.msra.mxu0 %v635
        %637 = vmatprep.subr.mxu0 0.0
        %v638 = vand.u32 %v346, 4294901760
        %v639 = vsub.f32 %v346, %v638
        %v640 = vand.u32 %v639, 4294901760
        %v641 = vsub.f32 %v639, %v640
        %v642 = vand.u32 %v641, 4294901760
        %643 = vmatpush1.msra.mxu0 %v642
        %644 = vmatprep.subr.mxu0 0.0
        %v645 = vand.u32 %v347, 4294901760
        %v646 = vsub.f32 %v347, %v645
        %v647 = vand.u32 %v646, 4294901760
        %v648 = vsub.f32 %v646, %v647
        %v649 = vand.u32 %v648, 4294901760
        %650 = vmatpush1.msra.mxu0 %v649
        %651 = vmatprep.subr.mxu0 0.0
        %v652 = vand.u32 %v348, 4294901760
        %v653 = vsub.f32 %v348, %v652
        %v654 = vand.u32 %v653, 4294901760
        %v655 = vsub.f32 %v653, %v654
        %v656 = vand.u32 %v655, 4294901760
        %657 = vmatpush1.msra.mxu0 %v656
        %658 = vmatprep.subr.mxu0 0.0
        %v659 = vand.u32 %v349, 4294901760
        %v660 = vsub.f32 %v349, %v659
        %v661 = vand.u32 %v660, 4294901760
        %v662 = vsub.f32 %v660, %v661
        %v663 = vand.u32 %v662, 4294901760
        %664 = vmatpush1.msra.mxu0 %v663
        %665 = vmatprep.subr.mxu0 0.0
        %v666 = vand.u32 %v350, 4294901760
        %v667 = vsub.f32 %v350, %v666
        %v668 = vand.u32 %v667, 4294901760
        %v669 = vsub.f32 %v667, %v668
        %v670 = vand.u32 %v669, 4294901760
        %671 = vmatpush1.msra.mxu0 %v670
        %672 = vmatprep.subr.mxu0 0.0
        %v673 = vand.u32 %v351, 4294901760
        %v674 = vsub.f32 %v351, %v673
        %v675 = vand.u32 %v674, 4294901760
        %v676 = vsub.f32 %v674, %v675
        %v677 = vand.u32 %v676, 4294901760
        %678 = vmatpush1.msra.mxu0 %v677
        %679 = vmatprep.subr.mxu0 0.0
        %v680 = vand.u32 %v352, 4294901760
        %v681 = vsub.f32 %v352, %v680
        %v682 = vand.u32 %v681, 4294901760
        %v683 = vsub.f32 %v681, %v682
        %v684 = vand.u32 %v683, 4294901760
        %685 = vmatpush1.msra.mxu0 %v684
        %686 = vmatprep.subr.mxu0 0.0
        %v687 = vand.u32 %v353, 4294901760
        %v688 = vsub.f32 %v353, %v687
        %v689 = vand.u32 %v688, 4294901760
        %v690 = vsub.f32 %v688, %v689
        %v691 = vand.u32 %v690, 4294901760
        %692 = vmatpush1.msra.mxu0 %v691
        %v693 = vand.u32 %v355, 4294901760
        %694 = vmatprep.mubr.f32.mxu0 %v693
        %v695 = vand.u32 %v321, 4294901760
        %696 = vmatmul.mubr.f32.gmra.mrb[0].mxu0 %v695
        %v697 = vpop.f32.mrb[0].mxu0
        %v698 = vadd.f32 %v466, %v697
        %v699 = vpop.f32.mrb[0].mxu0
        %700 = vdwg.mxu0
        %701 = vmatprep.subr.mxu0 0.0
        %v702 = vand.u32 %v322, 4294901760
        %v703 = vsub.f32 %v322, %v702
        %704 = vmatpush1.msra.mxu0 %v703
        %705 = vmatprep.subr.mxu0 0.0
        %v706 = vand.u32 %v323, 4294901760
        %v707 = vsub.f32 %v323, %v706
        %708 = vmatpush1.msra.mxu0 %v707
        %709 = vmatprep.subr.mxu0 0.0
        %v710 = vand.u32 %v324, 4294901760
        %v711 = vsub.f32 %v324, %v710
        %712 = vmatpush1.msra.mxu0 %v711
        %713 = vmatprep.subr.mxu0 0.0
        %v714 = vand.u32 %v325, 4294901760
        %v715 = vsub.f32 %v325, %v714
        %716 = vmatpush1.msra.mxu0 %v715
        %717 = vmatprep.subr.mxu0 0.0
        %v718 = vand.u32 %v326, 4294901760
        %v719 = vsub.f32 %v326, %v718
        %720 = vmatpush1.msra.mxu0 %v719
        %721 = vmatprep.subr.mxu0 0.0
        %v722 = vand.u32 %v327, 4294901760
        %v723 = vsub.f32 %v327, %v722
        %724 = vmatpush1.msra.mxu0 %v723
        %725 = vmatprep.subr.mxu0 0.0
        %v726 = vand.u32 %v328, 4294901760
        %v727 = vsub.f32 %v328, %v726
        %728 = vmatpush1.msra.mxu0 %v727
        %729 = vmatprep.subr.mxu0 0.0
        %v730 = vand.u32 %v329, 4294901760
        %v731 = vsub.f32 %v329, %v730
        %732 = vmatpush1.msra.mxu0 %v731
        %733 = vmatprep.subr.mxu0 0.0
        %v734 = vand.u32 %v330, 4294901760
        %v735 = vsub.f32 %v330, %v734
        %736 = vmatpush1.msra.mxu0 %v735
        %737 = vmatprep.subr.mxu0 0.0
        %v738 = vand.u32 %v331, 4294901760
        %v739 = vsub.f32 %v331, %v738
        %740 = vmatpush1.msra.mxu0 %v739
        %741 = vmatprep.subr.mxu0 0.0
        %v742 = vand.u32 %v332, 4294901760
        %v743 = vsub.f32 %v332, %v742
        %744 = vmatpush1.msra.mxu0 %v743
        %745 = vmatprep.subr.mxu0 0.0
        %v746 = vand.u32 %v333, 4294901760
        %v747 = vsub.f32 %v333, %v746
        %748 = vmatpush1.msra.mxu0 %v747
        %749 = vmatprep.subr.mxu0 0.0
        %v750 = vand.u32 %v334, 4294901760
        %v751 = vsub.f32 %v334, %v750
        %752 = vmatpush1.msra.mxu0 %v751
        %753 = vmatprep.subr.mxu0 0.0
        %v754 = vand.u32 %v335, 4294901760
        %v755 = vsub.f32 %v335, %v754
        %756 = vmatpush1.msra.mxu0 %v755
        %757 = vmatprep.subr.mxu0 0.0
        %v758 = vand.u32 %v336, 4294901760
        %v759 = vsub.f32 %v336, %v758
        %760 = vmatpush1.msra.mxu0 %v759
        %761 = vmatprep.subr.mxu0 0.0
        %v762 = vand.u32 %v337, 4294901760
        %v763 = vsub.f32 %v337, %v762
        %764 = vmatpush1.msra.mxu0 %v763
        %765 = vmatprep.subr.mxu0 0.0
        %v766 = vand.u32 %v338, 4294901760
        %v767 = vsub.f32 %v338, %v766
        %768 = vmatpush1.msra.mxu0 %v767
        %769 = vmatprep.subr.mxu0 0.0
        %v770 = vand.u32 %v339, 4294901760
        %v771 = vsub.f32 %v339, %v770
        %772 = vmatpush1.msra.mxu0 %v771
        %773 = vmatprep.subr.mxu0 0.0
        %v774 = vand.u32 %v340, 4294901760
        %v775 = vsub.f32 %v340, %v774
        %776 = vmatpush1.msra.mxu0 %v775
        %777 = vmatprep.subr.mxu0 0.0
        %v778 = vand.u32 %v341, 4294901760
        %v779 = vsub.f32 %v341, %v778
        %780 = vmatpush1.msra.mxu0 %v779
        %781 = vmatprep.subr.mxu0 0.0
        %v782 = vand.u32 %v342, 4294901760
        %v783 = vsub.f32 %v342, %v782
        %784 = vmatpush1.msra.mxu0 %v783
        %785 = vmatprep.subr.mxu0 0.0
        %v786 = vand.u32 %v343, 4294901760
        %v787 = vsub.f32 %v343, %v786
        %788 = vmatpush1.msra.mxu0 %v787
        %789 = vmatprep.subr.mxu0 0.0
        %v790 = vand.u32 %v344, 4294901760
        %v791 = vsub.f32 %v344, %v790
        %792 = vmatpush1.msra.mxu0 %v791
        %793 = vmatprep.subr.mxu0 0.0
        %v794 = vand.u32 %v345, 4294901760
        %v795 = vsub.f32 %v345, %v794
        %796 = vmatpush1.msra.mxu0 %v795
        %797 = vmatprep.subr.mxu0 0.0
        %v798 = vand.u32 %v346, 4294901760
        %v799 = vsub.f32 %v346, %v798
        %800 = vmatpush1.msra.mxu0 %v799
        %801 = vmatprep.subr.mxu0 0.0
        %v802 = vand.u32 %v347, 4294901760
        %v803 = vsub.f32 %v347, %v802
        %804 = vmatpush1.msra.mxu0 %v803
        %805 = vmatprep.subr.mxu0 0.0
        %v806 = vand.u32 %v348, 4294901760
        %v807 = vsub.f32 %v348, %v806
        %808 = vmatpush1.msra.mxu0 %v807
        %809 = vmatprep.subr.mxu0 0.0
        %v810 = vand.u32 %v349, 4294901760
        %v811 = vsub.f32 %v349, %v810
        %812 = vmatpush1.msra.mxu0 %v811
        %813 = vmatprep.subr.mxu0 0.0
        %v814 = vand.u32 %v350, 4294901760
        %v815 = vsub.f32 %v350, %v814
        %816 = vmatpush1.msra.mxu0 %v815
        %817 = vmatprep.subr.mxu0 0.0
        %v818 = vand.u32 %v351, 4294901760
        %v819 = vsub.f32 %v351, %v818
        %820 = vmatpush1.msra.mxu0 %v819
        %821 = vmatprep.subr.mxu0 0.0
        %v822 = vand.u32 %v352, 4294901760
        %v823 = vsub.f32 %v352, %v822
        %824 = vmatpush1.msra.mxu0 %v823
        %825 = vmatprep.subr.mxu0 0.0
        %v826 = vand.u32 %v353, 4294901760
        %v827 = vsub.f32 %v353, %v826
        %828 = vmatpush1.msra.mxu0 %v827
        %v829 = vand.u32 %v355, 4294901760
        %v830 = vsub.f32 %v355, %v829
        %831 = vmatprep.mubr.f32.mxu0 %v830
        %v832 = vand.u32 %v321, 4294901760
        %v833 = vsub.f32 %v321, %v832
        %834 = vmatmul.mubr.f32.gmra.mrb[0].mxu0 %v833
        %v835 = vpop.f32.mrb[0].mxu0
        %v836 = vadd.f32 %v698, %v835
        %v837 = vpop.f32.mrb[0].mxu0
        %838 = vdwg.mxu0
        %839 = vmatprep.subr.mxu0 0.0
        %v840 = vand.u32 %v322, 4294901760
        %841 = vmatpush1.msra.mxu0 %v840
        %842 = vmatprep.subr.mxu0 0.0
        %v843 = vand.u32 %v323, 4294901760
        %844 = vmatpush1.msra.mxu0 %v843
        %845 = vmatprep.subr.mxu0 0.0
        %v846 = vand.u32 %v324, 4294901760
        %847 = vmatpush1.msra.mxu0 %v846
        %848 = vmatprep.subr.mxu0 0.0
        %v849 = vand.u32 %v325, 4294901760
        %850 = vmatpush1.msra.mxu0 %v849
        %851 = vmatprep.subr.mxu0 0.0
        %v852 = vand.u32 %v326, 4294901760
        %853 = vmatpush1.msra.mxu0 %v852
        %854 = vmatprep.subr.mxu0 0.0
        %v855 = vand.u32 %v327, 4294901760
        %856 = vmatpush1.msra.mxu0 %v855
        %857 = vmatprep.subr.mxu0 0.0
        %v858 = vand.u32 %v328, 4294901760
        %859 = vmatpush1.msra.mxu0 %v858
        %860 = vmatprep.subr.mxu0 0.0
        %v861 = vand.u32 %v329, 4294901760
        %862 = vmatpush1.msra.mxu0 %v861
        %863 = vmatprep.subr.mxu0 0.0
        %v864 = vand.u32 %v330, 4294901760
        %865 = vmatpush1.msra.mxu0 %v864
        %866 = vmatprep.subr.mxu0 0.0
        %v867 = vand.u32 %v331, 4294901760
        %868 = vmatpush1.msra.mxu0 %v867
        %869 = vmatprep.subr.mxu0 0.0
        %v870 = vand.u32 %v332, 4294901760
        %871 = vmatpush1.msra.mxu0 %v870
        %872 = vmatprep.subr.mxu0 0.0
        %v873 = vand.u32 %v333, 4294901760
        %874 = vmatpush1.msra.mxu0 %v873
        %875 = vmatprep.subr.mxu0 0.0
        %v876 = vand.u32 %v334, 4294901760
        %877 = vmatpush1.msra.mxu0 %v876
        %878 = vmatprep.subr.mxu0 0.0
        %v879 = vand.u32 %v335, 4294901760
        %880 = vmatpush1.msra.mxu0 %v879
        %881 = vmatprep.subr.mxu0 0.0
        %v882 = vand.u32 %v336, 4294901760
        %883 = vmatpush1.msra.mxu0 %v882
        %884 = vmatprep.subr.mxu0 0.0
        %v885 = vand.u32 %v337, 4294901760
        %886 = vmatpush1.msra.mxu0 %v885
        %887 = vmatprep.subr.mxu0 0.0
        %v888 = vand.u32 %v338, 4294901760
        %889 = vmatpush1.msra.mxu0 %v888
        %890 = vmatprep.subr.mxu0 0.0
        %v891 = vand.u32 %v339, 4294901760
        %892 = vmatpush1.msra.mxu0 %v891
        %893 = vmatprep.subr.mxu0 0.0
        %v894 = vand.u32 %v340, 4294901760
        %895 = vmatpush1.msra.mxu0 %v894
        %896 = vmatprep.subr.mxu0 0.0
        %v897 = vand.u32 %v341, 4294901760
        %898 = vmatpush1.msra.mxu0 %v897
        %899 = vmatprep.subr.mxu0 0.0
        %v900 = vand.u32 %v342, 4294901760
        %901 = vmatpush1.msra.mxu0 %v900
        %902 = vmatprep.subr.mxu0 0.0
        %v903 = vand.u32 %v343, 4294901760
        %904 = vmatpush1.msra.mxu0 %v903
        %905 = vmatprep.subr.mxu0 0.0
        %v906 = vand.u32 %v344, 4294901760
        %907 = vmatpush1.msra.mxu0 %v906
        %908 = vmatprep.subr.mxu0 0.0
        %v909 = vand.u32 %v345, 4294901760
        %910 = vmatpush1.msra.mxu0 %v909
        %911 = vmatprep.subr.mxu0 0.0
        %v912 = vand.u32 %v346, 4294901760
        %913 = vmatpush1.msra.mxu0 %v912
        %914 = vmatprep.subr.mxu0 0.0
        %v915 = vand.u32 %v347, 4294901760
        %916 = vmatpush1.msra.mxu0 %v915
        %917 = vmatprep.subr.mxu0 0.0
        %v918 = vand.u32 %v348, 4294901760
        %919 = vmatpush1.msra.mxu0 %v918
        %920 = vmatprep.subr.mxu0 0.0
        %v921 = vand.u32 %v349, 4294901760
        %922 = vmatpush1.msra.mxu0 %v921
        %923 = vmatprep.subr.mxu0 0.0
        %v924 = vand.u32 %v350, 4294901760
        %925 = vmatpush1.msra.mxu0 %v924
        %926 = vmatprep.subr.mxu0 0.0
        %v927 = vand.u32 %v351, 4294901760
        %928 = vmatpush1.msra.mxu0 %v927
        %929 = vmatprep.subr.mxu0 0.0
        %v930 = vand.u32 %v352, 4294901760
        %931 = vmatpush1.msra.mxu0 %v930
        %932 = vmatprep.subr.mxu0 0.0
        %v933 = vand.u32 %v353, 4294901760
        %934 = vmatpush1.msra.mxu0 %v933
        %v935 = vand.u32 %v355, 4294901760
        %v936 = vsub.f32 %v355, %v935
        %v937 = vand.u32 %v936, 4294901760
        %938 = vmatprep.mubr.f32.mxu0 %v937
        %v939 = vand.u32 %v321, 4294901760
        %v940 = vsub.f32 %v321, %v939
        %v941 = vand.u32 %v940, 4294901760
        %942 = vmatmul.mubr.f32.gmra.mrb[0].mxu0 %v941
        %v943 = vpop.f32.mrb[0].mxu0
        %v944 = vadd.f32 %v836, %v943
        %v945 = vpop.f32.mrb[0].mxu0
        %946 = vdwg.mxu0
        %947 = vmatprep.subr.mxu0 0.0
        %v948 = vand.u32 %v322, 4294901760
        %v949 = vsub.f32 %v322, %v948
        %v950 = vand.u32 %v949, 4294901760
        %951 = vmatpush1.msra.mxu0 %v950
        %952 = vmatprep.subr.mxu0 0.0
        %v953 = vand.u32 %v323, 4294901760
        %v954 = vsub.f32 %v323, %v953
        %v955 = vand.u32 %v954, 4294901760
        %956 = vmatpush1.msra.mxu0 %v955
        %957 = vmatprep.subr.mxu0 0.0
        %v958 = vand.u32 %v324, 4294901760
        %v959 = vsub.f32 %v324, %v958
        %v960 = vand.u32 %v959, 4294901760
        %961 = vmatpush1.msra.mxu0 %v960
        %962 = vmatprep.subr.mxu0 0.0
        %v963 = vand.u32 %v325, 4294901760
        %v964 = vsub.f32 %v325, %v963
        %v965 = vand.u32 %v964, 4294901760
        %966 = vmatpush1.msra.mxu0 %v965
        %967 = vmatprep.subr.mxu0 0.0
        %v968 = vand.u32 %v326, 4294901760
        %v969 = vsub.f32 %v326, %v968
        %v970 = vand.u32 %v969, 4294901760
        %971 = vmatpush1.msra.mxu0 %v970
        %972 = vmatprep.subr.mxu0 0.0
        %v973 = vand.u32 %v327, 4294901760
        %v974 = vsub.f32 %v327, %v973
        %v975 = vand.u32 %v974, 4294901760
        %976 = vmatpush1.msra.mxu0 %v975
        %977 = vmatprep.subr.mxu0 0.0
        %v978 = vand.u32 %v328, 4294901760
        %v979 = vsub.f32 %v328, %v978
        %v980 = vand.u32 %v979, 4294901760
        %981 = vmatpush1.msra.mxu0 %v980
        %982 = vmatprep.subr.mxu0 0.0
        %v983 = vand.u32 %v329, 4294901760
        %v984 = vsub.f32 %v329, %v983
        %v985 = vand.u32 %v984, 4294901760
        %986 = vmatpush1.msra.mxu0 %v985
        %987 = vmatprep.subr.mxu0 0.0
        %v988 = vand.u32 %v330, 4294901760
        %v989 = vsub.f32 %v330, %v988
        %v990 = vand.u32 %v989, 4294901760
        %991 = vmatpush1.msra.mxu0 %v990
        %992 = vmatprep.subr.mxu0 0.0
        %v993 = vand.u32 %v331, 4294901760
        %v994 = vsub.f32 %v331, %v993
        %v995 = vand.u32 %v994, 4294901760
        %996 = vmatpush1.msra.mxu0 %v995
        %997 = vmatprep.subr.mxu0 0.0
        %v998 = vand.u32 %v332, 4294901760
        %v999 = vsub.f32 %v332, %v998
        %v1000 = vand.u32 %v999, 4294901760
        %1001 = vmatpush1.msra.mxu0 %v1000
        %1002 = vmatprep.subr.mxu0 0.0
        %v1003 = vand.u32 %v333, 4294901760
        %v1004 = vsub.f32 %v333, %v1003
        %v1005 = vand.u32 %v1004, 4294901760
        %1006 = vmatpush1.msra.mxu0 %v1005
        %1007 = vmatprep.subr.mxu0 0.0
        %v1008 = vand.u32 %v334, 4294901760
        %v1009 = vsub.f32 %v334, %v1008
        %v1010 = vand.u32 %v1009, 4294901760
        %1011 = vmatpush1.msra.mxu0 %v1010
        %1012 = vmatprep.subr.mxu0 0.0
        %v1013 = vand.u32 %v335, 4294901760
        %v1014 = vsub.f32 %v335, %v1013
        %v1015 = vand.u32 %v1014, 4294901760
        %1016 = vmatpush1.msra.mxu0 %v1015
        %1017 = vmatprep.subr.mxu0 0.0
        %v1018 = vand.u32 %v336, 4294901760
        %v1019 = vsub.f32 %v336, %v1018
        %v1020 = vand.u32 %v1019, 4294901760
        %1021 = vmatpush1.msra.mxu0 %v1020
        %1022 = vmatprep.subr.mxu0 0.0
        %v1023 = vand.u32 %v337, 4294901760
        %v1024 = vsub.f32 %v337, %v1023
        %v1025 = vand.u32 %v1024, 4294901760
        %1026 = vmatpush1.msra.mxu0 %v1025
        %1027 = vmatprep.subr.mxu0 0.0
        %v1028 = vand.u32 %v338, 4294901760
        %v1029 = vsub.f32 %v338, %v1028
        %v1030 = vand.u32 %v1029, 4294901760
        %1031 = vmatpush1.msra.mxu0 %v1030
        %1032 = vmatprep.subr.mxu0 0.0
        %v1033 = vand.u32 %v339, 4294901760
        %v1034 = vsub.f32 %v339, %v1033
        %v1035 = vand.u32 %v1034, 4294901760
        %1036 = vmatpush1.msra.mxu0 %v1035
        %1037 = vmatprep.subr.mxu0 0.0
        %v1038 = vand.u32 %v340, 4294901760
        %v1039 = vsub.f32 %v340, %v1038
        %v1040 = vand.u32 %v1039, 4294901760
        %1041 = vmatpush1.msra.mxu0 %v1040
        %1042 = vmatprep.subr.mxu0 0.0
        %v1043 = vand.u32 %v341, 4294901760
        %v1044 = vsub.f32 %v341, %v1043
        %v1045 = vand.u32 %v1044, 4294901760
        %1046 = vmatpush1.msra.mxu0 %v1045
        %1047 = vmatprep.subr.mxu0 0.0
        %v1048 = vand.u32 %v342, 4294901760
        %v1049 = vsub.f32 %v342, %v1048
        %v1050 = vand.u32 %v1049, 4294901760
        %1051 = vmatpush1.msra.mxu0 %v1050
        %1052 = vmatprep.subr.mxu0 0.0
        %v1053 = vand.u32 %v343, 4294901760
        %v1054 = vsub.f32 %v343, %v1053
        %v1055 = vand.u32 %v1054, 4294901760
        %1056 = vmatpush1.msra.mxu0 %v1055
        %1057 = vmatprep.subr.mxu0 0.0
        %v1058 = vand.u32 %v344, 4294901760
        %v1059 = vsub.f32 %v344, %v1058
        %v1060 = vand.u32 %v1059, 4294901760
        %1061 = vmatpush1.msra.mxu0 %v1060
        %1062 = vmatprep.subr.mxu0 0.0
        %v1063 = vand.u32 %v345, 4294901760
        %v1064 = vsub.f32 %v345, %v1063
        %v1065 = vand.u32 %v1064, 4294901760
        %1066 = vmatpush1.msra.mxu0 %v1065
        %1067 = vmatprep.subr.mxu0 0.0
        %v1068 = vand.u32 %v346, 4294901760
        %v1069 = vsub.f32 %v346, %v1068
        %v1070 = vand.u32 %v1069, 4294901760
        %1071 = vmatpush1.msra.mxu0 %v1070
        %1072 = vmatprep.subr.mxu0 0.0
        %v1073 = vand.u32 %v347, 4294901760
        %v1074 = vsub.f32 %v347, %v1073
        %v1075 = vand.u32 %v1074, 4294901760
        %1076 = vmatpush1.msra.mxu0 %v1075
        %1077 = vmatprep.subr.mxu0 0.0
        %v1078 = vand.u32 %v348, 4294901760
        %v1079 = vsub.f32 %v348, %v1078
        %v1080 = vand.u32 %v1079, 4294901760
        %1081 = vmatpush1.msra.mxu0 %v1080
        %1082 = vmatprep.subr.mxu0 0.0
        %v1083 = vand.u32 %v349, 4294901760
        %v1084 = vsub.f32 %v349, %v1083
        %v1085 = vand.u32 %v1084, 4294901760
        %1086 = vmatpush1.msra.mxu0 %v1085
        %1087 = vmatprep.subr.mxu0 0.0
        %v1088 = vand.u32 %v350, 4294901760
        %v1089 = vsub.f32 %v350, %v1088
        %v1090 = vand.u32 %v1089, 4294901760
        %1091 = vmatpush1.msra.mxu0 %v1090
        %1092 = vmatprep.subr.mxu0 0.0
        %v1093 = vand.u32 %v351, 4294901760
        %v1094 = vsub.f32 %v351, %v1093
        %v1095 = vand.u32 %v1094, 4294901760
        %1096 = vmatpush1.msra.mxu0 %v1095
        %1097 = vmatprep.subr.mxu0 0.0
        %v1098 = vand.u32 %v352, 4294901760
        %v1099 = vsub.f32 %v352, %v1098
        %v1100 = vand.u32 %v1099, 4294901760
        %1101 = vmatpush1.msra.mxu0 %v1100
        %1102 = vmatprep.subr.mxu0 0.0
        %v1103 = vand.u32 %v353, 4294901760
        %v1104 = vsub.f32 %v353, %v1103
        %v1105 = vand.u32 %v1104, 4294901760
        %1106 = vmatpush1.msra.mxu0 %v1105
        %v1107 = vand.u32 %v355, 4294901760
        %1108 = vmatprep.mubr.f32.mxu0 %v1107
        %v1109 = vand.u32 %v321, 4294901760
        %1110 = vmatmul.mubr.f32.gmra.mrb[0].mxu0 %v1109
        %v1111 = vpop.f32.mrb[0].mxu0
        %v1112 = vadd.f32 %v944, %v1111
        %v1113 = vpop.f32.mrb[0].mxu0
        %1114 = vdwg.mxu0
        %1115 = vmatprep.subr.mxu0 0.0
        %v1116 = vand.u32 %v322, 4294901760
        %1117 = vmatpush1.msra.mxu0 %v1116
        %1118 = vmatprep.subr.mxu0 0.0
        %v1119 = vand.u32 %v323, 4294901760
        %1120 = vmatpush1.msra.mxu0 %v1119
        %1121 = vmatprep.subr.mxu0 0.0
        %v1122 = vand.u32 %v324, 4294901760
        %1123 = vmatpush1.msra.mxu0 %v1122
        %1124 = vmatprep.subr.mxu0 0.0
        %v1125 = vand.u32 %v325, 4294901760
        %1126 = vmatpush1.msra.mxu0 %v1125
        %1127 = vmatprep.subr.mxu0 0.0
        %v1128 = vand.u32 %v326, 4294901760
        %1129 = vmatpush1.msra.mxu0 %v1128
        %1130 = vmatprep.subr.mxu0 0.0
        %v1131 = vand.u32 %v327, 4294901760
        %1132 = vmatpush1.msra.mxu0 %v1131
        %1133 = vmatprep.subr.mxu0 0.0
        %v1134 = vand.u32 %v328, 4294901760
        %1135 = vmatpush1.msra.mxu0 %v1134
        %1136 = vmatprep.subr.mxu0 0.0
        %v1137 = vand.u32 %v329, 4294901760
        %1138 = vmatpush1.msra.mxu0 %v1137
        %1139 = vmatprep.subr.mxu0 0.0
        %v1140 = vand.u32 %v330, 4294901760
        %1141 = vmatpush1.msra.mxu0 %v1140
        %1142 = vmatprep.subr.mxu0 0.0
        %v1143 = vand.u32 %v331, 4294901760
        %1144 = vmatpush1.msra.mxu0 %v1143
        %1145 = vmatprep.subr.mxu0 0.0
        %v1146 = vand.u32 %v332, 4294901760
        %1147 = vmatpush1.msra.mxu0 %v1146
        %1148 = vmatprep.subr.mxu0 0.0
        %v1149 = vand.u32 %v333, 4294901760
        %1150 = vmatpush1.msra.mxu0 %v1149
        %1151 = vmatprep.subr.mxu0 0.0
        %v1152 = vand.u32 %v334, 4294901760
        %1153 = vmatpush1.msra.mxu0 %v1152
        %1154 = vmatprep.subr.mxu0 0.0
        %v1155 = vand.u32 %v335, 4294901760
        %1156 = vmatpush1.msra.mxu0 %v1155
        %1157 = vmatprep.subr.mxu0 0.0
        %v1158 = vand.u32 %v336, 4294901760
        %1159 = vmatpush1.msra.mxu0 %v1158
        %1160 = vmatprep.subr.mxu0 0.0
        %v1161 = vand.u32 %v337, 4294901760
        %1162 = vmatpush1.msra.mxu0 %v1161
        %1163 = vmatprep.subr.mxu0 0.0
        %v1164 = vand.u32 %v338, 4294901760
        %1165 = vmatpush1.msra.mxu0 %v1164
        %1166 = vmatprep.subr.mxu0 0.0
        %v1167 = vand.u32 %v339, 4294901760
        %1168 = vmatpush1.msra.mxu0 %v1167
        %1169 = vmatprep.subr.mxu0 0.0
        %v1170 = vand.u32 %v340, 4294901760
        %1171 = vmatpush1.msra.mxu0 %v1170
        %1172 = vmatprep.subr.mxu0 0.0
        %v1173 = vand.u32 %v341, 4294901760
        %1174 = vmatpush1.msra.mxu0 %v1173
        %1175 = vmatprep.subr.mxu0 0.0
        %v1176 = vand.u32 %v342, 4294901760
        %1177 = vmatpush1.msra.mxu0 %v1176
        %1178 = vmatprep.subr.mxu0 0.0
        %v1179 = vand.u32 %v343, 4294901760
        %1180 = vmatpush1.msra.mxu0 %v1179
        %1181 = vmatprep.subr.mxu0 0.0
        %v1182 = vand.u32 %v344, 4294901760
        %1183 = vmatpush1.msra.mxu0 %v1182
        %1184 = vmatprep.subr.mxu0 0.0
        %v1185 = vand.u32 %v345, 4294901760
        %1186 = vmatpush1.msra.mxu0 %v1185
        %1187 = vmatprep.subr.mxu0 0.0
        %v1188 = vand.u32 %v346, 4294901760
        %1189 = vmatpush1.msra.mxu0 %v1188
        %1190 = vmatprep.subr.mxu0 0.0
        %v1191 = vand.u32 %v347, 4294901760
        %1192 = vmatpush1.msra.mxu0 %v1191
        %1193 = vmatprep.subr.mxu0 0.0
        %v1194 = vand.u32 %v348, 4294901760
        %1195 = vmatpush1.msra.mxu0 %v1194
        %1196 = vmatprep.subr.mxu0 0.0
        %v1197 = vand.u32 %v349, 4294901760
        %1198 = vmatpush1.msra.mxu0 %v1197
        %1199 = vmatprep.subr.mxu0 0.0
        %v1200 = vand.u32 %v350, 4294901760
        %1201 = vmatpush1.msra.mxu0 %v1200
        %1202 = vmatprep.subr.mxu0 0.0
        %v1203 = vand.u32 %v351, 4294901760
        %1204 = vmatpush1.msra.mxu0 %v1203
        %1205 = vmatprep.subr.mxu0 0.0
        %v1206 = vand.u32 %v352, 4294901760
        %1207 = vmatpush1.msra.mxu0 %v1206
        %1208 = vmatprep.subr.mxu0 0.0
        %v1209 = vand.u32 %v353, 4294901760
        %1210 = vmatpush1.msra.mxu0 %v1209
        %v1211 = vand.u32 %v355, 4294901760
        %1212 = vmatprep.mubr.f32.mxu0 %v1211
        %v1213 = vand.u32 %v321, 4294901760
        %1214 = vmatmul.mubr.f32.gmra.mrb[0].mxu0 %v1213
        %v1215 = vpop.f32.mrb[0].mxu0
        %v1216 = vadd.f32 %v1112, %v1215
        %v1217 = vpop.f32.mrb[0].mxu0
        %1218 = vdwg.mxu0
        %1220 = vrot.lane.b32.xlu0 %v1216, 64
        %v1221 = vpop.permute.xlu0 %1220
        %v1223 = vsub.f32 %v1216, %v1221
        %vm1224 = vcmask 519168
        %v1225 = vsel %vm1224, %v1216, 0.0
        %1226 = vadd.xlane.f32.xlu0 %v1225
        %v1227 = vpop.xlane.xlu0 %1226
        %v1228 = vmul.f32 %v1227, 0.015625
        %v1229 = vld [vmem:[%s2] sm:$0x3]
        %v1230 = vld [vmem:[%s3] sm:$0x3]
        %vm1231 = vcmask 31744
        %v1233 = vsel %vm1231, %v1229, 0
        %vm1235 = vcmask 1043456
        %v1237 = vsel %vm1235, %v1228, 0
        %1239 = vmatprep.subr.mxu0 0.0
        %v1240 = vand.u32 %v1237, 4294901760
        %1241 = vmatpush1.msra.mxu0 %v1240
        %1242 = vmatprep.subr.mxu0 0.0
        %1243 = vmatpush1.msra.mxu0 0.0
        %1244 = vmatprep.subr.mxu0 0.0
        %1245 = vmatpush1.msra.mxu0 0.0
        %1246 = vmatprep.subr.mxu0 0.0
        %1247 = vmatpush1.msra.mxu0 0.0
        %1248 = vmatprep.subr.mxu0 0.0
        %1249 = vmatpush1.msra.mxu0 0.0
        %1250 = vmatprep.subr.mxu0 0.0
        %1251 = vmatpush1.msra.mxu0 0.0
        %1252 = vmatprep.subr.mxu0 0.0
        %1253 = vmatpush1.msra.mxu0 0.0
        %1254 = vmatprep.subr.mxu0 0.0
        %1255 = vmatpush1.msra.mxu0 0.0
        %1256 = vmatprep.subr.mxu0 0.0
        %1257 = vmatpush1.msra.mxu0 0.0
        %1258 = vmatprep.subr.mxu0 0.0
        %1259 = vmatpush1.msra.mxu0 0.0
        %1260 = vmatprep.subr.mxu0 0.0
        %1261 = vmatpush1.msra.mxu0 0.0
        %1262 = vmatprep.subr.mxu0 0.0
        %1263 = vmatpush1.msra.mxu0 0.0
        %1264 = vmatprep.subr.mxu0 0.0
        %1265 = vmatpush1.msra.mxu0 0.0
        %1266 = vmatprep.subr.mxu0 0.0
        %1267 = vmatpush1.msra.mxu0 0.0
        %1268 = vmatprep.subr.mxu0 0.0
        %1269 = vmatpush1.msra.mxu0 0.0
        %1270 = vmatprep.subr.mxu0 0.0
        %1271 = vmatpush1.msra.mxu0 0.0
        %1272 = vmatprep.subr.mxu0 0.0
        %1273 = vmatpush1.msra.mxu0 0.0
        %1274 = vmatprep.subr.mxu0 0.0
        %1275 = vmatpush1.msra.mxu0 0.0
        %1276 = vmatprep.subr.mxu0 0.0
        %1277 = vmatpush1.msra.mxu0 0.0
        %1278 = vmatprep.subr.mxu0 0.0
        %1279 = vmatpush1.msra.mxu0 0.0
        %1280 = vmatprep.subr.mxu0 0.0
        %1281 = vmatpush1.msra.mxu0 0.0
        %1282 = vmatprep.subr.mxu0 0.0
        %1283 = vmatpush1.msra.mxu0 0.0
        %1284 = vmatprep.subr.mxu0 0.0
        %1285 = vmatpush1.msra.mxu0 0.0
        %1286 = vmatprep.subr.mxu0 0.0
        %1287 = vmatpush1.msra.mxu0 0.0
        %1288 = vmatprep.subr.mxu0 0.0
        %1289 = vmatpush1.msra.mxu0 0.0
        %1290 = vmatprep.subr.mxu0 0.0
        %1291 = vmatpush1.msra.mxu0 0.0
        %1292 = vmatprep.subr.mxu0 0.0
        %1293 = vmatpush1.msra.mxu0 0.0
        %1294 = vmatprep.subr.mxu0 0.0
        %1295 = vmatpush1.msra.mxu0 0.0
        %1296 = vmatprep.subr.mxu0 0.0
        %1297 = vmatpush1.msra.mxu0 0.0
        %1298 = vmatprep.subr.mxu0 0.0
        %1299 = vmatpush1.msra.mxu0 0.0
        %1300 = vmatprep.subr.mxu0 0.0
        %1301 = vmatpush1.msra.mxu0 0.0
        %1302 = vmatprep.subr.mxu0 0.0
        %1303 = vmatpush1.msra.mxu0 0.0
        %1304 = vmatprep.mubr.f32.mxu0 0.0
        %v1305 = vand.u32 %v1233, 4294901760
        %v1306 = vsub.f32 %v1233, %v1305
        %v1307 = vand.u32 %v1306, 4294901760
        %v1308 = vsub.f32 %v1306, %v1307
        %v1309 = vand.u32 %v1308, 4294901760
        %1310 = vmatmul.mubr.f32.gmra.mrb[0].mxu0 %v1309
        %v1311 = vpop.f32.mrb[0].mxu0
        %v1312 = vadd.f32 %v1230, %v1311
        %v1313 = vpop.f32.mrb[0].mxu0
        %1314 = vdwg.mxu0
        %1315 = vmatprep.subr.mxu0 0.0
        %v1316 = vand.u32 %v1237, 4294901760
        %v1317 = vsub.f32 %v1237, %v1316
        %v1318 = vand.u32 %v1317, 4294901760
        %v1319 = vsub.f32 %v1317, %v1318
        %v1320 = vand.u32 %v1319, 4294901760
        %1321 = vmatpush1.msra.mxu0 %v1320
        %1322 = vmatprep.subr.mxu0 0.0
        %1323 = vmatpush1.msra.mxu0 0.0
        %1324 = vmatprep.subr.mxu0 0.0
        %1325 = vmatpush1.msra.mxu0 0.0
        %1326 = vmatprep.subr.mxu0 0.0
        %1327 = vmatpush1.msra.mxu0 0.0
        %1328 = vmatprep.subr.mxu0 0.0
        %1329 = vmatpush1.msra.mxu0 0.0
        %1330 = vmatprep.subr.mxu0 0.0
        %1331 = vmatpush1.msra.mxu0 0.0
        %1332 = vmatprep.subr.mxu0 0.0
        %1333 = vmatpush1.msra.mxu0 0.0
        %1334 = vmatprep.subr.mxu0 0.0
        %1335 = vmatpush1.msra.mxu0 0.0
        %1336 = vmatprep.subr.mxu0 0.0
        %1337 = vmatpush1.msra.mxu0 0.0
        %1338 = vmatprep.subr.mxu0 0.0
        %1339 = vmatpush1.msra.mxu0 0.0
        %1340 = vmatprep.subr.mxu0 0.0
        %1341 = vmatpush1.msra.mxu0 0.0
        %1342 = vmatprep.subr.mxu0 0.0
        %1343 = vmatpush1.msra.mxu0 0.0
        %1344 = vmatprep.subr.mxu0 0.0
        %1345 = vmatpush1.msra.mxu0 0.0
        %1346 = vmatprep.subr.mxu0 0.0
        %1347 = vmatpush1.msra.mxu0 0.0
        %1348 = vmatprep.subr.mxu0 0.0
        %1349 = vmatpush1.msra.mxu0 0.0
        %1350 = vmatprep.subr.mxu0 0.0
        %1351 = vmatpush1.msra.mxu0 0.0
        %1352 = vmatprep.subr.mxu0 0.0
        %1353 = vmatpush1.msra.mxu0 0.0
        %1354 = vmatprep.subr.mxu0 0.0
        %1355 = vmatpush1.msra.mxu0 0.0
        %1356 = vmatprep.subr.mxu0 0.0
        %1357 = vmatpush1.msra.mxu0 0.0
        %1358 = vmatprep.subr.mxu0 0.0
        %1359 = vmatpush1.msra.mxu0 0.0
        %1360 = vmatprep.subr.mxu0 0.0
        %1361 = vmatpush1.msra.mxu0 0.0
        %1362 = vmatprep.subr.mxu0 0.0
        %1363 = vmatpush1.msra.mxu0 0.0
        %1364 = vmatprep.subr.mxu0 0.0
        %1365 = vmatpush1.msra.mxu0 0.0
        %1366 = vmatprep.subr.mxu0 0.0
        %1367 = vmatpush1.msra.mxu0 0.0
        %1368 = vmatprep.subr.mxu0 0.0
        %1369 = vmatpush1.msra.mxu0 0.0
        %1370 = vmatprep.subr.mxu0 0.0
        %1371 = vmatpush1.msra.mxu0 0.0
        %1372 = vmatprep.subr.mxu0 0.0
        %1373 = vmatpush1.msra.mxu0 0.0
        %1374 = vmatprep.subr.mxu0 0.0
        %1375 = vmatpush1.msra.mxu0 0.0
        %1376 = vmatprep.subr.mxu0 0.0
        %1377 = vmatpush1.msra.mxu0 0.0
        %1378 = vmatprep.subr.mxu0 0.0
        %1379 = vmatpush1.msra.mxu0 0.0
        %1380 = vmatprep.subr.mxu0 0.0
        %1381 = vmatpush1.msra.mxu0 0.0
        %1382 = vmatprep.subr.mxu0 0.0
        %1383 = vmatpush1.msra.mxu0 0.0
        %1384 = vmatprep.mubr.f32.mxu0 0.0
        %v1385 = vand.u32 %v1233, 4294901760
        %1386 = vmatmul.mubr.f32.gmra.mrb[0].mxu0 %v1385
        %v1387 = vpop.f32.mrb[0].mxu0
        %v1388 = vadd.f32 %v1312, %v1387
        %v1389 = vpop.f32.mrb[0].mxu0
        %1390 = vdwg.mxu0
        %1391 = vmatprep.subr.mxu0 0.0
        %v1392 = vand.u32 %v1237, 4294901760
        %v1393 = vsub.f32 %v1237, %v1392
        %1394 = vmatpush1.msra.mxu0 %v1393
        %1395 = vmatprep.subr.mxu0 0.0
        %1396 = vmatpush1.msra.mxu0 0.0
        %1397 = vmatprep.subr.mxu0 0.0
        %1398 = vmatpush1.msra.mxu0 0.0
        %1399 = vmatprep.subr.mxu0 0.0
        %1400 = vmatpush1.msra.mxu0 0.0
        %1401 = vmatprep.subr.mxu0 0.0
        %1402 = vmatpush1.msra.mxu0 0.0
        %1403 = vmatprep.subr.mxu0 0.0
        %1404 = vmatpush1.msra.mxu0 0.0
        %1405 = vmatprep.subr.mxu0 0.0
        %1406 = vmatpush1.msra.mxu0 0.0
        %1407 = vmatprep.subr.mxu0 0.0
        %1408 = vmatpush1.msra.mxu0 0.0
        %1409 = vmatprep.subr.mxu0 0.0
        %1410 = vmatpush1.msra.mxu0 0.0
        %1411 = vmatprep.subr.mxu0 0.0
        %1412 = vmatpush1.msra.mxu0 0.0
        %1413 = vmatprep.subr.mxu0 0.0
        %1414 = vmatpush1.msra.mxu0 0.0
        %1415 = vmatprep.subr.mxu0 0.0
        %1416 = vmatpush1.msra.mxu0 0.0
        %1417 = vmatprep.subr.mxu0 0.0
        %1418 = vmatpush1.msra.mxu0 0.0
        %1419 = vmatprep.subr.mxu0 0.0
        %1420 = vmatpush1.msra.mxu0 0.0
        %1421 = vmatprep.subr.mxu0 0.0
        %1422 = vmatpush1.msra.mxu0 0.0
        %1423 = vmatprep.subr.mxu0 0.0
        %1424 = vmatpush1.msra.mxu0 0.0
        %1425 = vmatprep.subr.mxu0 0.0
        %1426 = vmatpush1.msra.mxu0 0.0
        %1427 = vmatprep.subr.mxu0 0.0
        %1428 = vmatpush1.msra.mxu0 0.0
        %1429 = vmatprep.subr.mxu0 0.0
        %1430 = vmatpush1.msra.mxu0 0.0
        %1431 = vmatprep.subr.mxu0 0.0
        %1432 = vmatpush1.msra.mxu0 0.0
        %1433 = vmatprep.subr.mxu0 0.0
        %1434 = vmatpush1.msra.mxu0 0.0
        %1435 = vmatprep.subr.mxu0 0.0
        %1436 = vmatpush1.msra.mxu0 0.0
        %1437 = vmatprep.subr.mxu0 0.0
        %1438 = vmatpush1.msra.mxu0 0.0
        %1439 = vmatprep.subr.mxu0 0.0
        %1440 = vmatpush1.msra.mxu0 0.0
        %1441 = vmatprep.subr.mxu0 0.0
        %1442 = vmatpush1.msra.mxu0 0.0
        %1443 = vmatprep.subr.mxu0 0.0
        %1444 = vmatpush1.msra.mxu0 0.0
        %1445 = vmatprep.subr.mxu0 0.0
        %1446 = vmatpush1.msra.mxu0 0.0
        %1447 = vmatprep.subr.mxu0 0.0
        %1448 = vmatpush1.msra.mxu0 0.0
        %1449 = vmatprep.subr.mxu0 0.0
        %1450 = vmatpush1.msra.mxu0 0.0
        %1451 = vmatprep.subr.mxu0 0.0
        %1452 = vmatpush1.msra.mxu0 0.0
        %1453 = vmatprep.subr.mxu0 0.0
        %1454 = vmatpush1.msra.mxu0 0.0
        %1455 = vmatprep.subr.mxu0 0.0
        %1456 = vmatpush1.msra.mxu0 0.0
        %1457 = vmatprep.mubr.f32.mxu0 0.0
        %v1458 = vand.u32 %v1233, 4294901760
        %v1459 = vsub.f32 %v1233, %v1458
        %1460 = vmatmul.mubr.f32.gmra.mrb[0].mxu0 %v1459
        %v1461 = vpop.f32.mrb[0].mxu0
        %v1462 = vadd.f32 %v1388, %v1461
        %v1463 = vpop.f32.mrb[0].mxu0
        %1464 = vdwg.mxu0
        %1465 = vmatprep.subr.mxu0 0.0
        %v1466 = vand.u32 %v1237, 4294901760
        %1467 = vmatpush1.msra.mxu0 %v1466
        %1468 = vmatprep.subr.mxu0 0.0
        %1469 = vmatpush1.msra.mxu0 0.0
        %1470 = vmatprep.subr.mxu0 0.0
        %1471 = vmatpush1.msra.mxu0 0.0
        %1472 = vmatprep.subr.mxu0 0.0
        %1473 = vmatpush1.msra.mxu0 0.0
        %1474 = vmatprep.subr.mxu0 0.0
        %1475 = vmatpush1.msra.mxu0 0.0
        %1476 = vmatprep.subr.mxu0 0.0
        %1477 = vmatpush1.msra.mxu0 0.0
        %1478 = vmatprep.subr.mxu0 0.0
        %1479 = vmatpush1.msra.mxu0 0.0
        %1480 = vmatprep.subr.mxu0 0.0
        %1481 = vmatpush1.msra.mxu0 0.0
        %1482 = vmatprep.subr.mxu0 0.0
        %1483 = vmatpush1.msra.mxu0 0.0
        %1484 = vmatprep.subr.mxu0 0.0
        %1485 = vmatpush1.msra.mxu0 0.0
        %1486 = vmatprep.subr.mxu0 0.0
        %1487 = vmatpush1.msra.mxu0 0.0
        %1488 = vmatprep.subr.mxu0 0.0
        %1489 = vmatpush1.msra.mxu0 0.0
        %1490 = vmatprep.subr.mxu0 0.0
        %1491 = vmatpush1.msra.mxu0 0.0
        %1492 = vmatprep.subr.mxu0 0.0
        %1493 = vmatpush1.msra.mxu0 0.0
        %1494 = vmatprep.subr.mxu0 0.0
        %1495 = vmatpush1.msra.mxu0 0.0
        %1496 = vmatprep.subr.mxu0 0.0
        %1497 = vmatpush1.msra.mxu0 0.0
        %1498 = vmatprep.subr.mxu0 0.0
        %1499 = vmatpush1.msra.mxu0 0.0
        %1500 = vmatprep.subr.mxu0 0.0
        %1501 = vmatpush1.msra.mxu0 0.0
        %1502 = vmatprep.subr.mxu0 0.0
        %1503 = vmatpush1.msra.mxu0 0.0
        %1504 = vmatprep.subr.mxu0 0.0
        %1505 = vmatpush1.msra.mxu0 0.0
        %1506 = vmatprep.subr.mxu0 0.0
        %1507 = vmatpush1.msra.mxu0 0.0
        %1508 = vmatprep.subr.mxu0 0.0
        %1509 = vmatpush1.msra.mxu0 0.0
        %1510 = vmatprep.subr.mxu0 0.0
        %1511 = vmatpush1.msra.mxu0 0.0
        %1512 = vmatprep.subr.mxu0 0.0
        %1513 = vmatpush1.msra.mxu0 0.0
        %1514 = vmatprep.subr.mxu0 0.0
        %1515 = vmatpush1.msra.mxu0 0.0
        %1516 = vmatprep.subr.mxu0 0.0
        %1517 = vmatpush1.msra.mxu0 0.0
        %1518 = vmatprep.subr.mxu0 0.0
        %1519 = vmatpush1.msra.mxu0 0.0
        %1520 = vmatprep.subr.mxu0 0.0
        %1521 = vmatpush1.msra.mxu0 0.0
        %1522 = vmatprep.subr.mxu0 0.0
        %1523 = vmatpush1.msra.mxu0 0.0
        %1524 = vmatprep.subr.mxu0 0.0
        %1525 = vmatpush1.msra.mxu0 0.0
        %1526 = vmatprep.subr.mxu0 0.0
        %1527 = vmatpush1.msra.mxu0 0.0
        %1528 = vmatprep.subr.mxu0 0.0
        %1529 = vmatpush1.msra.mxu0 0.0
        %1530 = vmatprep.mubr.f32.mxu0 0.0
        %v1531 = vand.u32 %v1233, 4294901760
        %v1532 = vsub.f32 %v1233, %v1531
        %v1533 = vand.u32 %v1532, 4294901760
        %1534 = vmatmul.mubr.f32.gmra.mrb[0].mxu0 %v1533
        %v1535 = vpop.f32.mrb[0].mxu0
        %v1536 = vadd.f32 %v1462, %v1535
        %v1537 = vpop.f32.mrb[0].mxu0
        %1538 = vdwg.mxu0
        %1539 = vmatprep.subr.mxu0 0.0
        %v1540 = vand.u32 %v1237, 4294901760
        %v1541 = vsub.f32 %v1237, %v1540
        %v1542 = vand.u32 %v1541, 4294901760
        %1543 = vmatpush1.msra.mxu0 %v1542
        %1544 = vmatprep.subr.mxu0 0.0
        %1545 = vmatpush1.msra.mxu0 0.0
        %1546 = vmatprep.subr.mxu0 0.0
        %1547 = vmatpush1.msra.mxu0 0.0
        %1548 = vmatprep.subr.mxu0 0.0
        %1549 = vmatpush1.msra.mxu0 0.0
        %1550 = vmatprep.subr.mxu0 0.0
        %1551 = vmatpush1.msra.mxu0 0.0
        %1552 = vmatprep.subr.mxu0 0.0
        %1553 = vmatpush1.msra.mxu0 0.0
        %1554 = vmatprep.subr.mxu0 0.0
        %1555 = vmatpush1.msra.mxu0 0.0
        %1556 = vmatprep.subr.mxu0 0.0
        %1557 = vmatpush1.msra.mxu0 0.0
        %1558 = vmatprep.subr.mxu0 0.0
        %1559 = vmatpush1.msra.mxu0 0.0
        %1560 = vmatprep.subr.mxu0 0.0
        %1561 = vmatpush1.msra.mxu0 0.0
        %1562 = vmatprep.subr.mxu0 0.0
        %1563 = vmatpush1.msra.mxu0 0.0
        %1564 = vmatprep.subr.mxu0 0.0
        %1565 = vmatpush1.msra.mxu0 0.0
        %1566 = vmatprep.subr.mxu0 0.0
        %1567 = vmatpush1.msra.mxu0 0.0
        %1568 = vmatprep.subr.mxu0 0.0
        %1569 = vmatpush1.msra.mxu0 0.0
        %1570 = vmatprep.subr.mxu0 0.0
        %1571 = vmatpush1.msra.mxu0 0.0
        %1572 = vmatprep.subr.mxu0 0.0
        %1573 = vmatpush1.msra.mxu0 0.0
        %1574 = vmatprep.subr.mxu0 0.0
        %1575 = vmatpush1.msra.mxu0 0.0
        %1576 = vmatprep.subr.mxu0 0.0
        %1577 = vmatpush1.msra.mxu0 0.0
        %1578 = vmatprep.subr.mxu0 0.0
        %1579 = vmatpush1.msra.mxu0 0.0
        %1580 = vmatprep.subr.mxu0 0.0
        %1581 = vmatpush1.msra.mxu0 0.0
        %1582 = vmatprep.subr.mxu0 0.0
        %1583 = vmatpush1.msra.mxu0 0.0
        %1584 = vmatprep.subr.mxu0 0.0
        %1585 = vmatpush1.msra.mxu0 0.0
        %1586 = vmatprep.subr.mxu0 0.0
        %1587 = vmatpush1.msra.mxu0 0.0
        %1588 = vmatprep.subr.mxu0 0.0
        %1589 = vmatpush1.msra.mxu0 0.0
        %1590 = vmatprep.subr.mxu0 0.0
        %1591 = vmatpush1.msra.mxu0 0.0
        %1592 = vmatprep.subr.mxu0 0.0
        %1593 = vmatpush1.msra.mxu0 0.0
        %1594 = vmatprep.subr.mxu0 0.0
        %1595 = vmatpush1.msra.mxu0 0.0
        %1596 = vmatprep.subr.mxu0 0.0
        %1597 = vmatpush1.msra.mxu0 0.0
        %1598 = vmatprep.subr.mxu0 0.0
        %1599 = vmatpush1.msra.mxu0 0.0
        %1600 = vmatprep.subr.mxu0 0.0
        %1601 = vmatpush1.msra.mxu0 0.0
        %1602 = vmatprep.subr.mxu0 0.0
        %1603 = vmatpush1.msra.mxu0 0.0
        %1604 = vmatprep.subr.mxu0 0.0
        %1605 = vmatpush1.msra.mxu0 0.0
        %1606 = vmatprep.mubr.f32.mxu0 0.0
        %v1607 = vand.u32 %v1233, 4294901760
        %1608 = vmatmul.mubr.f32.gmra.mrb[0].mxu0 %v1607
        %v1609 = vpop.f32.mrb[0].mxu0
        %v1610 = vadd.f32 %v1536, %v1609
        %v1611 = vpop.f32.mrb[0].mxu0
        %1612 = vdwg.mxu0
        %1613 = vmatprep.subr.mxu0 0.0
        %v1614 = vand.u32 %v1237, 4294901760
        %1615 = vmatpush1.msra.mxu0 %v1614
        %1616 = vmatprep.subr.mxu0 0.0
        %1617 = vmatpush1.msra.mxu0 0.0
        %1618 = vmatprep.subr.mxu0 0.0
        %1619 = vmatpush1.msra.mxu0 0.0
        %1620 = vmatprep.subr.mxu0 0.0
        %1621 = vmatpush1.msra.mxu0 0.0
        %1622 = vmatprep.subr.mxu0 0.0
        %1623 = vmatpush1.msra.mxu0 0.0
        %1624 = vmatprep.subr.mxu0 0.0
        %1625 = vmatpush1.msra.mxu0 0.0
        %1626 = vmatprep.subr.mxu0 0.0
        %1627 = vmatpush1.msra.mxu0 0.0
        %1628 = vmatprep.subr.mxu0 0.0
        %1629 = vmatpush1.msra.mxu0 0.0
        %1630 = vmatprep.subr.mxu0 0.0
        %1631 = vmatpush1.msra.mxu0 0.0
        %1632 = vmatprep.subr.mxu0 0.0
        %1633 = vmatpush1.msra.mxu0 0.0
        %1634 = vmatprep.subr.mxu0 0.0
        %1635 = vmatpush1.msra.mxu0 0.0
        %1636 = vmatprep.subr.mxu0 0.0
        %1637 = vmatpush1.msra.mxu0 0.0
        %1638 = vmatprep.subr.mxu0 0.0
        %1639 = vmatpush1.msra.mxu0 0.0
        %1640 = vmatprep.subr.mxu0 0.0
        %1641 = vmatpush1.msra.mxu0 0.0
        %1642 = vmatprep.subr.mxu0 0.0
        %1643 = vmatpush1.msra.mxu0 0.0
        %1644 = vmatprep.subr.mxu0 0.0
        %1645 = vmatpush1.msra.mxu0 0.0
        %1646 = vmatprep.subr.mxu0 0.0
        %1647 = vmatpush1.msra.mxu0 0.0
        %1648 = vmatprep.subr.mxu0 0.0
        %1649 = vmatpush1.msra.mxu0 0.0
        %1650 = vmatprep.subr.mxu0 0.0
        %1651 = vmatpush1.msra.mxu0 0.0
        %1652 = vmatprep.subr.mxu0 0.0
        %1653 = vmatpush1.msra.mxu0 0.0
        %1654 = vmatprep.subr.mxu0 0.0
        %1655 = vmatpush1.msra.mxu0 0.0
        %1656 = vmatprep.subr.mxu0 0.0
        %1657 = vmatpush1.msra.mxu0 0.0
        %1658 = vmatprep.subr.mxu0 0.0
        %1659 = vmatpush1.msra.mxu0 0.0
        %1660 = vmatprep.subr.mxu0 0.0
        %1661 = vmatpush1.msra.mxu0 0.0
        %1662 = vmatprep.subr.mxu0 0.0
        %1663 = vmatpush1.msra.mxu0 0.0
        %1664 = vmatprep.subr.mxu0 0.0
        %1665 = vmatpush1.msra.mxu0 0.0
        %1666 = vmatprep.subr.mxu0 0.0
        %1667 = vmatpush1.msra.mxu0 0.0
        %1668 = vmatprep.subr.mxu0 0.0
        %1669 = vmatpush1.msra.mxu0 0.0
        %1670 = vmatprep.subr.mxu0 0.0
        %1671 = vmatpush1.msra.mxu0 0.0
        %1672 = vmatprep.subr.mxu0 0.0
        %1673 = vmatpush1.msra.mxu0 0.0
        %1674 = vmatprep.subr.mxu0 0.0
        %1675 = vmatpush1.msra.mxu0 0.0
        %1676 = vmatprep.subr.mxu0 0.0
        %1677 = vmatpush1.msra.mxu0 0.0
        %1678 = vmatprep.mubr.f32.mxu0 0.0
        %v1679 = vand.u32 %v1233, 4294901760
        %1680 = vmatmul.mubr.f32.gmra.mrb[0].mxu0 %v1679
        %v1681 = vpop.f32.mrb[0].mxu0
        %v1682 = vadd.f32 %v1610, %v1681
        %v1683 = vpop.f32.mrb[0].mxu0
        %1684 = vdwg.mxu0
        %v1685 = vmax.f32 %v1682, 0.0
        %v1686 = vld [vmem:[%s4] sm:$0xf]
        %v1687 = vld [vmem:[%s5] sm:$0xf]
        %vm1688 = vcmask 15360
        %v1690 = vsel %vm1688, %v1686, 0
        %vm1692 = vcmask 1041408
        %v1694 = vsel %vm1692, %v1685, 0
        %1696 = vmatprep.subr.mxu0 0.0
        %v1697 = vand.u32 %v1694, 4294901760
        %1698 = vmatpush1.msra.mxu0 %v1697
        %1699 = vmatprep.subr.mxu0 0.0
        %1700 = vmatpush1.msra.mxu0 0.0
        %1701 = vmatprep.subr.mxu0 0.0
        %1702 = vmatpush1.msra.mxu0 0.0
        %1703 = vmatprep.subr.mxu0 0.0
        %1704 = vmatpush1.msra.mxu0 0.0
        %1705 = vmatprep.subr.mxu0 0.0
        %1706 = vmatpush1.msra.mxu0 0.0
        %1707 = vmatprep.subr.mxu0 0.0
        %1708 = vmatpush1.msra.mxu0 0.0
        %1709 = vmatprep.subr.mxu0 0.0
        %1710 = vmatpush1.msra.mxu0 0.0
        %1711 = vmatprep.subr.mxu0 0.0
        %1712 = vmatpush1.msra.mxu0 0.0
        %1713 = vmatprep.subr.mxu0 0.0
        %1714 = vmatpush1.msra.mxu0 0.0
        %1715 = vmatprep.subr.mxu0 0.0
        %1716 = vmatpush1.msra.mxu0 0.0
        %1717 = vmatprep.subr.mxu0 0.0
        %1718 = vmatpush1.msra.mxu0 0.0
        %1719 = vmatprep.subr.mxu0 0.0
        %1720 = vmatpush1.msra.mxu0 0.0
        %1721 = vmatprep.subr.mxu0 0.0
        %1722 = vmatpush1.msra.mxu0 0.0
        %1723 = vmatprep.subr.mxu0 0.0
        %1724 = vmatpush1.msra.mxu0 0.0
        %1725 = vmatprep.subr.mxu0 0.0
        %1726 = vmatpush1.msra.mxu0 0.0
        %1727 = vmatprep.subr.mxu0 0.0
        %1728 = vmatpush1.msra.mxu0 0.0
        %1729 = vmatprep.subr.mxu0 0.0
        %1730 = vmatpush1.msra.mxu0 0.0
        %1731 = vmatprep.subr.mxu0 0.0
        %1732 = vmatpush1.msra.mxu0 0.0
        %1733 = vmatprep.subr.mxu0 0.0
        %1734 = vmatpush1.msra.mxu0 0.0
        %1735 = vmatprep.subr.mxu0 0.0
        %1736 = vmatpush1.msra.mxu0 0.0
        %1737 = vmatprep.subr.mxu0 0.0
        %1738 = vmatpush1.msra.mxu0 0.0
        %1739 = vmatprep.subr.mxu0 0.0
        %1740 = vmatpush1.msra.mxu0 0.0
        %1741 = vmatprep.subr.mxu0 0.0
        %1742 = vmatpush1.msra.mxu0 0.0
        %1743 = vmatprep.subr.mxu0 0.0
        %1744 = vmatpush1.msra.mxu0 0.0
        %1745 = vmatprep.subr.mxu0 0.0
        %1746 = vmatpush1.msra.mxu0 0.0
        %1747 = vmatprep.subr.mxu0 0.0
        %1748 = vmatpush1.msra.mxu0 0.0
        %1749 = vmatprep.subr.mxu0 0.0
        %1750 = vmatpush1.msra.mxu0 0.0
        %1751 = vmatprep.subr.mxu0 0.0
        %1752 = vmatpush1.msra.mxu0 0.0
        %1753 = vmatprep.subr.mxu0 0.0
        %1754 = vmatpush1.msra.mxu0 0.0
        %1755 = vmatprep.subr.mxu0 0.0
        %1756 = vmatpush1.msra.mxu0 0.0
        %1757 = vmatprep.subr.mxu0 0.0
        %1758 = vmatpush1.msra.mxu0 0.0
        %1759 = vmatprep.subr.mxu0 0.0
        %1760 = vmatpush1.msra.mxu0 0.0
        %1761 = vmatprep.mubr.f32.mxu0 0.0
        %v1762 = vand.u32 %v1690, 4294901760
        %v1763 = vsub.f32 %v1690, %v1762
        %v1764 = vand.u32 %v1763, 4294901760
        %v1765 = vsub.f32 %v1763, %v1764
        %v1766 = vand.u32 %v1765, 4294901760
        %1767 = vmatmul.mubr.f32.gmra.mrb[0].mxu0 %v1766
        %v1768 = vpop.f32.mrb[0].mxu0
        %v1769 = vadd.f32 %v1687, %v1768
        %v1770 = vpop.f32.mrb[0].mxu0
        %1771 = vdwg.mxu0
        %1772 = vmatprep.subr.mxu0 0.0
        %v1773 = vand.u32 %v1694, 4294901760
        %v1774 = vsub.f32 %v1694, %v1773
        %v1775 = vand.u32 %v1774, 4294901760
        %v1776 = vsub.f32 %v1774, %v1775
        %v1777 = vand.u32 %v1776, 4294901760
        %1778 = vmatpush1.msra.mxu0 %v1777
        %1779 = vmatprep.subr.mxu0 0.0
        %1780 = vmatpush1.msra.mxu0 0.0
        %1781 = vmatprep.subr.mxu0 0.0
        %1782 = vmatpush1.msra.mxu0 0.0
        %1783 = vmatprep.subr.mxu0 0.0
        %1784 = vmatpush1.msra.mxu0 0.0
        %1785 = vmatprep.subr.mxu0 0.0
        %1786 = vmatpush1.msra.mxu0 0.0
        %1787 = vmatprep.subr.mxu0 0.0
        %1788 = vmatpush1.msra.mxu0 0.0
        %1789 = vmatprep.subr.mxu0 0.0
        %1790 = vmatpush1.msra.mxu0 0.0
        %1791 = vmatprep.subr.mxu0 0.0
        %1792 = vmatpush1.msra.mxu0 0.0
        %1793 = vmatprep.subr.mxu0 0.0
        %1794 = vmatpush1.msra.mxu0 0.0
        %1795 = vmatprep.subr.mxu0 0.0
        %1796 = vmatpush1.msra.mxu0 0.0
        %1797 = vmatprep.subr.mxu0 0.0
        %1798 = vmatpush1.msra.mxu0 0.0
        %1799 = vmatprep.subr.mxu0 0.0
        %1800 = vmatpush1.msra.mxu0 0.0
        %1801 = vmatprep.subr.mxu0 0.0
        %1802 = vmatpush1.msra.mxu0 0.0
        %1803 = vmatprep.subr.mxu0 0.0
        %1804 = vmatpush1.msra.mxu0 0.0
        %1805 = vmatprep.subr.mxu0 0.0
        %1806 = vmatpush1.msra.mxu0 0.0
        %1807 = vmatprep.subr.mxu0 0.0
        %1808 = vmatpush1.msra.mxu0 0.0
        %1809 = vmatprep.subr.mxu0 0.0
        %1810 = vmatpush1.msra.mxu0 0.0
        %1811 = vmatprep.subr.mxu0 0.0
        %1812 = vmatpush1.msra.mxu0 0.0
        %1813 = vmatprep.subr.mxu0 0.0
        %1814 = vmatpush1.msra.mxu0 0.0
        %1815 = vmatprep.subr.mxu0 0.0
        %1816 = vmatpush1.msra.mxu0 0.0
        %1817 = vmatprep.subr.mxu0 0.0
        %1818 = vmatpush1.msra.mxu0 0.0
        %1819 = vmatprep.subr.mxu0 0.0
        %1820 = vmatpush1.msra.mxu0 0.0
        %1821 = vmatprep.subr.mxu0 0.0
        %1822 = vmatpush1.msra.mxu0 0.0
        %1823 = vmatprep.subr.mxu0 0.0
        %1824 = vmatpush1.msra.mxu0 0.0
        %1825 = vmatprep.subr.mxu0 0.0
        %1826 = vmatpush1.msra.mxu0 0.0
        %1827 = vmatprep.subr.mxu0 0.0
        %1828 = vmatpush1.msra.mxu0 0.0
        %1829 = vmatprep.subr.mxu0 0.0
        %1830 = vmatpush1.msra.mxu0 0.0
        %1831 = vmatprep.subr.mxu0 0.0
        %1832 = vmatpush1.msra.mxu0 0.0
        %1833 = vmatprep.subr.mxu0 0.0
        %1834 = vmatpush1.msra.mxu0 0.0
        %1835 = vmatprep.subr.mxu0 0.0
        %1836 = vmatpush1.msra.mxu0 0.0
        %1837 = vmatprep.subr.mxu0 0.0
        %1838 = vmatpush1.msra.mxu0 0.0
        %1839 = vmatprep.subr.mxu0 0.0
        %1840 = vmatpush1.msra.mxu0 0.0
        %1841 = vmatprep.mubr.f32.mxu0 0.0
        %v1842 = vand.u32 %v1690, 4294901760
        %1843 = vmatmul.mubr.f32.gmra.mrb[0].mxu0 %v1842
        %v1844 = vpop.f32.mrb[0].mxu0
        %v1845 = vadd.f32 %v1769, %v1844
        %v1846 = vpop.f32.mrb[0].mxu0
        %1847 = vdwg.mxu0
        %1848 = vmatprep.subr.mxu0 0.0
        %v1849 = vand.u32 %v1694, 4294901760
        %v1850 = vsub.f32 %v1694, %v1849
        %1851 = vmatpush1.msra.mxu0 %v1850
        %1852 = vmatprep.subr.mxu0 0.0
        %1853 = vmatpush1.msra.mxu0 0.0
        %1854 = vmatprep.subr.mxu0 0.0
        %1855 = vmatpush1.msra.mxu0 0.0
        %1856 = vmatprep.subr.mxu0 0.0
        %1857 = vmatpush1.msra.mxu0 0.0
        %1858 = vmatprep.subr.mxu0 0.0
        %1859 = vmatpush1.msra.mxu0 0.0
        %1860 = vmatprep.subr.mxu0 0.0
        %1861 = vmatpush1.msra.mxu0 0.0
        %1862 = vmatprep.subr.mxu0 0.0
        %1863 = vmatpush1.msra.mxu0 0.0
        %1864 = vmatprep.subr.mxu0 0.0
        %1865 = vmatpush1.msra.mxu0 0.0
        %1866 = vmatprep.subr.mxu0 0.0
        %1867 = vmatpush1.msra.mxu0 0.0
        %1868 = vmatprep.subr.mxu0 0.0
        %1869 = vmatpush1.msra.mxu0 0.0
        %1870 = vmatprep.subr.mxu0 0.0
        %1871 = vmatpush1.msra.mxu0 0.0
        %1872 = vmatprep.subr.mxu0 0.0
        %1873 = vmatpush1.msra.mxu0 0.0
        %1874 = vmatprep.subr.mxu0 0.0
        %1875 = vmatpush1.msra.mxu0 0.0
        %1876 = vmatprep.subr.mxu0 0.0
        %1877 = vmatpush1.msra.mxu0 0.0
        %1878 = vmatprep.subr.mxu0 0.0
        %1879 = vmatpush1.msra.mxu0 0.0
        %1880 = vmatprep.subr.mxu0 0.0
        %1881 = vmatpush1.msra.mxu0 0.0
        %1882 = vmatprep.subr.mxu0 0.0
        %1883 = vmatpush1.msra.mxu0 0.0
        %1884 = vmatprep.subr.mxu0 0.0
        %1885 = vmatpush1.msra.mxu0 0.0
        %1886 = vmatprep.subr.mxu0 0.0
        %1887 = vmatpush1.msra.mxu0 0.0
        %1888 = vmatprep.subr.mxu0 0.0
        %1889 = vmatpush1.msra.mxu0 0.0
        %1890 = vmatprep.subr.mxu0 0.0
        %1891 = vmatpush1.msra.mxu0 0.0
        %1892 = vmatprep.subr.mxu0 0.0
        %1893 = vmatpush1.msra.mxu0 0.0
        %1894 = vmatprep.subr.mxu0 0.0
        %1895 = vmatpush1.msra.mxu0 0.0
        %1896 = vmatprep.subr.mxu0 0.0
        %1897 = vmatpush1.msra.mxu0 0.0
        %1898 = vmatprep.subr.mxu0 0.0
        %1899 = vmatpush1.msra.mxu0 0.0
        %1900 = vmatprep.subr.mxu0 0.0
        %1901 = vmatpush1.msra.mxu0 0.0
        %1902 = vmatprep.subr.mxu0 0.0
        %1903 = vmatpush1.msra.mxu0 0.0
        %1904 = vmatprep.subr.mxu0 0.0
        %1905 = vmatpush1.msra.mxu0 0.0
        %1906 = vmatprep.subr.mxu0 0.0
        %1907 = vmatpush1.msra.mxu0 0.0
        %1908 = vmatprep.subr.mxu0 0.0
        %1909 = vmatpush1.msra.mxu0 0.0
        %1910 = vmatprep.subr.mxu0 0.0
        %1911 = vmatpush1.msra.mxu0 0.0
        %1912 = vmatprep.subr.mxu0 0.0
        %1913 = vmatpush1.msra.mxu0 0.0
        %1914 = vmatprep.mubr.f32.mxu0 0.0
        %v1915 = vand.u32 %v1690, 4294901760
        %v1916 = vsub.f32 %v1690, %v1915
        %1917 = vmatmul.mubr.f32.gmra.mrb[0].mxu0 %v1916
        %v1918 = vpop.f32.mrb[0].mxu0
        %v1919 = vadd.f32 %v1845, %v1918
        %v1920 = vpop.f32.mrb[0].mxu0
        %1921 = vdwg.mxu0
        %1922 = vmatprep.subr.mxu0 0.0
        %v1923 = vand.u32 %v1694, 4294901760
        %1924 = vmatpush1.msra.mxu0 %v1923
        %1925 = vmatprep.subr.mxu0 0.0
        %1926 = vmatpush1.msra.mxu0 0.0
        %1927 = vmatprep.subr.mxu0 0.0
        %1928 = vmatpush1.msra.mxu0 0.0
        %1929 = vmatprep.subr.mxu0 0.0
        %1930 = vmatpush1.msra.mxu0 0.0
        %1931 = vmatprep.subr.mxu0 0.0
        %1932 = vmatpush1.msra.mxu0 0.0
        %1933 = vmatprep.subr.mxu0 0.0
        %1934 = vmatpush1.msra.mxu0 0.0
        %1935 = vmatprep.subr.mxu0 0.0
        %1936 = vmatpush1.msra.mxu0 0.0
        %1937 = vmatprep.subr.mxu0 0.0
        %1938 = vmatpush1.msra.mxu0 0.0
        %1939 = vmatprep.subr.mxu0 0.0
        %1940 = vmatpush1.msra.mxu0 0.0
        %1941 = vmatprep.subr.mxu0 0.0
        %1942 = vmatpush1.msra.mxu0 0.0
        %1943 = vmatprep.subr.mxu0 0.0
        %1944 = vmatpush1.msra.mxu0 0.0
        %1945 = vmatprep.subr.mxu0 0.0
        %1946 = vmatpush1.msra.mxu0 0.0
        %1947 = vmatprep.subr.mxu0 0.0
        %1948 = vmatpush1.msra.mxu0 0.0
        %1949 = vmatprep.subr.mxu0 0.0
        %1950 = vmatpush1.msra.mxu0 0.0
        %1951 = vmatprep.subr.mxu0 0.0
        %1952 = vmatpush1.msra.mxu0 0.0
        %1953 = vmatprep.subr.mxu0 0.0
        %1954 = vmatpush1.msra.mxu0 0.0
        %1955 = vmatprep.subr.mxu0 0.0
        %1956 = vmatpush1.msra.mxu0 0.0
        %1957 = vmatprep.subr.mxu0 0.0
        %1958 = vmatpush1.msra.mxu0 0.0
        %1959 = vmatprep.subr.mxu0 0.0
        %1960 = vmatpush1.msra.mxu0 0.0
        %1961 = vmatprep.subr.mxu0 0.0
        %1962 = vmatpush1.msra.mxu0 0.0
        %1963 = vmatprep.subr.mxu0 0.0
        %1964 = vmatpush1.msra.mxu0 0.0
        %1965 = vmatprep.subr.mxu0 0.0
        %1966 = vmatpush1.msra.mxu0 0.0
        %1967 = vmatprep.subr.mxu0 0.0
        %1968 = vmatpush1.msra.mxu0 0.0
        %1969 = vmatprep.subr.mxu0 0.0
        %1970 = vmatpush1.msra.mxu0 0.0
        %1971 = vmatprep.subr.mxu0 0.0
        %1972 = vmatpush1.msra.mxu0 0.0
        %1973 = vmatprep.subr.mxu0 0.0
        %1974 = vmatpush1.msra.mxu0 0.0
        %1975 = vmatprep.subr.mxu0 0.0
        %1976 = vmatpush1.msra.mxu0 0.0
        %1977 = vmatprep.subr.mxu0 0.0
        %1978 = vmatpush1.msra.mxu0 0.0
        %1979 = vmatprep.subr.mxu0 0.0
        %1980 = vmatpush1.msra.mxu0 0.0
        %1981 = vmatprep.subr.mxu0 0.0
        %1982 = vmatpush1.msra.mxu0 0.0
        %1983 = vmatprep.subr.mxu0 0.0
        %1984 = vmatpush1.msra.mxu0 0.0
        %1985 = vmatprep.subr.mxu0 0.0
        %1986 = vmatpush1.msra.mxu0 0.0
        %1987 = vmatprep.mubr.f32.mxu0 0.0
        %v1988 = vand.u32 %v1690, 4294901760
        %v1989 = vsub.f32 %v1690, %v1988
        %v1990 = vand.u32 %v1989, 4294901760
        %1991 = vmatmul.mubr.f32.gmra.mrb[0].mxu0 %v1990
        %v1992 = vpop.f32.mrb[0].mxu0
        %v1993 = vadd.f32 %v1919, %v1992
        %v1994 = vpop.f32.mrb[0].mxu0
        %1995 = vdwg.mxu0
        %1996 = vmatprep.subr.mxu0 0.0
        %v1997 = vand.u32 %v1694, 4294901760
        %v1998 = vsub.f32 %v1694, %v1997
        %v1999 = vand.u32 %v1998, 4294901760
        %2000 = vmatpush1.msra.mxu0 %v1999
        %2001 = vmatprep.subr.mxu0 0.0
        %2002 = vmatpush1.msra.mxu0 0.0
        %2003 = vmatprep.subr.mxu0 0.0
        %2004 = vmatpush1.msra.mxu0 0.0
        %2005 = vmatprep.subr.mxu0 0.0
        %2006 = vmatpush1.msra.mxu0 0.0
        %2007 = vmatprep.subr.mxu0 0.0
        %2008 = vmatpush1.msra.mxu0 0.0
        %2009 = vmatprep.subr.mxu0 0.0
        %2010 = vmatpush1.msra.mxu0 0.0
        %2011 = vmatprep.subr.mxu0 0.0
        %2012 = vmatpush1.msra.mxu0 0.0
        %2013 = vmatprep.subr.mxu0 0.0
        %2014 = vmatpush1.msra.mxu0 0.0
        %2015 = vmatprep.subr.mxu0 0.0
        %2016 = vmatpush1.msra.mxu0 0.0
        %2017 = vmatprep.subr.mxu0 0.0
        %2018 = vmatpush1.msra.mxu0 0.0
        %2019 = vmatprep.subr.mxu0 0.0
        %2020 = vmatpush1.msra.mxu0 0.0
        %2021 = vmatprep.subr.mxu0 0.0
        %2022 = vmatpush1.msra.mxu0 0.0
        %2023 = vmatprep.subr.mxu0 0.0
        %2024 = vmatpush1.msra.mxu0 0.0
        %2025 = vmatprep.subr.mxu0 0.0
        %2026 = vmatpush1.msra.mxu0 0.0
        %2027 = vmatprep.subr.mxu0 0.0
        %2028 = vmatpush1.msra.mxu0 0.0
        %2029 = vmatprep.subr.mxu0 0.0
        %2030 = vmatpush1.msra.mxu0 0.0
        %2031 = vmatprep.subr.mxu0 0.0
        %2032 = vmatpush1.msra.mxu0 0.0
        %2033 = vmatprep.subr.mxu0 0.0
        %2034 = vmatpush1.msra.mxu0 0.0
        %2035 = vmatprep.subr.mxu0 0.0
        %2036 = vmatpush1.msra.mxu0 0.0
        %2037 = vmatprep.subr.mxu0 0.0
        %2038 = vmatpush1.msra.mxu0 0.0
        %2039 = vmatprep.subr.mxu0 0.0
        %2040 = vmatpush1.msra.mxu0 0.0
        %2041 = vmatprep.subr.mxu0 0.0
        %2042 = vmatpush1.msra.mxu0 0.0
        %2043 = vmatprep.subr.mxu0 0.0
        %2044 = vmatpush1.msra.mxu0 0.0
        %2045 = vmatprep.subr.mxu0 0.0
        %2046 = vmatpush1.msra.mxu0 0.0
        %2047 = vmatprep.subr.mxu0 0.0
        %2048 = vmatpush1.msra.mxu0 0.0
        %2049 = vmatprep.subr.mxu0 0.0
        %2050 = vmatpush1.msra.mxu0 0.0
        %2051 = vmatprep.subr.mxu0 0.0
        %2052 = vmatpush1.msra.mxu0 0.0
        %2053 = vmatprep.subr.mxu0 0.0
        %2054 = vmatpush1.msra.mxu0 0.0
        %2055 = vmatprep.subr.mxu0 0.0
        %2056 = vmatpush1.msra.mxu0 0.0
        %2057 = vmatprep.subr.mxu0 0.0
        %2058 = vmatpush1.msra.mxu0 0.0
        %2059 = vmatprep.subr.mxu0 0.0
        %2060 = vmatpush1.msra.mxu0 0.0
        %2061 = vmatprep.subr.mxu0 0.0
        %2062 = vmatpush1.msra.mxu0 0.0
        %2063 = vmatprep.mubr.f32.mxu0 0.0
        %v2064 = vand.u32 %v1690, 4294901760
        %2065 = vmatmul.mubr.f32.gmra.mrb[0].mxu0 %v2064
        %v2066 = vpop.f32.mrb[0].mxu0
        %v2067 = vadd.f32 %v1993, %v2066
        %v2068 = vpop.f32.mrb[0].mxu0
        %2069 = vdwg.mxu0
        %2070 = vmatprep.subr.mxu0 0.0
        %v2071 = vand.u32 %v1694, 4294901760
        %2072 = vmatpush1.msra.mxu0 %v2071
        %2073 = vmatprep.subr.mxu0 0.0
        %2074 = vmatpush1.msra.mxu0 0.0
        %2075 = vmatprep.subr.mxu0 0.0
        %2076 = vmatpush1.msra.mxu0 0.0
        %2077 = vmatprep.subr.mxu0 0.0
        %2078 = vmatpush1.msra.mxu0 0.0
        %2079 = vmatprep.subr.mxu0 0.0
        %2080 = vmatpush1.msra.mxu0 0.0
        %2081 = vmatprep.subr.mxu0 0.0
        %2082 = vmatpush1.msra.mxu0 0.0
        %2083 = vmatprep.subr.mxu0 0.0
        %2084 = vmatpush1.msra.mxu0 0.0
        %2085 = vmatprep.subr.mxu0 0.0
        %2086 = vmatpush1.msra.mxu0 0.0
        %2087 = vmatprep.subr.mxu0 0.0
        %2088 = vmatpush1.msra.mxu0 0.0
        %2089 = vmatprep.subr.mxu0 0.0
        %2090 = vmatpush1.msra.mxu0 0.0
        %2091 = vmatprep.subr.mxu0 0.0
        %2092 = vmatpush1.msra.mxu0 0.0
        %2093 = vmatprep.subr.mxu0 0.0
        %2094 = vmatpush1.msra.mxu0 0.0
        %2095 = vmatprep.subr.mxu0 0.0
        %2096 = vmatpush1.msra.mxu0 0.0
        %2097 = vmatprep.subr.mxu0 0.0
        %2098 = vmatpush1.msra.mxu0 0.0
        %2099 = vmatprep.subr.mxu0 0.0
        %2100 = vmatpush1.msra.mxu0 0.0
        %2101 = vmatprep.subr.mxu0 0.0
        %2102 = vmatpush1.msra.mxu0 0.0
        %2103 = vmatprep.subr.mxu0 0.0
        %2104 = vmatpush1.msra.mxu0 0.0
        %2105 = vmatprep.subr.mxu0 0.0
        %2106 = vmatpush1.msra.mxu0 0.0
        %2107 = vmatprep.subr.mxu0 0.0
        %2108 = vmatpush1.msra.mxu0 0.0
        %2109 = vmatprep.subr.mxu0 0.0
        %2110 = vmatpush1.msra.mxu0 0.0
        %2111 = vmatprep.subr.mxu0 0.0
        %2112 = vmatpush1.msra.mxu0 0.0
        %2113 = vmatprep.subr.mxu0 0.0
        %2114 = vmatpush1.msra.mxu0 0.0
        %2115 = vmatprep.subr.mxu0 0.0
        %2116 = vmatpush1.msra.mxu0 0.0
        %2117 = vmatprep.subr.mxu0 0.0
        %2118 = vmatpush1.msra.mxu0 0.0
        %2119 = vmatprep.subr.mxu0 0.0
        %2120 = vmatpush1.msra.mxu0 0.0
        %2121 = vmatprep.subr.mxu0 0.0
        %2122 = vmatpush1.msra.mxu0 0.0
        %2123 = vmatprep.subr.mxu0 0.0
        %2124 = vmatpush1.msra.mxu0 0.0
        %2125 = vmatprep.subr.mxu0 0.0
        %2126 = vmatpush1.msra.mxu0 0.0
        %2127 = vmatprep.subr.mxu0 0.0
        %2128 = vmatpush1.msra.mxu0 0.0
        %2129 = vmatprep.subr.mxu0 0.0
        %2130 = vmatpush1.msra.mxu0 0.0
        %2131 = vmatprep.subr.mxu0 0.0
        %2132 = vmatpush1.msra.mxu0 0.0
        %2133 = vmatprep.subr.mxu0 0.0
        %2134 = vmatpush1.msra.mxu0 0.0
        %2135 = vmatprep.mubr.f32.mxu0 0.0
        %v2136 = vand.u32 %v1690, 4294901760
        %2137 = vmatmul.mubr.f32.gmra.mrb[0].mxu0 %v2136
        %v2138 = vpop.f32.mrb[0].mxu0
        %v2139 = vadd.f32 %v2067, %v2138
        %v2140 = vpop.f32.mrb[0].mxu0
        %2141 = vdwg.mxu0
        %2143 = vset.pattern.permute.xlu0 0
        %2144 = vperm.xlu0 %2143, %v2139
        %v2145 = vpop.permute.xlu0 %2144
        %v2147 = vadd.f32 %v2145, %v1216
        %v2148 = vxor.u32 %v2147, 2147483648
        %v2149 = vmul.f32 %v2148, 1.442695
        %v2150 = vpow.pop %v2149
        %v2151 = vadd.f32 %v2150, 1.0
        %v2152 = vrcp.pop %v2151
        %v2153 = vmul.f32 1.0, %v2152
        %2154 = vst.msk [vmem:[%s313] sm:$0xf] %vm1224, %v1221
        %v2155 = vmul.f32 %v1223, %v2153
        %2156 = vst.msk [vmem:[%s320] sm:$0xf] %vm1224, %v2155
        %s2157 = sand.u32 %s168, 1
        %s2158 = scalar_lea.sflag [#allocation4], %s2157
        %s2159 = sand.u32 %s168, 1
        %s2160 = smul.addr %s2159, 4
        %s2161 = scalar_lea.vmem [#allocation7], %s2160
        %s2162 = sand.u32 %s194, 1
        %s2163 = scalar_lea.sflag [#allocation9], %s2162
        %s2164 = sand.u32 %s194, 1
        %s2165 = smul.addr %s2164, 4
        %s2166 = scalar_lea.vmem [#allocation8], %s2165
        // Predicated region
        $region53: #{tpu_custom_call.1} parent=43 // pred_check
          %p2167 = pneg %p178
        $region54: #{tpu_custom_call.1} parent=43 // pred_check_branch
          %2169 = sbr.rel (%p2167) target = $region56
        $region55: #{tpu_custom_call.1} parent=43 // pred_region
          %s2171 = ssub.s32 64, 64
          %2172 = vsyncadd %s2158, %s2171
          %s2173 = smul.addr %s29, 64
          %s2174 = scalar_lea.hbm %s6, %s2173
          %s2176 = sshll.u32 %s2161, 4
          %s2177 = int_to_ptr.vmem [resolvable:$true] %s2176
          %2179 = dma.vmem_to_hbm [thread:$0]  %s2177, 64, %s2174, %s2158
        $region56: #{tpu_custom_call.1} parent=43 // pred_fallthru
          _
        // Predicated region
        $region57: #{tpu_custom_call.1} parent=43 // pred_check
          %p2180 = pneg %p204
        $region58: #{tpu_custom_call.1} parent=43 // pred_check_branch
          %2182 = sbr.rel (%p2180) target = $region60
        $region59: #{tpu_custom_call.1} parent=43 // pred_region
          %s2184 = ssub.s32 64, 64
          %2185 = vsyncadd %s2163, %s2184
          %s2186 = smul.addr %s29, 64
          %s2187 = scalar_lea.hbm %s7, %s2186
          %s2189 = sshll.u32 %s2166, 4
          %s2190 = int_to_ptr.vmem [resolvable:$true] %s2189
          %2192 = dma.vmem_to_hbm [thread:$0]  %s2190, 64, %s2187, %s2163
        $region60: #{tpu_custom_call.1} parent=43 // pred_fallthru
          _
      $region44: #{tpu_custom_call.1} parent=5 // pred_fallthru
        _
      %p2193 = scmp.le.s32.totalorder 2, %s24
      // Predicated region
      $region61: #{tpu_custom_call.1} parent=5 // pred_check
        %p2194 = pneg %p2193
      $region62: #{tpu_custom_call.1} parent=5 // pred_check_branch
        %2196 = sbr.rel (%p2194) target = $region64
      $region63: #{tpu_custom_call.1} parent=5 // pred_region
        %s2197 = ssub.s32 %s24, 2
        // Predicated region
        $region65: #{tpu_custom_call.1} parent=63 // pred_check
          %p2198 = pneg %p184
        $region66: #{tpu_custom_call.1} parent=63 // pred_check_branch
          %2200 = sbr.rel (%p2198) target = $region68
        $region67: #{tpu_custom_call.1} parent=63 // pred_region
          %s2201 = sand.u32 %s169, 1
          %s2202 = scalar_lea.sflag [#allocation4], %s2201
          %s2203 = sand.u32 %s169, 1
          %s2204 = smul.addr %s2203, 4
          %s2205 = scalar_lea.vmem [#allocation7], %s2204
          %2206 = dma.done %s2202, 64
        $region68: #{tpu_custom_call.1} parent=63 // pred_fallthru
          _
        // Predicated region
        $region69: #{tpu_custom_call.1} parent=63 // pred_check
          %p2207 = pneg %p210
        $region70: #{tpu_custom_call.1} parent=63 // pred_check_branch
          %2209 = sbr.rel (%p2207) target = $region72
        $region71: #{tpu_custom_call.1} parent=63 // pred_region
          %s2210 = sand.u32 %s195, 1
          %s2211 = scalar_lea.sflag [#allocation9], %s2210
          %s2212 = sand.u32 %s195, 1
          %s2213 = smul.addr %s2212, 4
          %s2214 = scalar_lea.vmem [#allocation8], %s2213
          %2215 = dma.done %s2211, 64
        $region72: #{tpu_custom_call.1} parent=63 // pred_fallthru
          _
      $region64: #{tpu_custom_call.1} parent=5 // pred_fallthru
        _
    $region6: #{tpu_custom_call.1} parent=1 // loop_footer
      %s28 = sadd.s32 1, %s24
    $region7: #{tpu_custom_call.1} parent=1 // loop_footer_branch
      %23 = sbr.rel target = $region3
    $region8: #{tpu_custom_call.1} parent=1 // loop_exit
      _
    %2216 = vsyncpa [#allocation3], 1
    %s2217 = scalar_lea.sflag [#allocation3], 1
    %2218 = vsyncpa %s2217, 1
    %2219 = vsyncpa [#allocation6], 1
    %2220 = vsyncpa [#allocation4], 1
    %s2221 = scalar_lea.sflag [#allocation4], 1
    %2222 = vsyncpa %s2221, 1
    %2223 = vsyncpa [#allocation9], 1
    %s2224 = scalar_lea.sflag [#allocation9], 1
    %2225 = vsyncpa %s2224, 1

</llo_original>
